<compile_context>
chip_gen: v5e
topology: v5e:2x2
jax: 0.10.0
libtpu: 0.0.40
codegen_flags: <defaults>
</compile_context>

<pallas_src>
import jax
import jax.numpy as jnp
from jax import lax
from jax.experimental import pallas as pl
from jax.experimental.pallas import tpu as pltpu

K = 7      # SAM conv kernel size
PAD = 3    # SAM conv padding


# ----------------------------------------------------------------------------
# Host-side prep: the 7x7 "same" conv as two (HW, HW) matrices (MXU friendly)
# ----------------------------------------------------------------------------
def _sam_conv_matrices(sam_w, C, H, W):
    """m_max/m_sum apply the 7x7 zero-padded conv to the flattened channel-max /
    channel-mean maps; the 1/C of the mean is folded into m_sum."""
    HW = H * W
    jj = jnp.arange(HW)[:, None]          # input flat index  (r_in * W + c_in)
    kk = jnp.arange(HW)[None, :]          # output flat index (r_out * W + c_out)
    di = (jj // W) - (kk // W) + PAD
    dj = (jj % W) - (kk % W) + PAD
    valid = (di >= 0) & (di < K) & (dj >= 0) & (dj < K)
    flat = jnp.clip(di, 0, K - 1) * K + jnp.clip(dj, 0, K - 1)
    w = sam_w.astype(jnp.float32)
    m_max = jnp.where(valid, w[0, 0].reshape(-1)[flat], 0.0)
    m_sum = jnp.where(valid, w[0, 1].reshape(-1)[flat], 0.0) * (1.0 / C)
    return m_max, m_sum


# ----------------------------------------------------------------------------
# Fused Critic kernel: CBAM + twin-Q head for one batch block
# ----------------------------------------------------------------------------
def _critic_kernel(m_max_ref, m_sum_ref,
                   cam_w1t_ref, cam_b1_ref, cam_w2_ref, cam_b2_ref,
                   wqf_ref, wqs_ref, bq_ref, ws_ref, wa_ref, ba_ref,
                   wo_ref, bo_ref,
                   x_ref, sa_ref, a_ref,
                   q_ref,
                   s1f_ref):
    bn, C, HW = x_ref.shape
    inv_hw = 1.0 / HW
    two_h = bq_ref.shape[-1]

    cam_w1t = cam_w1t_ref[...]            # (C, Cr)  = torch cam_w1.T
    cam_b1 = cam_b1_ref[...]              # (1, Cr)
    cam_w2 = cam_w2_ref[...]              # (C, Cr)  = torch cam_w2
    cam_b2 = cam_b2_ref[...]              # (C, 1)

    def per_image(i, carry):
        x = x_ref[i].astype(jnp.float32)                       # (C, HW)

        # ---------------- CAM: channel attention ----------------
        p_max = jnp.max(x, axis=1, keepdims=True)              # (C, 1)
        p_avg = jnp.sum(x, axis=1, keepdims=True) * inv_hw     # (C, 1)

        def shared_mlp(p):                                      # (C,1) -> (C,1)
            h = jnp.sum(p * cam_w1t, axis=0, keepdims=True) + cam_b1    # (1, Cr)
            h = jnp.maximum(h, 0.0)
            return jnp.sum(h * cam_w2, axis=1, keepdims=True) + cam_b2  # (C, 1)

        gate = jax.nn.sigmoid(shared_mlp(p_max) + shared_mlp(p_avg))     # (C, 1)
        y = gate * x                                            # (C, HW)

        # ---------- SAM: spatial attention via resident conv matrices (MXU) ----------
        maxc = jnp.max(y, axis=0, keepdims=True)                # (1, HW)
        sumc = jnp.sum(y, axis=0, keepdims=True)                # (1, HW); 1/C in m_sum
        conv = (jnp.dot(maxc, m_max_ref[...], preferred_element_type=jnp.float32)
                + jnp.dot(sumc, m_sum_ref[...], preferred_element_type=jnp.float32))  # (1, HW)

        # ---------- Twin-Q layer 1, feat part (feat never leaves the core) ----------
        acc = jnp.zeros((1, two_h), jnp.float32)
        for c in range(C):                                      # feat[c] = conv * y[c]
            feat_c = (conv * y[c:c + 1, :]).astype(wqf_ref.dtype)        # (1, HW) bf16
            acc = acc + jnp.dot(feat_c, wqf_ref[c],
                                preferred_element_type=jnp.float32)      # (1, 2H)
        s1f_ref[pl.ds(i, 1), :] = acc
        return carry

    lax.fori_loop(0, bn, per_image, 0)

    # ---------- Twin-Q head for the whole block (branches packed / block-diagonal) ----------
    sa = sa_ref[...]                                            # (bn, S)
    s1 = jnp.maximum(
        s1f_ref[...]
        + jnp.dot(sa, wqs_ref[...], preferred_element_type=jnp.float32)
        + bq_ref[...], 0.0)                                     # (bn, 2H)
    h = jnp.maximum(
        jnp.dot(s1, ws_ref[...], preferred_element_type=jnp.float32)     # no bias (torch fwd)
        + a_ref[...] * wa_ref[...]                              # (bn,1)*(1,2H): a @ Wa.T
        + ba_ref[...], 0.0)                                     # (bn, 2H)
    q = jnp.dot(h, wo_ref[...], preferred_element_type=jnp.float32) + bo_ref[...]  # (bn, 2)
    q_ref[...] = q.astype(q_ref.dtype)


def _pick_block_n(B, cap):
    """Big batch blocks amortize per-grid-step overhead; only multi-TC chips (v7x) gain
    anything from manufacturing >=2 grid steps."""
    try:
        multi_tc = "v7" in jax.devices()[0].device_kind.lower()
    except Exception:
        multi_tc = False
    if multi_tc and B > 1:
        cap = min(cap, max(B // 2, 1))
    cap = max(min(cap, B), 1)
    for bn in range(cap, 0, -1):
        if B % bn == 0:
            return bn
    return 1


def critic_forward(params, s, s_a, a, *, block_n=8):
    """s: (B, C, H, W); s_a: (B, S); a: (B, 1). Returns (q1, q2), each (B, 1)."""
    B, C, H, W = s.shape
    HW = H * W
    CHW = C * HW
    S = s_a.shape[1]
    f32 = jnp.float32

    w1, w4 = params["w1"], params["w4"]
    h1, h2 = w1.shape[0], w4.shape[0]
    assert w1.shape[1] == CHW + S and w4.shape[1] == CHW + S
    # a-branch / output contractions assume action_dim == 1 (layer_5_a is Linear(1, hidden),
    # so the torch forward only typechecks for action_dim == 1 anyway).
    assert params["w2a"].shape[1] == 1 and params["w5a"].shape[1] == 1
    assert params["w3"].shape[0] == 1 and params["w6"].shape[0] == 1
    assert a.shape[1] == 1

    # SAM conv as resident matrices.
    m_max, m_sum = _sam_conv_matrices(params["sam_w"], C, H, W)

    # CAM shared-MLP params, broadcast-friendly shapes.
    cr = params["cam_w1"].shape[0]
    cam_w1t = params["cam_w1"].T.astype(f32)                     # (C, Cr)
    cam_b1 = params["cam_b1"].reshape(1, cr).astype(f32)         # (1, Cr)
    cam_w2 = params["cam_w2"].astype(f32)                        # (C, Cr)
    cam_b2 = params["cam_b2"].reshape(C, 1).astype(f32)          # (C, 1)

    # Twin-Q layer-1 weights: split feat / s_a parts, pack both branches side by side.
    def feat_part(w, hd):
        return w[:, :CHW].reshape(hd, C, HW).transpose(1, 2, 0)  # (C, HW, hd)

    wq_feat = jnp.concatenate([feat_part(w1, h1), feat_part(w4, h2)],
                              axis=2).astype(jnp.bfloat16)       # (C, HW, 2H) bf16
    wq_sa = jnp.concatenate([w1[:, CHW:].T, w4[:, CHW:].T], axis=1).astype(f32)  # (S, 2H)
    bq = jnp.concatenate([params["b1"], params["b4"]]).reshape(1, h1 + h2).astype(f32)

    # Twin-Q layer 2 (block-diagonal; no bias on the *_s matmul in the torch forward).
    ws_block = jnp.concatenate(
        [jnp.concatenate([params["w2s"].T.astype(f32), jnp.zeros((h1, h2), f32)], axis=1),
         jnp.concatenate([jnp.zeros((h2, h1), f32), params["w5s"].T.astype(f32)], axis=1)],
        axis=0)                                                  # (2H, 2H)
    wa = jnp.concatenate([params["w2a"].T, params["w5a"].T], axis=1).astype(f32)  # (1, 2H)
    ba = jnp.concatenate([params["b2a"], params["b5a"]]).reshape(1, h1 + h2).astype(f32)

    # Twin-Q output layer: (2H, 2) block "matrix" of the two (1, H) rows.
    wo_block = jnp.stack(
        [jnp.concatenate([params["w3"][0], jnp.zeros((h2,), f32)]),
         jnp.concatenate([jnp.zeros((h1,), f32), params["w6"][0]])], axis=1).astype(f32)
    bo = jnp.stack([params["b3"][0], params["b6"][0]]).reshape(1, 2).astype(f32)

    # Lane-dense data layouts (contiguous reshapes -> free).
    x_flat = s.reshape(B, C, HW).astype(f32)
    sa3 = s_a.reshape(B, 1, S).astype(f32)
    a3 = a.reshape(B, 1, 1).astype(f32)

    bn = _pick_block_n(B, block_n)
    const2 = lambda n: (0, 0)
    const3 = lambda n: (0, 0, 0)
    batch3 = lambda n: (n, 0, 0)

    q3 = pl.pallas_call(
        _critic_kernel,
        out_shape=jax.ShapeDtypeStruct((B, 1, 2), f32),
        grid=(B // bn,),
        in_specs=[
            pl.BlockSpec((HW, HW), const2),                  # m_max (resident)
            pl.BlockSpec((HW, HW), const2),                  # m_sum (resident)
            pl.BlockSpec((C, cr), const2),                   # CAM w1.T
            pl.BlockSpec((1, cr), const2),                   # CAM b1
            pl.BlockSpec((C, cr), const2),                   # CAM w2
            pl.BlockSpec((C, 1), const2),                    # CAM b2
            pl.BlockSpec((C, HW, h1 + h2), const3),          # packed layer-1 feat weights (bf16)
            pl.BlockSpec((S, h1 + h2), const2),              # packed layer-1 s_a weights
            pl.BlockSpec((1, h1 + h2), const2),              # packed layer-1 bias
            pl.BlockSpec((h1 + h2, h1 + h2), const2),        # layer-2 block-diagonal weights
            pl.BlockSpec((1, h1 + h2), const2),              # packed a-branch weights
            pl.BlockSpec((1, h1 + h2), const2),              # packed a-branch bias
            pl.BlockSpec((h1 + h2, 2), const2),              # packed output weights
            pl.BlockSpec((1, 2), const2),                    # packed output bias
            pl.BlockSpec((bn, C, HW), batch3),               # x (lane-dense)
            pl.BlockSpec((bn, None, S), batch3),             # s_a
            pl.BlockSpec((bn, None, 1), batch3),             # a
        ],
        out_specs=pl.BlockSpec((bn, None, 2), batch3),       # (q1, q2) per row
        scratch_shapes=[pltpu.VMEM((bn, h1 + h2), jnp.float32)],
        compiler_params=pltpu.CompilerParams(
            dimension_semantics=("parallel",)),
    )(m_max, m_sum, cam_w1t, cam_b1, cam_w2, cam_b2,
      wq_feat, wq_sa, bq, ws_block, wa, ba, wo_block, bo,
      x_flat, sa3, a3)

    q = q3.reshape(B, 2)
    return q[:, 0:1], q[:, 1:2]


# ----------------------------------------------------------------------------
# Plain-JAX reference of the PyTorch forward, for verification
# ----------------------------------------------------------------------------
def cbam_reference(params, x):
    pmax = jnp.max(x, axis=(2, 3))
    pavg = jnp.mean(x, axis=(2, 3))

    def mlp(p):
        h = jax.nn.relu(p @ params["cam_w1"].T + params["cam_b1"])
        return h @ params["cam_w2"].T + params["cam_b2"]

    gate = jax.nn.sigmoid(mlp(pmax) + mlp(pavg))[:, :, None, None]
    y = gate * x
    mx = jnp.max(y, axis=1, keepdims=True)
    av = jnp.mean(y, axis=1, keepdims=True)
    cat = jnp.concatenate([mx, av], axis=1)
    conv = lax.conv_general_dilated(
        cat, params["sam_w"], (1, 1), ((PAD, PAD), (PAD, PAD)),
        dimension_numbers=("NCHW", "OIHW", "NCHW"))
    return conv * y


def critic_reference(params, s, s_a, a):
    B = s.shape[0]
    z = cbam_reference(params, s)
    sc = jnp.concatenate([z.reshape(B, -1), s_a], axis=1)

    def branch(w1, b1, ws, wa, ba, wo, bo):
        s1 = jax.nn.relu(sc @ w1.T + b1)
        h = jax.nn.relu(s1 @ ws.T + a @ wa.T + ba)
        return h @ wo.T + bo

    q1 = branch(params["w1"], params["b1"], params["w2s"], params["w2a"],
                params["b2a"], params["w3"], params["b3"])
    q2 = branch(params["w4"], params["b4"], params["w5s"], params["w5a"],
                params["b5a"], params["w6"], params["b6"])
    return q1, q2


if __name__ == "__main__":
    key = jax.random.PRNGKey(0)

    # Shapes implied by the module: CAM uses channels // 30, so channels >= 30 keeps the
    # bottleneck non-degenerate; layer_5_a is Linear(1, hidden) so action_dim must be 1.
    B = 2
    C, H, W = 32, 16, 16
    STATE_DIM, ACTION_DIM, HIDDEN = 8, 1, 32
    R = 30
    CR = max(C // R, 1)
    F = C * H * W + STATE_DIM

    keys = jax.random.split(key, 24)

    def unif(k, shape, fan_in):
        b = 1.0 / (fan_in ** 0.5)
        return jax.random.uniform(k, shape, jnp.float32, -b, b)

    params = {
        # CBAM
        "sam_w": unif(keys[0], (1, 2, K, K), 2 * K * K),
        "cam_w1": unif(keys[1], (CR, C), C), "cam_b1": unif(keys[2], (CR,), C),
        "cam_w2": unif(keys[3], (C, CR), CR), "cam_b2": unif(keys[4], (C,), CR),
        # Q1 head
        "w1": unif(keys[5], (HIDDEN, F), F), "b1": unif(keys[6], (HIDDEN,), F),
        "w2s": unif(keys[7], (HIDDEN, HIDDEN), HIDDEN),
        "w2a": unif(keys[8], (HIDDEN, ACTION_DIM), ACTION_DIM),
        "b2a": unif(keys[9], (HIDDEN,), ACTION_DIM),
        "w3": unif(keys[10], (ACTION_DIM, HIDDEN), HIDDEN),
        "b3": unif(keys[11], (ACTION_DIM,), HIDDEN),
        # Q2 head
        "w4": unif(keys[12], (HIDDEN, F), F), "b4": unif(keys[13], (HIDDEN,), F),
        "w5s": unif(keys[14], (HIDDEN, HIDDEN), HIDDEN),
        "w5a": unif(keys[15], (HIDDEN, 1), 1),
        "b5a": unif(keys[16], (HIDDEN,), 1),
        "w6": unif(keys[17], (ACTION_DIM, HIDDEN), HIDDEN),
        "b6": unif(keys[18], (ACTION_DIM,), HIDDEN),
    }

    s = jax.random.normal(keys[19], (B, C, H, W), jnp.float32)
    s_a = jax.random.normal(keys[20], (B, STATE_DIM), jnp.float32)
    a = jax.random.uniform(keys[21], (B, ACTION_DIM), jnp.float32, -1.0, 1.0)

    fwd = jax.jit(critic_forward)
    q1, q2 = fwd(params, s, s_a, a)
    q1, q2 = jax.block_until_ready((q1, q2))

    # Verify against the plain-JAX reference (covers CBAM + both Q branches end to end).
    r1, r2 = critic_reference(params, s, s_a, a)

    assert q1.shape == (B, ACTION_DIM) and q2.shape == (B, ACTION_DIM)
    assert jnp.allclose(q1, r1, atol=5e-2, rtol=5e-2), "q1 mismatch vs reference"
    assert jnp.allclose(q2, r2, atol=5e-2, rtol=5e-2), "q2 mismatch vs reference"

    print("KERNEL_OK")
</pallas_src>

<mosaic_0001>
module attributes {stable_mosaic.version = 11 : i64} {
  func.func @_critic_kernel(%arg0: i32, %arg1: memref<256x256xf32, #tpu.memory_space<vmem>>, %arg2: memref<256x256xf32, #tpu.memory_space<vmem>>, %arg3: memref<32x1xf32, #tpu.memory_space<vmem>>, %arg4: memref<1x1xf32, #tpu.memory_space<vmem>>, %arg5: memref<32x1xf32, #tpu.memory_space<vmem>>, %arg6: memref<32x1xf32, #tpu.memory_space<vmem>>, %arg7: memref<32x256x64xbf16, #tpu.memory_space<vmem>>, %arg8: memref<8x64xf32, #tpu.memory_space<vmem>>, %arg9: memref<1x64xf32, #tpu.memory_space<vmem>>, %arg10: memref<64x64xf32, #tpu.memory_space<vmem>>, %arg11: memref<1x64xf32, #tpu.memory_space<vmem>>, %arg12: memref<1x64xf32, #tpu.memory_space<vmem>>, %arg13: memref<64x2xf32, #tpu.memory_space<vmem>>, %arg14: memref<1x2xf32, #tpu.memory_space<vmem>>, %arg15: memref<2x32x256xf32, #tpu.memory_space<vmem>>, %arg16: memref<2x1x8xf32, #tpu.memory_space<vmem>>, %arg17: memref<2x1x1xf32, #tpu.memory_space<vmem>>, %arg18: memref<2x1x2xf32, #tpu.memory_space<vmem>>, %arg19: memref<2x64xf32, #tpu.memory_space<vmem>>) attributes {dimension_semantics = [#tpu.dimension_semantics<parallel>], iteration_bounds = array<i64: 1>, scalar_prefetch = 0 : i64, scratch_operands = 1 : i64, tpu.core_type = #tpu.core_type<tc>, window_params = [{pipeline_mode = #tpu.pipeline_mode<synchronous>, transform_indices = @transform_0, window_bounds = array<i64: 256, 256>}, {pipeline_mode = #tpu.pipeline_mode<synchronous>, transform_indices = @transform_1, window_bounds = array<i64: 256, 256>}, {pipeline_mode = #tpu.pipeline_mode<synchronous>, transform_indices = @transform_2, window_bounds = array<i64: 32, 1>}, {pipeline_mode = #tpu.pipeline_mode<synchronous>, transform_indices = @transform_3, window_bounds = array<i64: 1, 1>}, {pipeline_mode = #tpu.pipeline_mode<synchronous>, transform_indices = @transform_4, window_bounds = array<i64: 32, 1>}, {pipeline_mode = #tpu.pipeline_mode<synchronous>, transform_indices = @transform_5, window_bounds = array<i64: 32, 1>}, {pipeline_mode = #tpu.pipeline_mode<synchronous>, transform_indices = @transform_6, window_bounds = array<i64: 32, 256, 64>}, {pipeline_mode = #tpu.pipeline_mode<synchronous>, transform_indices = @transform_7, window_bounds = array<i64: 8, 64>}, {pipeline_mode = #tpu.pipeline_mode<synchronous>, transform_indices = @transform_8, window_bounds = array<i64: 1, 64>}, {pipeline_mode = #tpu.pipeline_mode<synchronous>, transform_indices = @transform_9, window_bounds = array<i64: 64, 64>}, {pipeline_mode = #tpu.pipeline_mode<synchronous>, transform_indices = @transform_10, window_bounds = array<i64: 1, 64>}, {pipeline_mode = #tpu.pipeline_mode<synchronous>, transform_indices = @transform_11, window_bounds = array<i64: 1, 64>}, {pipeline_mode = #tpu.pipeline_mode<synchronous>, transform_indices = @transform_12, window_bounds = array<i64: 64, 2>}, {pipeline_mode = #tpu.pipeline_mode<synchronous>, transform_indices = @transform_13, window_bounds = array<i64: 1, 2>}, {transform_indices = @transform_14, window_bounds = array<i64: 2, 32, 256>}, {transform_indices = @transform_15, window_bounds = array<i64: 2, 1, 8>}, {transform_indices = @transform_16, window_bounds = array<i64: 2, 1, 1>}, {transform_indices = @transform_17, window_bounds = array<i64: 2, 1, 2>}]} {
    %c0 = arith.constant 0 : index
    %c0_0 = arith.constant 0 : index
    %0 = vector.load %arg3[%c0, %c0_0] : memref<32x1xf32, #tpu.memory_space<vmem>>, vector<32x1xf32>
    %c0_1 = arith.constant 0 : index
    %c0_2 = arith.constant 0 : index
    %1 = vector.load %arg4[%c0_1, %c0_2] : memref<1x1xf32, #tpu.memory_space<vmem>>, vector<1x1xf32>
    %c0_3 = arith.constant 0 : index
    %c0_4 = arith.constant 0 : index
    %2 = vector.load %arg5[%c0_3, %c0_4] : memref<32x1xf32, #tpu.memory_space<vmem>>, vector<32x1xf32>
    %c0_5 = arith.constant 0 : index
    %c0_6 = arith.constant 0 : index
    %3 = vector.load %arg6[%c0_5, %c0_6] : memref<32x1xf32, #tpu.memory_space<vmem>>, vector<32x1xf32>
    %c0_i32 = arith.constant 0 : i32
    %c2_i32 = arith.constant 2 : i32
    %4 = arith.addi %c0_i32, %c2_i32 : i32
    %c1_i32 = arith.constant 1 : i32
    scf.for %arg20 = %c0_i32 to %4 step %c1_i32  : i32 {
      %38 = arith.index_cast %arg20 : i32 to index
      %c0_37 = arith.constant 0 : index
      %c0_38 = arith.constant 0 : index
      %39 = vector.load %arg15[%38, %c0_37, %c0_38] : memref<2x32x256xf32, #tpu.memory_space<vmem>>, vector<1x32x256xf32>
      %40 = vector.shape_cast %39 : vector<1x32x256xf32> to vector<32x256xf32>
      %cst_39 = arith.constant dense<0xFF800000> : vector<32xf32>
      %41 = vector.multi_reduction <maximumf>, %40, %cst_39 [1] : vector<32x256xf32> to vector<32xf32>
      %42 = vector.shape_cast %41 : vector<32xf32> to vector<32x1xf32>
      %cst_40 = arith.constant dense<0.000000e+00> : vector<32xf32>
      %43 = vector.multi_reduction <add>, %40, %cst_40 [1] : vector<32x256xf32> to vector<32xf32>
      %44 = vector.shape_cast %43 : vector<32xf32> to vector<32x1xf32>
      %cst_41 = arith.constant 3.906250e-03 : f32
      %45 = vector.broadcast %cst_41 : f32 to vector<32x1xf32>
      %46 = arith.mulf %44, %45 : vector<32x1xf32>
      %47 = arith.mulf %42, %0 : vector<32x1xf32>
      %cst_42 = arith.constant dense<0.000000e+00> : vector<1xf32>
      %48 = vector.multi_reduction <add>, %47, %cst_42 [0] : vector<32x1xf32> to vector<1xf32>
      %49 = vector.shape_cast %48 : vector<1xf32> to vector<1x1xf32>
      %50 = arith.addf %49, %1 : vector<1x1xf32>
      %cst_43 = arith.constant 0.000000e+00 : f32
      %51 = vector.broadcast %cst_43 : f32 to vector<1x1xf32>
      %52 = arith.maximumf %50, %51 : vector<1x1xf32>
      %53 = vector.broadcast %52 : vector<1x1xf32> to vector<32x1xf32>
      %54 = arith.mulf %53, %2 : vector<32x1xf32>
      %cst_44 = arith.constant dense<0.000000e+00> : vector<32xf32>
      %55 = vector.multi_reduction <add>, %54, %cst_44 [1] : vector<32x1xf32> to vector<32xf32>
      %56 = vector.shape_cast %55 : vector<32xf32> to vector<32x1xf32>
      %57 = arith.addf %56, %3 : vector<32x1xf32>
      %58 = arith.mulf %46, %0 : vector<32x1xf32>
      %cst_45 = arith.constant dense<0.000000e+00> : vector<1xf32>
      %59 = vector.multi_reduction <add>, %58, %cst_45 [0] : vector<32x1xf32> to vector<1xf32>
      %60 = vector.shape_cast %59 : vector<1xf32> to vector<1x1xf32>
      %61 = arith.addf %60, %1 : vector<1x1xf32>
      %cst_46 = arith.constant 0.000000e+00 : f32
      %62 = vector.broadcast %cst_46 : f32 to vector<1x1xf32>
      %63 = arith.maximumf %61, %62 : vector<1x1xf32>
      %64 = vector.broadcast %63 : vector<1x1xf32> to vector<32x1xf32>
      %65 = arith.mulf %64, %2 : vector<32x1xf32>
      %cst_47 = arith.constant dense<0.000000e+00> : vector<32xf32>
      %66 = vector.multi_reduction <add>, %65, %cst_47 [1] : vector<32x1xf32> to vector<32xf32>
      %67 = vector.shape_cast %66 : vector<32xf32> to vector<32x1xf32>
      %68 = arith.addf %67, %3 : vector<32x1xf32>
      %69 = arith.addf %57, %68 : vector<32x1xf32>
      %70 = arith.negf %69 : vector<32x1xf32>
      %71 = math.exp %70 : vector<32x1xf32>
      %cst_48 = arith.constant 1.000000e+00 : f32
      %72 = vector.broadcast %cst_48 : f32 to vector<32x1xf32>
      %73 = arith.addf %72, %71 : vector<32x1xf32>
      %74 = arith.divf %72, %73 : vector<32x1xf32>
      %75 = vector.broadcast %74 : vector<32x1xf32> to vector<32x256xf32>
      %76 = arith.mulf %75, %40 : vector<32x256xf32>
      %cst_49 = arith.constant dense<0xFF800000> : vector<256xf32>
      %77 = vector.multi_reduction <maximumf>, %76, %cst_49 [0] : vector<32x256xf32> to vector<256xf32>
      %78 = vector.shape_cast %77 : vector<256xf32> to vector<1x256xf32>
      %cst_50 = arith.constant dense<0.000000e+00> : vector<256xf32>
      %79 = vector.multi_reduction <add>, %76, %cst_50 [0] : vector<32x256xf32> to vector<256xf32>
      %80 = vector.shape_cast %79 : vector<256xf32> to vector<1x256xf32>
      %c0_51 = arith.constant 0 : index
      %c0_52 = arith.constant 0 : index
      %81 = vector.load %arg1[%c0_51, %c0_52] : memref<256x256xf32, #tpu.memory_space<vmem>>, vector<256x256xf32>
      %cst_53 = arith.constant dense<0.000000e+00> : vector<1x256xf32>
      %82 = tpu.matmul %78, %81, %cst_53 {dimension_numbers = #tpu.dot_dimension_numbers<[1], [0], [0], [1], [0, 0, 1, 1], [], []>} : vector<1x256xf32>, vector<256x256xf32>, vector<1x256xf32> -> vector<1x256xf32>
      %c0_54 = arith.constant 0 : index
      %c0_55 = arith.constant 0 : index
      %83 = vector.load %arg2[%c0_54, %c0_55] : memref<256x256xf32, #tpu.memory_space<vmem>>, vector<256x256xf32>
      %cst_56 = arith.constant dense<0.000000e+00> : vector<1x256xf32>
      %84 = tpu.matmul %80, %83, %cst_56 {dimension_numbers = #tpu.dot_dimension_numbers<[1], [0], [0], [1], [0, 0, 1, 1], [], []>} : vector<1x256xf32>, vector<256x256xf32>, vector<1x256xf32> -> vector<1x256xf32>
      %85 = arith.addf %82, %84 : vector<1x256xf32>
      %cst_57 = arith.constant 0.000000e+00 : f32
      %86 = vector.broadcast %cst_57 : f32 to vector<1x64xf32>
      %87 = vector.extract_strided_slice %76 {offsets = [0, 0], sizes = [1, 256], strides = [1, 1]} : vector<32x256xf32> to vector<1x256xf32>
      %88 = arith.mulf %85, %87 : vector<1x256xf32>
      %89 = arith.truncf %88 : vector<1x256xf32> to vector<1x256xbf16>
      %c0_58 = arith.constant 0 : index
      %c0_59 = arith.constant 0 : index
      %c0_60 = arith.constant 0 : index
      %90 = vector.load %arg7[%c0_58, %c0_59, %c0_60] : memref<32x256x64xbf16, #tpu.memory_space<vmem>>, vector<1x256x64xbf16>
      %91 = vector.shape_cast %90 : vector<1x256x64xbf16> to vector<256x64xbf16>
      %cst_61 = arith.constant dense<0.000000e+00> : vector<1x64xf32>
      %92 = tpu.matmul %89, %91, %cst_61 {dimension_numbers = #tpu.dot_dimension_numbers<[1], [0], [0], [1], [0, 0, 1, 1], [], []>} : vector<1x256xbf16>, vector<256x64xbf16>, vector<1x64xf32> -> vector<1x64xf32>
      %93 = arith.addf %86, %92 : vector<1x64xf32>
      %94 = vector.extract_strided_slice %76 {offsets = [1, 0], sizes = [1, 256], strides = [1, 1]} : vector<32x256xf32> to vector<1x256xf32>
      %95 = arith.mulf %85, %94 : vector<1x256xf32>
      %96 = arith.truncf %95 : vector<1x256xf32> to vector<1x256xbf16>
      %c1 = arith.constant 1 : index
      %c0_62 = arith.constant 0 : index
      %c0_63 = arith.constant 0 : index
      %97 = vector.load %arg7[%c1, %c0_62, %c0_63] : memref<32x256x64xbf16, #tpu.memory_space<vmem>>, vector<1x256x64xbf16>
      %98 = vector.shape_cast %97 : vector<1x256x64xbf16> to vector<256x64xbf16>
      %cst_64 = arith.constant dense<0.000000e+00> : vector<1x64xf32>
      %99 = tpu.matmul %96, %98, %cst_64 {dimension_numbers = #tpu.dot_dimension_numbers<[1], [0], [0], [1], [0, 0, 1, 1], [], []>} : vector<1x256xbf16>, vector<256x64xbf16>, vector<1x64xf32> -> vector<1x64xf32>
      %100 = arith.addf %93, %99 : vector<1x64xf32>
      %101 = vector.extract_strided_slice %76 {offsets = [2, 0], sizes = [1, 256], strides = [1, 1]} : vector<32x256xf32> to vector<1x256xf32>
      %102 = arith.mulf %85, %101 : vector<1x256xf32>
      %103 = arith.truncf %102 : vector<1x256xf32> to vector<1x256xbf16>
      %c2 = arith.constant 2 : index
      %c0_65 = arith.constant 0 : index
      %c0_66 = arith.constant 0 : index
      %104 = vector.load %arg7[%c2, %c0_65, %c0_66] : memref<32x256x64xbf16, #tpu.memory_space<vmem>>, vector<1x256x64xbf16>
      %105 = vector.shape_cast %104 : vector<1x256x64xbf16> to vector<256x64xbf16>
      %cst_67 = arith.constant dense<0.000000e+00> : vector<1x64xf32>
      %106 = tpu.matmul %103, %105, %cst_67 {dimension_numbers = #tpu.dot_dimension_numbers<[1], [0], [0], [1], [0, 0, 1, 1], [], []>} : vector<1x256xbf16>, vector<256x64xbf16>, vector<1x64xf32> -> vector<1x64xf32>
      %107 = arith.addf %100, %106 : vector<1x64xf32>
      %108 = vector.extract_strided_slice %76 {offsets = [3, 0], sizes = [1, 256], strides = [1, 1]} : vector<32x256xf32> to vector<1x256xf32>
      %109 = arith.mulf %85, %108 : vector<1x256xf32>
      %110 = arith.truncf %109 : vector<1x256xf32> to vector<1x256xbf16>
      %c3 = arith.constant 3 : index
      %c0_68 = arith.constant 0 : index
      %c0_69 = arith.constant 0 : index
      %111 = vector.load %arg7[%c3, %c0_68, %c0_69] : memref<32x256x64xbf16, #tpu.memory_space<vmem>>, vector<1x256x64xbf16>
      %112 = vector.shape_cast %111 : vector<1x256x64xbf16> to vector<256x64xbf16>
      %cst_70 = arith.constant dense<0.000000e+00> : vector<1x64xf32>
      %113 = tpu.matmul %110, %112, %cst_70 {dimension_numbers = #tpu.dot_dimension_numbers<[1], [0], [0], [1], [0, 0, 1, 1], [], []>} : vector<1x256xbf16>, vector<256x64xbf16>, vector<1x64xf32> -> vector<1x64xf32>
      %114 = arith.addf %107, %113 : vector<1x64xf32>
      %115 = vector.extract_strided_slice %76 {offsets = [4, 0], sizes = [1, 256], strides = [1, 1]} : vector<32x256xf32> to vector<1x256xf32>
      %116 = arith.mulf %85, %115 : vector<1x256xf32>
      %117 = arith.truncf %116 : vector<1x256xf32> to vector<1x256xbf16>
      %c4 = arith.constant 4 : index
      %c0_71 = arith.constant 0 : index
      %c0_72 = arith.constant 0 : index
      %118 = vector.load %arg7[%c4, %c0_71, %c0_72] : memref<32x256x64xbf16, #tpu.memory_space<vmem>>, vector<1x256x64xbf16>
      %119 = vector.shape_cast %118 : vector<1x256x64xbf16> to vector<256x64xbf16>
      %cst_73 = arith.constant dense<0.000000e+00> : vector<1x64xf32>
      %120 = tpu.matmul %117, %119, %cst_73 {dimension_numbers = #tpu.dot_dimension_numbers<[1], [0], [0], [1], [0, 0, 1, 1], [], []>} : vector<1x256xbf16>, vector<256x64xbf16>, vector<1x64xf32> -> vector<1x64xf32>
      %121 = arith.addf %114, %120 : vector<1x64xf32>
      %122 = vector.extract_strided_slice %76 {offsets = [5, 0], sizes = [1, 256], strides = [1, 1]} : vector<32x256xf32> to vector<1x256xf32>
      %123 = arith.mulf %85, %122 : vector<1x256xf32>
      %124 = arith.truncf %123 : vector<1x256xf32> to vector<1x256xbf16>
      %c5 = arith.constant 5 : index
      %c0_74 = arith.constant 0 : index
      %c0_75 = arith.constant 0 : index
      %125 = vector.load %arg7[%c5, %c0_74, %c0_75] : memref<32x256x64xbf16, #tpu.memory_space<vmem>>, vector<1x256x64xbf16>
      %126 = vector.shape_cast %125 : vector<1x256x64xbf16> to vector<256x64xbf16>
      %cst_76 = arith.constant dense<0.000000e+00> : vector<1x64xf32>
      %127 = tpu.matmul %124, %126, %cst_76 {dimension_numbers = #tpu.dot_dimension_numbers<[1], [0], [0], [1], [0, 0, 1, 1], [], []>} : vector<1x256xbf16>, vector<256x64xbf16>, vector<1x64xf32> -> vector<1x64xf32>
      %128 = arith.addf %121, %127 : vector<1x64xf32>
      %129 = vector.extract_strided_slice %76 {offsets = [6, 0], sizes = [1, 256], strides = [1, 1]} : vector<32x256xf32> to vector<1x256xf32>
      %130 = arith.mulf %85, %129 : vector<1x256xf32>
      %131 = arith.truncf %130 : vector<1x256xf32> to vector<1x256xbf16>
      %c6 = arith.constant 6 : index
      %c0_77 = arith.constant 0 : index
      %c0_78 = arith.constant 0 : index
      %132 = vector.load %arg7[%c6, %c0_77, %c0_78] : memref<32x256x64xbf16, #tpu.memory_space<vmem>>, vector<1x256x64xbf16>
      %133 = vector.shape_cast %132 : vector<1x256x64xbf16> to vector<256x64xbf16>
      %cst_79 = arith.constant dense<0.000000e+00> : vector<1x64xf32>
      %134 = tpu.matmul %131, %133, %cst_79 {dimension_numbers = #tpu.dot_dimension_numbers<[1], [0], [0], [1], [0, 0, 1, 1], [], []>} : vector<1x256xbf16>, vector<256x64xbf16>, vector<1x64xf32> -> vector<1x64xf32>
      %135 = arith.addf %128, %134 : vector<1x64xf32>
      %136 = vector.extract_strided_slice %76 {offsets = [7, 0], sizes = [1, 256], strides = [1, 1]} : vector<32x256xf32> to vector<1x256xf32>
      %137 = arith.mulf %85, %136 : vector<1x256xf32>
      %138 = arith.truncf %137 : vector<1x256xf32> to vector<1x256xbf16>
      %c7 = arith.constant 7 : index
      %c0_80 = arith.constant 0 : index
      %c0_81 = arith.constant 0 : index
      %139 = vector.load %arg7[%c7, %c0_80, %c0_81] : memref<32x256x64xbf16, #tpu.memory_space<vmem>>, vector<1x256x64xbf16>
      %140 = vector.shape_cast %139 : vector<1x256x64xbf16> to vector<256x64xbf16>
      %cst_82 = arith.constant dense<0.000000e+00> : vector<1x64xf32>
      %141 = tpu.matmul %138, %140, %cst_82 {dimension_numbers = #tpu.dot_dimension_numbers<[1], [0], [0], [1], [0, 0, 1, 1], [], []>} : vector<1x256xbf16>, vector<256x64xbf16>, vector<1x64xf32> -> vector<1x64xf32>
      %142 = arith.addf %135, %141 : vector<1x64xf32>
      %143 = vector.extract_strided_slice %76 {offsets = [8, 0], sizes = [1, 256], strides = [1, 1]} : vector<32x256xf32> to vector<1x256xf32>
      %144 = arith.mulf %85, %143 : vector<1x256xf32>
      %145 = arith.truncf %144 : vector<1x256xf32> to vector<1x256xbf16>
      %c8 = arith.constant 8 : index
      %c0_83 = arith.constant 0 : index
      %c0_84 = arith.constant 0 : index
      %146 = vector.load %arg7[%c8, %c0_83, %c0_84] : memref<32x256x64xbf16, #tpu.memory_space<vmem>>, vector<1x256x64xbf16>
      %147 = vector.shape_cast %146 : vector<1x256x64xbf16> to vector<256x64xbf16>
      %cst_85 = arith.constant dense<0.000000e+00> : vector<1x64xf32>
      %148 = tpu.matmul %145, %147, %cst_85 {dimension_numbers = #tpu.dot_dimension_numbers<[1], [0], [0], [1], [0, 0, 1, 1], [], []>} : vector<1x256xbf16>, vector<256x64xbf16>, vector<1x64xf32> -> vector<1x64xf32>
      %149 = arith.addf %142, %148 : vector<1x64xf32>
      %150 = vector.extract_strided_slice %76 {offsets = [9, 0], sizes = [1, 256], strides = [1, 1]} : vector<32x256xf32> to vector<1x256xf32>
      %151 = arith.mulf %85, %150 : vector<1x256xf32>
      %152 = arith.truncf %151 : vector<1x256xf32> to vector<1x256xbf16>
      %c9 = arith.constant 9 : index
      %c0_86 = arith.constant 0 : index
      %c0_87 = arith.constant 0 : index
      %153 = vector.load %arg7[%c9, %c0_86, %c0_87] : memref<32x256x64xbf16, #tpu.memory_space<vmem>>, vector<1x256x64xbf16>
      %154 = vector.shape_cast %153 : vector<1x256x64xbf16> to vector<256x64xbf16>
      %cst_88 = arith.constant dense<0.000000e+00> : vector<1x64xf32>
      %155 = tpu.matmul %152, %154, %cst_88 {dimension_numbers = #tpu.dot_dimension_numbers<[1], [0], [0], [1], [0, 0, 1, 1], [], []>} : vector<1x256xbf16>, vector<256x64xbf16>, vector<1x64xf32> -> vector<1x64xf32>
      %156 = arith.addf %149, %155 : vector<1x64xf32>
      %157 = vector.extract_strided_slice %76 {offsets = [10, 0], sizes = [1, 256], strides = [1, 1]} : vector<32x256xf32> to vector<1x256xf32>
      %158 = arith.mulf %85, %157 : vector<1x256xf32>
      %159 = arith.truncf %158 : vector<1x256xf32> to vector<1x256xbf16>
      %c10 = arith.constant 10 : index
      %c0_89 = arith.constant 0 : index
      %c0_90 = arith.constant 0 : index
      %160 = vector.load %arg7[%c10, %c0_89, %c0_90] : memref<32x256x64xbf16, #tpu.memory_space<vmem>>, vector<1x256x64xbf16>
      %161 = vector.shape_cast %160 : vector<1x256x64xbf16> to vector<256x64xbf16>
      %cst_91 = arith.constant dense<0.000000e+00> : vector<1x64xf32>
      %162 = tpu.matmul %159, %161, %cst_91 {dimension_numbers = #tpu.dot_dimension_numbers<[1], [0], [0], [1], [0, 0, 1, 1], [], []>} : vector<1x256xbf16>, vector<256x64xbf16>, vector<1x64xf32> -> vector<1x64xf32>
      %163 = arith.addf %156, %162 : vector<1x64xf32>
      %164 = vector.extract_strided_slice %76 {offsets = [11, 0], sizes = [1, 256], strides = [1, 1]} : vector<32x256xf32> to vector<1x256xf32>
      %165 = arith.mulf %85, %164 : vector<1x256xf32>
      %166 = arith.truncf %165 : vector<1x256xf32> to vector<1x256xbf16>
      %c11 = arith.constant 11 : index
      %c0_92 = arith.constant 0 : index
      %c0_93 = arith.constant 0 : index
      %167 = vector.load %arg7[%c11, %c0_92, %c0_93] : memref<32x256x64xbf16, #tpu.memory_space<vmem>>, vector<1x256x64xbf16>
      %168 = vector.shape_cast %167 : vector<1x256x64xbf16> to vector<256x64xbf16>
      %cst_94 = arith.constant dense<0.000000e+00> : vector<1x64xf32>
      %169 = tpu.matmul %166, %168, %cst_94 {dimension_numbers = #tpu.dot_dimension_numbers<[1], [0], [0], [1], [0, 0, 1, 1], [], []>} : vector<1x256xbf16>, vector<256x64xbf16>, vector<1x64xf32> -> vector<1x64xf32>
      %170 = arith.addf %163, %169 : vector<1x64xf32>
      %171 = vector.extract_strided_slice %76 {offsets = [12, 0], sizes = [1, 256], strides = [1, 1]} : vector<32x256xf32> to vector<1x256xf32>
      %172 = arith.mulf %85, %171 : vector<1x256xf32>
      %173 = arith.truncf %172 : vector<1x256xf32> to vector<1x256xbf16>
      %c12 = arith.constant 12 : index
      %c0_95 = arith.constant 0 : index
      %c0_96 = arith.constant 0 : index
      %174 = vector.load %arg7[%c12, %c0_95, %c0_96] : memref<32x256x64xbf16, #tpu.memory_space<vmem>>, vector<1x256x64xbf16>
      %175 = vector.shape_cast %174 : vector<1x256x64xbf16> to vector<256x64xbf16>
      %cst_97 = arith.constant dense<0.000000e+00> : vector<1x64xf32>
      %176 = tpu.matmul %173, %175, %cst_97 {dimension_numbers = #tpu.dot_dimension_numbers<[1], [0], [0], [1], [0, 0, 1, 1], [], []>} : vector<1x256xbf16>, vector<256x64xbf16>, vector<1x64xf32> -> vector<1x64xf32>
      %177 = arith.addf %170, %176 : vector<1x64xf32>
      %178 = vector.extract_strided_slice %76 {offsets = [13, 0], sizes = [1, 256], strides = [1, 1]} : vector<32x256xf32> to vector<1x256xf32>
      %179 = arith.mulf %85, %178 : vector<1x256xf32>
      %180 = arith.truncf %179 : vector<1x256xf32> to vector<1x256xbf16>
      %c13 = arith.constant 13 : index
      %c0_98 = arith.constant 0 : index
      %c0_99 = arith.constant 0 : index
      %181 = vector.load %arg7[%c13, %c0_98, %c0_99] : memref<32x256x64xbf16, #tpu.memory_space<vmem>>, vector<1x256x64xbf16>
      %182 = vector.shape_cast %181 : vector<1x256x64xbf16> to vector<256x64xbf16>
      %cst_100 = arith.constant dense<0.000000e+00> : vector<1x64xf32>
      %183 = tpu.matmul %180, %182, %cst_100 {dimension_numbers = #tpu.dot_dimension_numbers<[1], [0], [0], [1], [0, 0, 1, 1], [], []>} : vector<1x256xbf16>, vector<256x64xbf16>, vector<1x64xf32> -> vector<1x64xf32>
      %184 = arith.addf %177, %183 : vector<1x64xf32>
      %185 = vector.extract_strided_slice %76 {offsets = [14, 0], sizes = [1, 256], strides = [1, 1]} : vector<32x256xf32> to vector<1x256xf32>
      %186 = arith.mulf %85, %185 : vector<1x256xf32>
      %187 = arith.truncf %186 : vector<1x256xf32> to vector<1x256xbf16>
      %c14 = arith.constant 14 : index
      %c0_101 = arith.constant 0 : index
      %c0_102 = arith.constant 0 : index
      %188 = vector.load %arg7[%c14, %c0_101, %c0_102] : memref<32x256x64xbf16, #tpu.memory_space<vmem>>, vector<1x256x64xbf16>
      %189 = vector.shape_cast %188 : vector<1x256x64xbf16> to vector<256x64xbf16>
      %cst_103 = arith.constant dense<0.000000e+00> : vector<1x64xf32>
      %190 = tpu.matmul %187, %189, %cst_103 {dimension_numbers = #tpu.dot_dimension_numbers<[1], [0], [0], [1], [0, 0, 1, 1], [], []>} : vector<1x256xbf16>, vector<256x64xbf16>, vector<1x64xf32> -> vector<1x64xf32>
      %191 = arith.addf %184, %190 : vector<1x64xf32>
      %192 = vector.extract_strided_slice %76 {offsets = [15, 0], sizes = [1, 256], strides = [1, 1]} : vector<32x256xf32> to vector<1x256xf32>
      %193 = arith.mulf %85, %192 : vector<1x256xf32>
      %194 = arith.truncf %193 : vector<1x256xf32> to vector<1x256xbf16>
      %c15 = arith.constant 15 : index
      %c0_104 = arith.constant 0 : index
      %c0_105 = arith.constant 0 : index
      %195 = vector.load %arg7[%c15, %c0_104, %c0_105] : memref<32x256x64xbf16, #tpu.memory_space<vmem>>, vector<1x256x64xbf16>
      %196 = vector.shape_cast %195 : vector<1x256x64xbf16> to vector<256x64xbf16>
      %cst_106 = arith.constant dense<0.000000e+00> : vector<1x64xf32>
      %197 = tpu.matmul %194, %196, %cst_106 {dimension_numbers = #tpu.dot_dimension_numbers<[1], [0], [0], [1], [0, 0, 1, 1], [], []>} : vector<1x256xbf16>, vector<256x64xbf16>, vector<1x64xf32> -> vector<1x64xf32>
      %198 = arith.addf %191, %197 : vector<1x64xf32>
      %199 = vector.extract_strided_slice %76 {offsets = [16, 0], sizes = [1, 256], strides = [1, 1]} : vector<32x256xf32> to vector<1x256xf32>
      %200 = arith.mulf %85, %199 : vector<1x256xf32>
      %201 = arith.truncf %200 : vector<1x256xf32> to vector<1x256xbf16>
      %c16 = arith.constant 16 : index
      %c0_107 = arith.constant 0 : index
      %c0_108 = arith.constant 0 : index
      %202 = vector.load %arg7[%c16, %c0_107, %c0_108] : memref<32x256x64xbf16, #tpu.memory_space<vmem>>, vector<1x256x64xbf16>
      %203 = vector.shape_cast %202 : vector<1x256x64xbf16> to vector<256x64xbf16>
      %cst_109 = arith.constant dense<0.000000e+00> : vector<1x64xf32>
      %204 = tpu.matmul %201, %203, %cst_109 {dimension_numbers = #tpu.dot_dimension_numbers<[1], [0], [0], [1], [0, 0, 1, 1], [], []>} : vector<1x256xbf16>, vector<256x64xbf16>, vector<1x64xf32> -> vector<1x64xf32>
      %205 = arith.addf %198, %204 : vector<1x64xf32>
      %206 = vector.extract_strided_slice %76 {offsets = [17, 0], sizes = [1, 256], strides = [1, 1]} : vector<32x256xf32> to vector<1x256xf32>
      %207 = arith.mulf %85, %206 : vector<1x256xf32>
      %208 = arith.truncf %207 : vector<1x256xf32> to vector<1x256xbf16>
      %c17 = arith.constant 17 : index
      %c0_110 = arith.constant 0 : index
      %c0_111 = arith.constant 0 : index
      %209 = vector.load %arg7[%c17, %c0_110, %c0_111] : memref<32x256x64xbf16, #tpu.memory_space<vmem>>, vector<1x256x64xbf16>
      %210 = vector.shape_cast %209 : vector<1x256x64xbf16> to vector<256x64xbf16>
      %cst_112 = arith.constant dense<0.000000e+00> : vector<1x64xf32>
      %211 = tpu.matmul %208, %210, %cst_112 {dimension_numbers = #tpu.dot_dimension_numbers<[1], [0], [0], [1], [0, 0, 1, 1], [], []>} : vector<1x256xbf16>, vector<256x64xbf16>, vector<1x64xf32> -> vector<1x64xf32>
      %212 = arith.addf %205, %211 : vector<1x64xf32>
      %213 = vector.extract_strided_slice %76 {offsets = [18, 0], sizes = [1, 256], strides = [1, 1]} : vector<32x256xf32> to vector<1x256xf32>
      %214 = arith.mulf %85, %213 : vector<1x256xf32>
      %215 = arith.truncf %214 : vector<1x256xf32> to vector<1x256xbf16>
      %c18 = arith.constant 18 : index
      %c0_113 = arith.constant 0 : index
      %c0_114 = arith.constant 0 : index
      %216 = vector.load %arg7[%c18, %c0_113, %c0_114] : memref<32x256x64xbf16, #tpu.memory_space<vmem>>, vector<1x256x64xbf16>
      %217 = vector.shape_cast %216 : vector<1x256x64xbf16> to vector<256x64xbf16>
      %cst_115 = arith.constant dense<0.000000e+00> : vector<1x64xf32>
      %218 = tpu.matmul %215, %217, %cst_115 {dimension_numbers = #tpu.dot_dimension_numbers<[1], [0], [0], [1], [0, 0, 1, 1], [], []>} : vector<1x256xbf16>, vector<256x64xbf16>, vector<1x64xf32> -> vector<1x64xf32>
      %219 = arith.addf %212, %218 : vector<1x64xf32>
      %220 = vector.extract_strided_slice %76 {offsets = [19, 0], sizes = [1, 256], strides = [1, 1]} : vector<32x256xf32> to vector<1x256xf32>
      %221 = arith.mulf %85, %220 : vector<1x256xf32>
      %222 = arith.truncf %221 : vector<1x256xf32> to vector<1x256xbf16>
      %c19 = arith.constant 19 : index
      %c0_116 = arith.constant 0 : index
      %c0_117 = arith.constant 0 : index
      %223 = vector.load %arg7[%c19, %c0_116, %c0_117] : memref<32x256x64xbf16, #tpu.memory_space<vmem>>, vector<1x256x64xbf16>
      %224 = vector.shape_cast %223 : vector<1x256x64xbf16> to vector<256x64xbf16>
      %cst_118 = arith.constant dense<0.000000e+00> : vector<1x64xf32>
      %225 = tpu.matmul %222, %224, %cst_118 {dimension_numbers = #tpu.dot_dimension_numbers<[1], [0], [0], [1], [0, 0, 1, 1], [], []>} : vector<1x256xbf16>, vector<256x64xbf16>, vector<1x64xf32> -> vector<1x64xf32>
      %226 = arith.addf %219, %225 : vector<1x64xf32>
      %227 = vector.extract_strided_slice %76 {offsets = [20, 0], sizes = [1, 256], strides = [1, 1]} : vector<32x256xf32> to vector<1x256xf32>
      %228 = arith.mulf %85, %227 : vector<1x256xf32>
      %229 = arith.truncf %228 : vector<1x256xf32> to vector<1x256xbf16>
      %c20 = arith.constant 20 : index
      %c0_119 = arith.constant 0 : index
      %c0_120 = arith.constant 0 : index
      %230 = vector.load %arg7[%c20, %c0_119, %c0_120] : memref<32x256x64xbf16, #tpu.memory_space<vmem>>, vector<1x256x64xbf16>
      %231 = vector.shape_cast %230 : vector<1x256x64xbf16> to vector<256x64xbf16>
      %cst_121 = arith.constant dense<0.000000e+00> : vector<1x64xf32>
      %232 = tpu.matmul %229, %231, %cst_121 {dimension_numbers = #tpu.dot_dimension_numbers<[1], [0], [0], [1], [0, 0, 1, 1], [], []>} : vector<1x256xbf16>, vector<256x64xbf16>, vector<1x64xf32> -> vector<1x64xf32>
      %233 = arith.addf %226, %232 : vector<1x64xf32>
      %234 = vector.extract_strided_slice %76 {offsets = [21, 0], sizes = [1, 256], strides = [1, 1]} : vector<32x256xf32> to vector<1x256xf32>
      %235 = arith.mulf %85, %234 : vector<1x256xf32>
      %236 = arith.truncf %235 : vector<1x256xf32> to vector<1x256xbf16>
      %c21 = arith.constant 21 : index
      %c0_122 = arith.constant 0 : index
      %c0_123 = arith.constant 0 : index
      %237 = vector.load %arg7[%c21, %c0_122, %c0_123] : memref<32x256x64xbf16, #tpu.memory_space<vmem>>, vector<1x256x64xbf16>
      %238 = vector.shape_cast %237 : vector<1x256x64xbf16> to vector<256x64xbf16>
      %cst_124 = arith.constant dense<0.000000e+00> : vector<1x64xf32>
      %239 = tpu.matmul %236, %238, %cst_124 {dimension_numbers = #tpu.dot_dimension_numbers<[1], [0], [0], [1], [0, 0, 1, 1], [], []>} : vector<1x256xbf16>, vector<256x64xbf16>, vector<1x64xf32> -> vector<1x64xf32>
      %240 = arith.addf %233, %239 : vector<1x64xf32>
      %241 = vector.extract_strided_slice %76 {offsets = [22, 0], sizes = [1, 256], strides = [1, 1]} : vector<32x256xf32> to vector<1x256xf32>
      %242 = arith.mulf %85, %241 : vector<1x256xf32>
      %243 = arith.truncf %242 : vector<1x256xf32> to vector<1x256xbf16>
      %c22 = arith.constant 22 : index
      %c0_125 = arith.constant 0 : index
      %c0_126 = arith.constant 0 : index
      %244 = vector.load %arg7[%c22, %c0_125, %c0_126] : memref<32x256x64xbf16, #tpu.memory_space<vmem>>, vector<1x256x64xbf16>
      %245 = vector.shape_cast %244 : vector<1x256x64xbf16> to vector<256x64xbf16>
      %cst_127 = arith.constant dense<0.000000e+00> : vector<1x64xf32>
      %246 = tpu.matmul %243, %245, %cst_127 {dimension_numbers = #tpu.dot_dimension_numbers<[1], [0], [0], [1], [0, 0, 1, 1], [], []>} : vector<1x256xbf16>, vector<256x64xbf16>, vector<1x64xf32> -> vector<1x64xf32>
      %247 = arith.addf %240, %246 : vector<1x64xf32>
      %248 = vector.extract_strided_slice %76 {offsets = [23, 0], sizes = [1, 256], strides = [1, 1]} : vector<32x256xf32> to vector<1x256xf32>
      %249 = arith.mulf %85, %248 : vector<1x256xf32>
      %250 = arith.truncf %249 : vector<1x256xf32> to vector<1x256xbf16>
      %c23 = arith.constant 23 : index
      %c0_128 = arith.constant 0 : index
      %c0_129 = arith.constant 0 : index
      %251 = vector.load %arg7[%c23, %c0_128, %c0_129] : memref<32x256x64xbf16, #tpu.memory_space<vmem>>, vector<1x256x64xbf16>
      %252 = vector.shape_cast %251 : vector<1x256x64xbf16> to vector<256x64xbf16>
      %cst_130 = arith.constant dense<0.000000e+00> : vector<1x64xf32>
      %253 = tpu.matmul %250, %252, %cst_130 {dimension_numbers = #tpu.dot_dimension_numbers<[1], [0], [0], [1], [0, 0, 1, 1], [], []>} : vector<1x256xbf16>, vector<256x64xbf16>, vector<1x64xf32> -> vector<1x64xf32>
      %254 = arith.addf %247, %253 : vector<1x64xf32>
      %255 = vector.extract_strided_slice %76 {offsets = [24, 0], sizes = [1, 256], strides = [1, 1]} : vector<32x256xf32> to vector<1x256xf32>
      %256 = arith.mulf %85, %255 : vector<1x256xf32>
      %257 = arith.truncf %256 : vector<1x256xf32> to vector<1x256xbf16>
      %c24 = arith.constant 24 : index
      %c0_131 = arith.constant 0 : index
      %c0_132 = arith.constant 0 : index
      %258 = vector.load %arg7[%c24, %c0_131, %c0_132] : memref<32x256x64xbf16, #tpu.memory_space<vmem>>, vector<1x256x64xbf16>
      %259 = vector.shape_cast %258 : vector<1x256x64xbf16> to vector<256x64xbf16>
      %cst_133 = arith.constant dense<0.000000e+00> : vector<1x64xf32>
      %260 = tpu.matmul %257, %259, %cst_133 {dimension_numbers = #tpu.dot_dimension_numbers<[1], [0], [0], [1], [0, 0, 1, 1], [], []>} : vector<1x256xbf16>, vector<256x64xbf16>, vector<1x64xf32> -> vector<1x64xf32>
      %261 = arith.addf %254, %260 : vector<1x64xf32>
      %262 = vector.extract_strided_slice %76 {offsets = [25, 0], sizes = [1, 256], strides = [1, 1]} : vector<32x256xf32> to vector<1x256xf32>
      %263 = arith.mulf %85, %262 : vector<1x256xf32>
      %264 = arith.truncf %263 : vector<1x256xf32> to vector<1x256xbf16>
      %c25 = arith.constant 25 : index
      %c0_134 = arith.constant 0 : index
      %c0_135 = arith.constant 0 : index
      %265 = vector.load %arg7[%c25, %c0_134, %c0_135] : memref<32x256x64xbf16, #tpu.memory_space<vmem>>, vector<1x256x64xbf16>
      %266 = vector.shape_cast %265 : vector<1x256x64xbf16> to vector<256x64xbf16>
      %cst_136 = arith.constant dense<0.000000e+00> : vector<1x64xf32>
      %267 = tpu.matmul %264, %266, %cst_136 {dimension_numbers = #tpu.dot_dimension_numbers<[1], [0], [0], [1], [0, 0, 1, 1], [], []>} : vector<1x256xbf16>, vector<256x64xbf16>, vector<1x64xf32> -> vector<1x64xf32>
      %268 = arith.addf %261, %267 : vector<1x64xf32>
      %269 = vector.extract_strided_slice %76 {offsets = [26, 0], sizes = [1, 256], strides = [1, 1]} : vector<32x256xf32> to vector<1x256xf32>
      %270 = arith.mulf %85, %269 : vector<1x256xf32>
      %271 = arith.truncf %270 : vector<1x256xf32> to vector<1x256xbf16>
      %c26 = arith.constant 26 : index
      %c0_137 = arith.constant 0 : index
      %c0_138 = arith.constant 0 : index
      %272 = vector.load %arg7[%c26, %c0_137, %c0_138] : memref<32x256x64xbf16, #tpu.memory_space<vmem>>, vector<1x256x64xbf16>
      %273 = vector.shape_cast %272 : vector<1x256x64xbf16> to vector<256x64xbf16>
      %cst_139 = arith.constant dense<0.000000e+00> : vector<1x64xf32>
      %274 = tpu.matmul %271, %273, %cst_139 {dimension_numbers = #tpu.dot_dimension_numbers<[1], [0], [0], [1], [0, 0, 1, 1], [], []>} : vector<1x256xbf16>, vector<256x64xbf16>, vector<1x64xf32> -> vector<1x64xf32>
      %275 = arith.addf %268, %274 : vector<1x64xf32>
      %276 = vector.extract_strided_slice %76 {offsets = [27, 0], sizes = [1, 256], strides = [1, 1]} : vector<32x256xf32> to vector<1x256xf32>
      %277 = arith.mulf %85, %276 : vector<1x256xf32>
      %278 = arith.truncf %277 : vector<1x256xf32> to vector<1x256xbf16>
      %c27 = arith.constant 27 : index
      %c0_140 = arith.constant 0 : index
      %c0_141 = arith.constant 0 : index
      %279 = vector.load %arg7[%c27, %c0_140, %c0_141] : memref<32x256x64xbf16, #tpu.memory_space<vmem>>, vector<1x256x64xbf16>
      %280 = vector.shape_cast %279 : vector<1x256x64xbf16> to vector<256x64xbf16>
      %cst_142 = arith.constant dense<0.000000e+00> : vector<1x64xf32>
      %281 = tpu.matmul %278, %280, %cst_142 {dimension_numbers = #tpu.dot_dimension_numbers<[1], [0], [0], [1], [0, 0, 1, 1], [], []>} : vector<1x256xbf16>, vector<256x64xbf16>, vector<1x64xf32> -> vector<1x64xf32>
      %282 = arith.addf %275, %281 : vector<1x64xf32>
      %283 = vector.extract_strided_slice %76 {offsets = [28, 0], sizes = [1, 256], strides = [1, 1]} : vector<32x256xf32> to vector<1x256xf32>
      %284 = arith.mulf %85, %283 : vector<1x256xf32>
      %285 = arith.truncf %284 : vector<1x256xf32> to vector<1x256xbf16>
      %c28 = arith.constant 28 : index
      %c0_143 = arith.constant 0 : index
      %c0_144 = arith.constant 0 : index
      %286 = vector.load %arg7[%c28, %c0_143, %c0_144] : memref<32x256x64xbf16, #tpu.memory_space<vmem>>, vector<1x256x64xbf16>
      %287 = vector.shape_cast %286 : vector<1x256x64xbf16> to vector<256x64xbf16>
      %cst_145 = arith.constant dense<0.000000e+00> : vector<1x64xf32>
      %288 = tpu.matmul %285, %287, %cst_145 {dimension_numbers = #tpu.dot_dimension_numbers<[1], [0], [0], [1], [0, 0, 1, 1], [], []>} : vector<1x256xbf16>, vector<256x64xbf16>, vector<1x64xf32> -> vector<1x64xf32>
      %289 = arith.addf %282, %288 : vector<1x64xf32>
      %290 = vector.extract_strided_slice %76 {offsets = [29, 0], sizes = [1, 256], strides = [1, 1]} : vector<32x256xf32> to vector<1x256xf32>
      %291 = arith.mulf %85, %290 : vector<1x256xf32>
      %292 = arith.truncf %291 : vector<1x256xf32> to vector<1x256xbf16>
      %c29 = arith.constant 29 : index
      %c0_146 = arith.constant 0 : index
      %c0_147 = arith.constant 0 : index
      %293 = vector.load %arg7[%c29, %c0_146, %c0_147] : memref<32x256x64xbf16, #tpu.memory_space<vmem>>, vector<1x256x64xbf16>
      %294 = vector.shape_cast %293 : vector<1x256x64xbf16> to vector<256x64xbf16>
      %cst_148 = arith.constant dense<0.000000e+00> : vector<1x64xf32>
      %295 = tpu.matmul %292, %294, %cst_148 {dimension_numbers = #tpu.dot_dimension_numbers<[1], [0], [0], [1], [0, 0, 1, 1], [], []>} : vector<1x256xbf16>, vector<256x64xbf16>, vector<1x64xf32> -> vector<1x64xf32>
      %296 = arith.addf %289, %295 : vector<1x64xf32>
      %297 = vector.extract_strided_slice %76 {offsets = [30, 0], sizes = [1, 256], strides = [1, 1]} : vector<32x256xf32> to vector<1x256xf32>
      %298 = arith.mulf %85, %297 : vector<1x256xf32>
      %299 = arith.truncf %298 : vector<1x256xf32> to vector<1x256xbf16>
      %c30 = arith.constant 30 : index
      %c0_149 = arith.constant 0 : index
      %c0_150 = arith.constant 0 : index
      %300 = vector.load %arg7[%c30, %c0_149, %c0_150] : memref<32x256x64xbf16, #tpu.memory_space<vmem>>, vector<1x256x64xbf16>
      %301 = vector.shape_cast %300 : vector<1x256x64xbf16> to vector<256x64xbf16>
      %cst_151 = arith.constant dense<0.000000e+00> : vector<1x64xf32>
      %302 = tpu.matmul %299, %301, %cst_151 {dimension_numbers = #tpu.dot_dimension_numbers<[1], [0], [0], [1], [0, 0, 1, 1], [], []>} : vector<1x256xbf16>, vector<256x64xbf16>, vector<1x64xf32> -> vector<1x64xf32>
      %303 = arith.addf %296, %302 : vector<1x64xf32>
      %304 = vector.extract_strided_slice %76 {offsets = [31, 0], sizes = [1, 256], strides = [1, 1]} : vector<32x256xf32> to vector<1x256xf32>
      %305 = arith.mulf %85, %304 : vector<1x256xf32>
      %306 = arith.truncf %305 : vector<1x256xf32> to vector<1x256xbf16>
      %c31 = arith.constant 31 : index
      %c0_152 = arith.constant 0 : index
      %c0_153 = arith.constant 0 : index
      %307 = vector.load %arg7[%c31, %c0_152, %c0_153] : memref<32x256x64xbf16, #tpu.memory_space<vmem>>, vector<1x256x64xbf16>
      %308 = vector.shape_cast %307 : vector<1x256x64xbf16> to vector<256x64xbf16>
      %cst_154 = arith.constant dense<0.000000e+00> : vector<1x64xf32>
      %309 = tpu.matmul %306, %308, %cst_154 {dimension_numbers = #tpu.dot_dimension_numbers<[1], [0], [0], [1], [0, 0, 1, 1], [], []>} : vector<1x256xbf16>, vector<256x64xbf16>, vector<1x64xf32> -> vector<1x64xf32>
      %310 = arith.addf %303, %309 : vector<1x64xf32>
      %311 = arith.index_cast %arg20 : i32 to index
      %c0_155 = arith.constant 0 : index
      %312 = vector.load %arg19[%311, %c0_155] : memref<2x64xf32, #tpu.memory_space<vmem>>, vector<1x64xf32>
      tpu.vector_store %arg19[%311, %c0_155], %310 {strides = array<i32>} : memref<2x64xf32, #tpu.memory_space<vmem>>, vector<1x64xf32>,
    }
    %c2_i32_7 = arith.constant 2 : i32
    %c0_8 = arith.constant 0 : index
    %c0_9 = arith.constant 0 : index
    %c0_10 = arith.constant 0 : index
    %5 = vector.load %arg16[%c0_8, %c0_9, %c0_10] : memref<2x1x8xf32, #tpu.memory_space<vmem>>, vector<2x1x8xf32>
    %6 = vector.shape_cast %5 : vector<2x1x8xf32> to vector<2x8xf32>
    %c0_11 = arith.constant 0 : index
    %c0_12 = arith.constant 0 : index
    %7 = vector.load %arg19[%c0_11, %c0_12] : memref<2x64xf32, #tpu.memory_space<vmem>>, vector<2x64xf32>
    %c0_13 = arith.constant 0 : index
    %c0_14 = arith.constant 0 : index
    %8 = vector.load %arg8[%c0_13, %c0_14] : memref<8x64xf32, #tpu.memory_space<vmem>>, vector<8x64xf32>
    %cst = arith.constant dense<0.000000e+00> : vector<2x64xf32>
    %9 = tpu.matmul %6, %8, %cst {dimension_numbers = #tpu.dot_dimension_numbers<[1], [0], [0], [1], [0, 0, 1, 1], [], []>} : vector<2x8xf32>, vector<8x64xf32>, vector<2x64xf32> -> vector<2x64xf32>
    %10 = arith.addf %7, %9 : vector<2x64xf32>
    %c0_15 = arith.constant 0 : index
    %c0_16 = arith.constant 0 : index
    %11 = vector.load %arg9[%c0_15, %c0_16] : memref<1x64xf32, #tpu.memory_space<vmem>>, vector<1x64xf32>
    %12 = vector.broadcast %11 : vector<1x64xf32> to vector<2x64xf32>
    %13 = arith.addf %10, %12 : vector<2x64xf32>
    %cst_17 = arith.constant 0.000000e+00 : f32
    %14 = vector.broadcast %cst_17 : f32 to vector<2x64xf32>
    %15 = arith.maximumf %13, %14 : vector<2x64xf32>
    %c0_18 = arith.constant 0 : index
    %c0_19 = arith.constant 0 : index
    %16 = vector.load %arg10[%c0_18, %c0_19] : memref<64x64xf32, #tpu.memory_space<vmem>>, vector<64x64xf32>
    %cst_20 = arith.constant dense<0.000000e+00> : vector<2x64xf32>
    %17 = tpu.matmul %15, %16, %cst_20 {dimension_numbers = #tpu.dot_dimension_numbers<[1], [0], [0], [1], [0, 0, 1, 1], [], []>} : vector<2x64xf32>, vector<64x64xf32>, vector<2x64xf32> -> vector<2x64xf32>
    %c0_21 = arith.constant 0 : index
    %c0_22 = arith.constant 0 : index
    %c0_23 = arith.constant 0 : index
    %18 = vector.load %arg17[%c0_21, %c0_22, %c0_23] : memref<2x1x1xf32, #tpu.memory_space<vmem>>, vector<2x1x1xf32>
    %19 = vector.shape_cast %18 : vector<2x1x1xf32> to vector<2x1xf32>
    %c0_24 = arith.constant 0 : index
    %c0_25 = arith.constant 0 : index
    %20 = vector.load %arg11[%c0_24, %c0_25] : memref<1x64xf32, #tpu.memory_space<vmem>>, vector<1x64xf32>
    %21 = vector.broadcast %19 : vector<2x1xf32> to vector<2x64xf32>
    %22 = vector.broadcast %20 : vector<1x64xf32> to vector<2x64xf32>
    %23 = arith.mulf %21, %22 : vector<2x64xf32>
    %24 = arith.addf %17, %23 : vector<2x64xf32>
    %c0_26 = arith.constant 0 : index
    %c0_27 = arith.constant 0 : index
    %25 = vector.load %arg12[%c0_26, %c0_27] : memref<1x64xf32, #tpu.memory_space<vmem>>, vector<1x64xf32>
    %26 = vector.broadcast %25 : vector<1x64xf32> to vector<2x64xf32>
    %27 = arith.addf %24, %26 : vector<2x64xf32>
    %cst_28 = arith.constant 0.000000e+00 : f32
    %28 = vector.broadcast %cst_28 : f32 to vector<2x64xf32>
    %29 = arith.maximumf %27, %28 : vector<2x64xf32>
    %c0_29 = arith.constant 0 : index
    %c0_30 = arith.constant 0 : index
    %30 = vector.load %arg13[%c0_29, %c0_30] : memref<64x2xf32, #tpu.memory_space<vmem>>, vector<64x2xf32>
    %cst_31 = arith.constant dense<0.000000e+00> : vector<2x2xf32>
    %31 = tpu.matmul %29, %30, %cst_31 {dimension_numbers = #tpu.dot_dimension_numbers<[1], [0], [0], [1], [0, 0, 1, 1], [], []>} : vector<2x64xf32>, vector<64x2xf32>, vector<2x2xf32> -> vector<2x2xf32>
    %c0_32 = arith.constant 0 : index
    %c0_33 = arith.constant 0 : index
    %32 = vector.load %arg14[%c0_32, %c0_33] : memref<1x2xf32, #tpu.memory_space<vmem>>, vector<1x2xf32>
    %33 = vector.broadcast %32 : vector<1x2xf32> to vector<2x2xf32>
    %34 = arith.addf %31, %33 : vector<2x2xf32>
    %c0_34 = arith.constant 0 : index
    %c0_35 = arith.constant 0 : index
    %c0_36 = arith.constant 0 : index
    %35 = vector.load %arg18[%c0_34, %c0_35, %c0_36] : memref<2x1x2xf32, #tpu.memory_space<vmem>>, vector<2x1x2xf32>
    %36 = vector.shape_cast %35 : vector<2x1x2xf32> to vector<2x2xf32>
    %37 = vector.shape_cast %34 : vector<2x2xf32> to vector<2x1x2xf32>
    tpu.vector_store %arg18[%c0_34, %c0_35, %c0_36], %37 {strides = array<i32>} : memref<2x1x2xf32, #tpu.memory_space<vmem>>, vector<2x1x2xf32>,
    return
  }
  func.func @transform_0(%arg0: i32) -> (i32, i32) {
    %c0_i32 = arith.constant 0 : i32
    %c0_i32_0 = arith.constant 0 : i32
    %c0_i32_1 = arith.constant 0 : i32
    return %c0_i32, %c0_i32_0 : i32, i32
  }
  func.func @transform_1(%arg0: i32) -> (i32, i32) {
    %c0_i32 = arith.constant 0 : i32
    %c0_i32_0 = arith.constant 0 : i32
    %c0_i32_1 = arith.constant 0 : i32
    return %c0_i32, %c0_i32_0 : i32, i32
  }
  func.func @transform_2(%arg0: i32) -> (i32, i32) {
    %c0_i32 = arith.constant 0 : i32
    %c0_i32_0 = arith.constant 0 : i32
    %c0_i32_1 = arith.constant 0 : i32
    return %c0_i32, %c0_i32_0 : i32, i32
  }
  func.func @transform_3(%arg0: i32) -> (i32, i32) {
    %c0_i32 = arith.constant 0 : i32
    %c0_i32_0 = arith.constant 0 : i32
    %c0_i32_1 = arith.constant 0 : i32
    return %c0_i32, %c0_i32_0 : i32, i32
  }
  func.func @transform_4(%arg0: i32) -> (i32, i32) {
    %c0_i32 = arith.constant 0 : i32
    %c0_i32_0 = arith.constant 0 : i32
    %c0_i32_1 = arith.constant 0 : i32
    return %c0_i32, %c0_i32_0 : i32, i32
  }
  func.func @transform_5(%arg0: i32) -> (i32, i32) {
    %c0_i32 = arith.constant 0 : i32
    %c0_i32_0 = arith.constant 0 : i32
    %c0_i32_1 = arith.constant 0 : i32
    return %c0_i32, %c0_i32_0 : i32, i32
  }
  func.func @transform_6(%arg0: i32) -> (i32, i32, i32) {
    %c0_i32 = arith.constant 0 : i32
    %c0_i32_0 = arith.constant 0 : i32
    %c0_i32_1 = arith.constant 0 : i32
    %c0_i32_2 = arith.constant 0 : i32
    return %c0_i32, %c0_i32_0, %c0_i32_1 : i32, i32, i32
  }
  func.func @transform_7(%arg0: i32) -> (i32, i32) {
    %c0_i32 = arith.constant 0 : i32
    %c0_i32_0 = arith.constant 0 : i32
    %c0_i32_1 = arith.constant 0 : i32
    return %c0_i32, %c0_i32_0 : i32, i32
  }
  func.func @transform_8(%arg0: i32) -> (i32, i32) {
    %c0_i32 = arith.constant 0 : i32
    %c0_i32_0 = arith.constant 0 : i32
    %c0_i32_1 = arith.constant 0 : i32
    return %c0_i32, %c0_i32_0 : i32, i32
  }
  func.func @transform_9(%arg0: i32) -> (i32, i32) {
    %c0_i32 = arith.constant 0 : i32
    %c0_i32_0 = arith.constant 0 : i32
    %c0_i32_1 = arith.constant 0 : i32
    return %c0_i32, %c0_i32_0 : i32, i32
  }
  func.func @transform_10(%arg0: i32) -> (i32, i32) {
    %c0_i32 = arith.constant 0 : i32
    %c0_i32_0 = arith.constant 0 : i32
    %c0_i32_1 = arith.constant 0 : i32
    return %c0_i32, %c0_i32_0 : i32, i32
  }
  func.func @transform_11(%arg0: i32) -> (i32, i32) {
    %c0_i32 = arith.constant 0 : i32
    %c0_i32_0 = arith.constant 0 : i32
    %c0_i32_1 = arith.constant 0 : i32
    return %c0_i32, %c0_i32_0 : i32, i32
  }
  func.func @transform_12(%arg0: i32) -> (i32, i32) {
    %c0_i32 = arith.constant 0 : i32
    %c0_i32_0 = arith.constant 0 : i32
    %c0_i32_1 = arith.constant 0 : i32
    return %c0_i32, %c0_i32_0 : i32, i32
  }
  func.func @transform_13(%arg0: i32) -> (i32, i32) {
    %c0_i32 = arith.constant 0 : i32
    %c0_i32_0 = arith.constant 0 : i32
    %c0_i32_1 = arith.constant 0 : i32
    return %c0_i32, %c0_i32_0 : i32, i32
  }
  func.func @transform_14(%arg0: i32) -> (i32, i32, i32) {
    %c0_i32 = arith.constant 0 : i32
    %c0_i32_0 = arith.constant 0 : i32
    %c0_i32_1 = arith.constant 0 : i32
    return %arg0, %c0_i32, %c0_i32_0 : i32, i32, i32
  }
  func.func @transform_15(%arg0: i32) -> (i32, i32, i32) {
    %c0_i32 = arith.constant 0 : i32
    %c0_i32_0 = arith.constant 0 : i32
    %c0_i32_1 = arith.constant 0 : i32
    return %arg0, %c0_i32, %c0_i32_0 : i32, i32, i32
  }
  func.func @transform_16(%arg0: i32) -> (i32, i32, i32) {
    %c0_i32 = arith.constant 0 : i32
    %c0_i32_0 = arith.constant 0 : i32
    %c0_i32_1 = arith.constant 0 : i32
    return %arg0, %c0_i32, %c0_i32_0 : i32, i32, i32
  }
  func.func @transform_17(%arg0: i32) -> (i32, i32, i32) {
    %c0_i32 = arith.constant 0 : i32
    %c0_i32_0 = arith.constant 0 : i32
    %c0_i32_1 = arith.constant 0 : i32
    return %arg0, %c0_i32, %c0_i32_0 : i32, i32, i32
  }
}

</mosaic_0001>

<llo_original>
// kernel: squeeze.5
$region0: #{squeeze.5}
  %s0 = inlined_call_operand.vmem [shape: f32[7,7], index: 0, kind: input, shape index: {}]
  %s1 = inlined_call_operand.vmem [shape: f32[49], index: 1, kind: output, shape index: {}]
  $region1: #{squeeze.5} parent=0
    #allocation0 [shape = 'u8[4096]{0}', space=vmem, size = 0x1000, scoped, tag = 'scoped mem for output reshape']
    %v2 = vld [vmem:[%s0] sm:$0x1]
    %vm3 = vcmask 56320
    %4 = vst.msk [vmem:[#allocation0] sm:$0x1] %vm3, %v2
    %s5 = scalar_lea.vmem %s0, 6
    %v6 = vld [vmem:[%s5] sm:$0x1]
    %7 = vrot.lane.b32.xlu0 %v6, 42
    %v8 = vpop.permute.xlu0 %7
    %vm9 = vcmask 400720
    %10 = vst.msk [vmem:[#allocation0] sm:$0x1] %vm9, %v8
    %s11 = scalar_lea.vmem %s0, 5
    %v12 = vld [vmem:[%s11] sm:$0x1]
    %13 = vrot.lane.b32.xlu0 %v12, 35
    %v14 = vpop.permute.xlu0 %13
    %vm15 = vcmask 343320
    %16 = vst.msk [vmem:[#allocation0] sm:$0x1] %vm15, %v14
    %s17 = scalar_lea.vmem %s0, 4
    %v18 = vld [vmem:[%s17] sm:$0x1]
    %19 = vrot.lane.b32.xlu0 %v18, 28
    %v20 = vpop.permute.xlu0 %19
    %vm21 = vcmask 285920
    %22 = vst.msk [vmem:[#allocation0] sm:$0x1] %vm21, %v20
    %s23 = scalar_lea.vmem %s0, 3
    %v24 = vld [vmem:[%s23] sm:$0x1]
    %25 = vrot.lane.b32.xlu0 %v24, 21
    %v26 = vpop.permute.xlu0 %25
    %vm27 = vcmask 228520
    %28 = vst.msk [vmem:[#allocation0] sm:$0x1] %vm27, %v26
    %s29 = scalar_lea.vmem %s0, 2
    %v30 = vld [vmem:[%s29] sm:$0x1]
    %31 = vrot.lane.b32.xlu0 %v30, 14
    %v32 = vpop.permute.xlu0 %31
    %vm33 = vcmask 171120
    %34 = vst.msk [vmem:[#allocation0] sm:$0x1] %vm33, %v32
    %s35 = scalar_lea.vmem %s0, 1
    %v36 = vld [vmem:[%s35] sm:$0x1]
    %37 = vrot.lane.b32.xlu0 %v36, 7
    %v38 = vpop.permute.xlu0 %37
    %vm39 = vcmask 113720
    %40 = vst.msk [vmem:[#allocation0] sm:$0x1] %vm39, %v38
    %s42 = ssub.s32 2, 1
    %v43 = vld [vmem:[#allocation0] sm:%s42]
    %s45 = ssub.s32 2, 1
    %46 = vst [vmem:[%s1] sm:%s45] %v43

// kernel: critic_forward.1
$region0: #{critic_forward.1}
  #allocation0 [shape = 'u32[]', space=smem, size = 0x4, offset = 0x4, fixed_abs, tag = 'smem constant byte address 0x4 - core index']
  #allocation1 [shape = 'u32[72,128]{1,0:T(1,128)}', space=vmem, size = 0x9000, scoped, tag = 'internal scratch']
  #allocation2 [shape = 'f32[2,64]{1,0:T(2,128)}', space=vmem, size = 0x400, scoped, tag = 'scratch operand']
  #allocation3 [shape = 'f32[1,1]{1,0:T(1,128)S(1)}', space=vmem, size = 0x200, scoped, tag = 'scoped memory for critic_forward.1']
  %s0 = inlined_call_operand.vmem [shape: f32[256,256], index: 0, kind: input, shape index: {}]
  %s1 = inlined_call_operand.vmem [shape: f32[256,256], index: 1, kind: input, shape index: {}]
  %s2 = inlined_call_operand.vmem [shape: f32[32,1], index: 2, kind: input, shape index: {}]
  %s3 = inlined_call_operand.<no memory space> [shape: f32[1,1], index: 3, kind: input, shape index: {}]
  %s4 = inlined_call_operand.vmem [shape: f32[32,1], index: 4, kind: input, shape index: {}]
  %s5 = inlined_call_operand.vmem [shape: f32[32,1], index: 5, kind: input, shape index: {}]
  %s6 = inlined_call_operand.vmem [shape: bf16[32,256,64], index: 6, kind: input, shape index: {}]
  %s7 = inlined_call_operand.vmem [shape: f32[8,64], index: 7, kind: input, shape index: {}]
  %s8 = inlined_call_operand.vmem [shape: f32[1,64], index: 8, kind: input, shape index: {}]
  %s9 = inlined_call_operand.vmem [shape: f32[64,64], index: 9, kind: input, shape index: {}]
  %s10 = inlined_call_operand.vmem [shape: f32[1,64], index: 10, kind: input, shape index: {}]
  %s11 = inlined_call_operand.vmem [shape: f32[1,64], index: 11, kind: input, shape index: {}]
  %s12 = inlined_call_operand.vmem [shape: f32[64,2], index: 12, kind: input, shape index: {}]
  %s13 = inlined_call_operand.vmem [shape: f32[1,2], index: 13, kind: input, shape index: {}]
  %s14 = inlined_call_operand.vmem [shape: f32[2,32,256], index: 14, kind: input, shape index: {}]
  %s15 = inlined_call_operand.vmem [shape: f32[2,1,8], index: 15, kind: input, shape index: {}]
  %s16 = inlined_call_operand.vmem [shape: f32[2,1,1], index: 16, kind: input, shape index: {}]
  %s17 = inlined_call_operand.vmem [shape: f32[2,1,2], index: 17, kind: output, shape index: {}]
  %s18 = sld [smem:[#allocation0]]
  $region85: #{critic_forward.1} parent=0
    _
  %s20 = ssub.s32 1, %s18
  %s21 = scalar_select 0, %s20, %s18
  %v22 = vstv %s3
  %23 = vst [vmem:[#allocation3] sm:$0x1] %v22
  // Predicated region
  $region2: #{critic_forward.1} parent=0 // pred_check
    _
  $region3: #{critic_forward.1} parent=0 // pred_check_branch
    %25 = sbr.rel (0) target = $region5
  $region4: #{critic_forward.1} parent=0 // pred_region
    _
  $region5: #{critic_forward.1} parent=0 // pred_fallthru
    _
  // Predicated region
  $region6: #{critic_forward.1} parent=0 // pred_check
    _
  $region7: #{critic_forward.1} parent=0 // pred_check_branch
    %27 = sbr.rel (0) target = $region9
  $region8: #{critic_forward.1} parent=0 // pred_region
    _
  $region9: #{critic_forward.1} parent=0 // pred_fallthru
    _
  // Predicated region
  $region10: #{critic_forward.1} parent=0 // pred_check
    _
  $region11: #{critic_forward.1} parent=0 // pred_check_branch
    %29 = sbr.rel (0) target = $region13
  $region12: #{critic_forward.1} parent=0 // pred_region
    _
  $region13: #{critic_forward.1} parent=0 // pred_fallthru
    _
  // Predicated region
  $region14: #{critic_forward.1} parent=0 // pred_check
    _
  $region15: #{critic_forward.1} parent=0 // pred_check_branch
    %31 = sbr.rel (0) target = $region17
  $region16: #{critic_forward.1} parent=0 // pred_region
    _
  $region17: #{critic_forward.1} parent=0 // pred_fallthru
    _
  // Predicated region
  $region18: #{critic_forward.1} parent=0 // pred_check
    _
  $region19: #{critic_forward.1} parent=0 // pred_check_branch
    %33 = sbr.rel (0) target = $region21
  $region20: #{critic_forward.1} parent=0 // pred_region
    _
  $region21: #{critic_forward.1} parent=0 // pred_fallthru
    _
  // Predicated region
  $region22: #{critic_forward.1} parent=0 // pred_check
    _
  $region23: #{critic_forward.1} parent=0 // pred_check_branch
    %35 = sbr.rel (0) target = $region25
  $region24: #{critic_forward.1} parent=0 // pred_region
    _
  $region25: #{critic_forward.1} parent=0 // pred_fallthru
    _
  // Predicated region
  $region26: #{critic_forward.1} parent=0 // pred_check
    _
  $region27: #{critic_forward.1} parent=0 // pred_check_branch
    %37 = sbr.rel (0) target = $region29
  $region28: #{critic_forward.1} parent=0 // pred_region
    _
  $region29: #{critic_forward.1} parent=0 // pred_fallthru
    _
  // Predicated region
  $region30: #{critic_forward.1} parent=0 // pred_check
    _
  $region31: #{critic_forward.1} parent=0 // pred_check_branch
    %39 = sbr.rel (0) target = $region33
  $region32: #{critic_forward.1} parent=0 // pred_region
    _
  $region33: #{critic_forward.1} parent=0 // pred_fallthru
    _
  // Predicated region
  $region34: #{critic_forward.1} parent=0 // pred_check
    _
  $region35: #{critic_forward.1} parent=0 // pred_check_branch
    %41 = sbr.rel (0) target = $region37
  $region36: #{critic_forward.1} parent=0 // pred_region
    _
  $region37: #{critic_forward.1} parent=0 // pred_fallthru
    _
  // Predicated region
  $region38: #{critic_forward.1} parent=0 // pred_check
    _
  $region39: #{critic_forward.1} parent=0 // pred_check_branch
    %43 = sbr.rel (0) target = $region41
  $region40: #{critic_forward.1} parent=0 // pred_region
    _
  $region41: #{critic_forward.1} parent=0 // pred_fallthru
    _
  // Predicated region
  $region42: #{critic_forward.1} parent=0 // pred_check
    _
  $region43: #{critic_forward.1} parent=0 // pred_check_branch
    %45 = sbr.rel (0) target = $region45
  $region44: #{critic_forward.1} parent=0 // pred_region
    _
  $region45: #{critic_forward.1} parent=0 // pred_fallthru
    _
  // Predicated region
  $region46: #{critic_forward.1} parent=0 // pred_check
    _
  $region47: #{critic_forward.1} parent=0 // pred_check_branch
    %47 = sbr.rel (0) target = $region49
  $region48: #{critic_forward.1} parent=0 // pred_region
    _
  $region49: #{critic_forward.1} parent=0 // pred_fallthru
    _
  // Predicated region
  $region50: #{critic_forward.1} parent=0 // pred_check
    _
  $region51: #{critic_forward.1} parent=0 // pred_check_branch
    %49 = sbr.rel (0) target = $region53
  $region52: #{critic_forward.1} parent=0 // pred_region
    _
  $region53: #{critic_forward.1} parent=0 // pred_fallthru
    _
  // Predicated region
  $region54: #{critic_forward.1} parent=0 // pred_check
    _
  $region55: #{critic_forward.1} parent=0 // pred_check_branch
    %51 = sbr.rel (0) target = $region57
  $region56: #{critic_forward.1} parent=0 // pred_region
    _
  $region57: #{critic_forward.1} parent=0 // pred_fallthru
    _
  // Predicated region
  $region58: #{critic_forward.1} parent=0 // pred_check
    _
  $region59: #{critic_forward.1} parent=0 // pred_check_branch
    %53 = sbr.rel (0) target = $region61
  $region60: #{critic_forward.1} parent=0 // pred_region
    _
  $region61: #{critic_forward.1} parent=0 // pred_fallthru
    _
  // Predicated region
  $region62: #{critic_forward.1} parent=0 // pred_check
    _
  $region63: #{critic_forward.1} parent=0 // pred_check_branch
    %55 = sbr.rel (0) target = $region65
  $region64: #{critic_forward.1} parent=0 // pred_region
    _
  $region65: #{critic_forward.1} parent=0 // pred_fallthru
    _
  // Predicated region
  $region66: #{critic_forward.1} parent=0 // pred_check
    _
  $region67: #{critic_forward.1} parent=0 // pred_check_branch
    %57 = sbr.rel (0) target = $region69
  $region68: #{critic_forward.1} parent=0 // pred_region
    _
  $region69: #{critic_forward.1} parent=0 // pred_fallthru
    _
  %v58 = vld [vmem:[%s2] sm:$0xff]
  %v59 = vld [vmem:[%s2 + $0x8] sm:$0xff]
  %v60 = vld [vmem:[%s2 + $0x10] sm:$0xff]
  %v61 = vld [vmem:[%s2 + $0x18] sm:$0xff]
  %v62 = vld [vmem:[#allocation3] sm:$0x1]
  %v63 = vld [vmem:[%s4] sm:$0xff]
  %v64 = vld [vmem:[%s4 + $0x8] sm:$0xff]
  %v65 = vld [vmem:[%s4 + $0x10] sm:$0xff]
  %v66 = vld [vmem:[%s4 + $0x18] sm:$0xff]
  %v67 = vld [vmem:[%s5] sm:$0xff]
  %v68 = vld [vmem:[%s5 + $0x8] sm:$0xff]
  %v69 = vld [vmem:[%s5 + $0x10] sm:$0xff]
  %v70 = vld [vmem:[%s5 + $0x18] sm:$0xff]
  loop: start=0, step=1, limit=2
  $region70: #{critic_forward.1} parent=0 // loop_pre_header
    _
  $region71: #{critic_forward.1} parent=0 // loop_header
    %s72 = sphi 0, %s76
    %p73 = scmp.ge.s32.totalorder %s72, 2
  $region72: #{critic_forward.1} parent=0 // loop_header_branch
    %75 = sbr.rel (%p73) target = $region76
  $region73: #{critic_forward.1} parent=0 // loop_body
    %s77 = smul.u32 %s72, 8
    %s78 = smul.addr %s77, 8
    %s79 = scalar_lea.vmem %s14, %s78
    %v80 = vld [vmem:[%s79] sm:$0xff]
    %v81 = vld [vmem:[%s79 + $0x8] sm:$0xff]
    %v82 = vld [vmem:[%s79 + $0x10] sm:$0xff]
    %v83 = vld [vmem:[%s79 + $0x18] sm:$0xff]
    %v84 = vld [vmem:[%s79 + $0x20] sm:$0xff]
    %v85 = vld [vmem:[%s79 + $0x28] sm:$0xff]
    %v86 = vld [vmem:[%s79 + $0x30] sm:$0xff]
    %v87 = vld [vmem:[%s79 + $0x38] sm:$0xff]
    %v88 = vmax.f32 %v80, %v81
    %89 = vmax.xlane.f32.xlu0 %v88
    %v90 = vpop.xlane.xlu0 %89
    %v91 = vmax.f32 %v82, %v83
    %92 = vmax.xlane.f32.xlu0 %v91
    %v93 = vpop.xlane.xlu0 %92
    %v94 = vmax.f32 %v84, %v85
    %95 = vmax.xlane.f32.xlu0 %v94
    %v96 = vpop.xlane.xlu0 %95
    %v97 = vmax.f32 %v86, %v87
    %98 = vmax.xlane.f32.xlu0 %v97
    %v99 = vpop.xlane.xlu0 %98
    %v100 = vadd.f32 %v80, %v81
    %101 = vadd.xlane.f32.xlu0 %v100
    %v102 = vpop.xlane.xlu0 %101
    %v103 = vadd.f32 %v82, %v83
    %104 = vadd.xlane.f32.xlu0 %v103
    %v105 = vpop.xlane.xlu0 %104
    %v106 = vadd.f32 %v84, %v85
    %107 = vadd.xlane.f32.xlu0 %v106
    %v108 = vpop.xlane.xlu0 %107
    %v109 = vadd.f32 %v86, %v87
    %110 = vadd.xlane.f32.xlu0 %v109
    %v111 = vpop.xlane.xlu0 %110
    %v112 = vmul.f32 %v102, 0.00390625
    %v113 = vmul.f32 %v105, 0.00390625
    %v114 = vmul.f32 %v108, 0.00390625
    %v115 = vmul.f32 %v111, 0.00390625
    %v116 = vmul.f32 %v90, %v58
    %v117 = vmul.f32 %v93, %v59
    %v118 = vmul.f32 %v96, %v60
    %v119 = vmul.f32 %v99, %v61
    %vm120 = vcmask 7168
    %v121 = vsel %vm120, %v116, 0.0
    %v122 = vsel %vm120, %v117, 0.0
    %v123 = vadd.f32 %v121, %v122
    %v124 = vsel %vm120, %v118, 0.0
    %v125 = vadd.f32 %v123, %v124
    %v126 = vsel %vm120, %v119, 0.0
    %v127 = vadd.f32 %v125, %v126
    %v128 = vrot.slane %v127, 4
    %v129 = vadd.f32 %v127, %v128
    %v130 = vrot.slane %v129, 2
    %v131 = vadd.f32 %v129, %v130
    %v132 = vrot.slane %v131, 1
    %v133 = vadd.f32 %v131, %v132
    %v134 = vadd.f32 %v133, %v62
    %v135 = vmax.f32 %v134, 0.0
    %v136 = vperm.slane %v135, 0
    %v137 = vmul.f32 %v136, %v63
    %v138 = vmul.f32 %v136, %v64
    %v139 = vmul.f32 %v136, %v65
    %v140 = vmul.f32 %v136, %v66
    %v141 = vadd.f32 %v137, 0.0
    %v142 = vadd.f32 %v138, 0.0
    %v143 = vadd.f32 %v139, 0.0
    %v144 = vadd.f32 %v140, 0.0
    %v145 = vadd.f32 %v141, %v67
    %v146 = vadd.f32 %v142, %v68
    %v147 = vadd.f32 %v143, %v69
    %v148 = vadd.f32 %v144, %v70
    %v149 = vmul.f32 %v112, %v58
    %v150 = vmul.f32 %v113, %v59
    %v151 = vmul.f32 %v114, %v60
    %v152 = vmul.f32 %v115, %v61
    %v153 = vsel %vm120, %v149, 0.0
    %v154 = vsel %vm120, %v150, 0.0
    %v155 = vadd.f32 %v153, %v154
    %v156 = vsel %vm120, %v151, 0.0
    %v157 = vadd.f32 %v155, %v156
    %v158 = vsel %vm120, %v152, 0.0
    %v159 = vadd.f32 %v157, %v158
    %v160 = vrot.slane %v159, 4
    %v161 = vadd.f32 %v159, %v160
    %v162 = vrot.slane %v161, 2
    %v163 = vadd.f32 %v161, %v162
    %v164 = vrot.slane %v163, 1
    %v165 = vadd.f32 %v163, %v164
    %v166 = vadd.f32 %v165, %v62
    %v167 = vmax.f32 %v166, 0.0
    %v168 = vperm.slane %v167, 0
    %v169 = vmul.f32 %v168, %v63
    %v170 = vmul.f32 %v168, %v64
    %v171 = vmul.f32 %v168, %v65
    %v172 = vmul.f32 %v168, %v66
    %v173 = vadd.f32 %v169, 0.0
    %v174 = vadd.f32 %v170, 0.0
    %v175 = vadd.f32 %v171, 0.0
    %v176 = vadd.f32 %v172, 0.0
    %v177 = vadd.f32 %v173, %v67
    %v178 = vadd.f32 %v174, %v68
    %v179 = vadd.f32 %v175, %v69
    %v180 = vadd.f32 %v176, %v70
    %v181 = vadd.f32 %v145, %v177
    %v182 = vadd.f32 %v146, %v178
    %v183 = vadd.f32 %v147, %v179
    %v184 = vadd.f32 %v148, %v180
    %v185 = vxor.u32 %v181, 2147483648
    %v186 = vxor.u32 %v182, 2147483648
    %v187 = vxor.u32 %v183, 2147483648
    %v188 = vxor.u32 %v184, 2147483648
    %v189 = vmul.f32 %v185, 1.442695
    %v190 = vpow.pop %v189
    %v191 = vmul.f32 %v186, 1.442695
    %v192 = vpow.pop %v191
    %v193 = vmul.f32 %v187, 1.442695
    %v194 = vpow.pop %v193
    %v195 = vmul.f32 %v188, 1.442695
    %v196 = vpow.pop %v195
    %v197 = vadd.f32 %v190, 1.0
    %v198 = vadd.f32 %v192, 1.0
    %v199 = vadd.f32 %v194, 1.0
    %v200 = vadd.f32 %v196, 1.0
    %v201 = vrcp.pop %v197
    %v202 = vmul.f32 %v197, %v201
    %v203 = vsub.f32 1.0, %v202
    %v204 = vmul.f32 %v201, %v203
    %v205 = vadd.f32 %v201, %v204
    %vm206 = vweird.f32 %v197
    %vm207 = vweird.f32 %v201
    %vm208 = vmor %vm206, %vm207
    %v209 = vsel %vm208, %v201, %v205
    %v210 = vand.u32 2147483647, %v197
    %vm211 = vcmp.eq.f32.partialorder %v210, 8.507059e+37
    %v212 = vand.u32 %v197, 2147483648
    %v213 = vor.u32 1.1754944e-38, %v212
    %v214 = vsel %vm211, %v213, %v209
    %v215 = vmul.f32 1.0, %v214
    %v216 = vrcp.pop %v198
    %v217 = vmul.f32 %v198, %v216
    %v218 = vsub.f32 1.0, %v217
    %v219 = vmul.f32 %v216, %v218
    %v220 = vadd.f32 %v216, %v219
    %vm221 = vweird.f32 %v198
    %vm222 = vweird.f32 %v216
    %vm223 = vmor %vm221, %vm222
    %v224 = vsel %vm223, %v216, %v220
    %v225 = vand.u32 2147483647, %v198
    %vm226 = vcmp.eq.f32.partialorder %v225, 8.507059e+37
    %v227 = vand.u32 %v198, 2147483648
    %v228 = vor.u32 1.1754944e-38, %v227
    %v229 = vsel %vm226, %v228, %v224
    %v230 = vmul.f32 1.0, %v229
    %v231 = vrcp.pop %v199
    %v232 = vmul.f32 %v199, %v231
    %v233 = vsub.f32 1.0, %v232
    %v234 = vmul.f32 %v231, %v233
    %v235 = vadd.f32 %v231, %v234
    %vm236 = vweird.f32 %v199
    %vm237 = vweird.f32 %v231
    %vm238 = vmor %vm236, %vm237
    %v239 = vsel %vm238, %v231, %v235
    %v240 = vand.u32 2147483647, %v199
    %vm241 = vcmp.eq.f32.partialorder %v240, 8.507059e+37
    %v242 = vand.u32 %v199, 2147483648
    %v243 = vor.u32 1.1754944e-38, %v242
    %v244 = vsel %vm241, %v243, %v239
    %v245 = vmul.f32 1.0, %v244
    %v246 = vrcp.pop %v200
    %v247 = vmul.f32 %v200, %v246
    %v248 = vsub.f32 1.0, %v247
    %v249 = vmul.f32 %v246, %v248
    %v250 = vadd.f32 %v246, %v249
    %vm251 = vweird.f32 %v200
    %vm252 = vweird.f32 %v246
    %vm253 = vmor %vm251, %vm252
    %v254 = vsel %vm253, %v246, %v250
    %v255 = vand.u32 2147483647, %v200
    %vm256 = vcmp.eq.f32.partialorder %v255, 8.507059e+37
    %v257 = vand.u32 %v200, 2147483648
    %v258 = vor.u32 1.1754944e-38, %v257
    %v259 = vsel %vm256, %v258, %v254
    %v260 = vmul.f32 1.0, %v259
    %262 = vset.pattern.permute.xlu0 0
    %263 = vperm.xlu0 %262, %v215
    %v264 = vpop.permute.xlu0 %263
    %267 = vset.pattern.permute.xlu0 0
    %268 = vperm.xlu0 %267, %v230
    %v269 = vpop.permute.xlu0 %268
    %272 = vset.pattern.permute.xlu0 0
    %273 = vperm.xlu0 %272, %v245
    %v274 = vpop.permute.xlu0 %273
    %277 = vset.pattern.permute.xlu0 0
    %278 = vperm.xlu0 %277, %v260
    %v279 = vpop.permute.xlu0 %278
    %v281 = vmul.f32 %v264, %v80
    %v282 = vmul.f32 %v264, %v81
    %v283 = vmul.f32 %v269, %v82
    %v284 = vmul.f32 %v269, %v83
    %v285 = vmul.f32 %v274, %v84
    %v286 = vmul.f32 %v274, %v85
    %v287 = vmul.f32 %v279, %v86
    %v288 = vmul.f32 %v279, %v87
    %v289 = vmax.f32 %v281, %v285
    %v290 = vmax.f32 %v283, %v287
    %v291 = vmax.f32 %v289, %v290
    %v292 = vrot.slane %v291, 4
    %v293 = vmax.f32 %v291, %v292
    %v294 = vrot.slane %v293, 2
    %v295 = vmax.f32 %v293, %v294
    %v296 = vrot.slane %v295, 1
    %v297 = vmax.f32 %v295, %v296
    %v298 = vmax.f32 %v282, %v286
    %v299 = vmax.f32 %v284, %v288
    %v300 = vmax.f32 %v298, %v299
    %v301 = vrot.slane %v300, 4
    %v302 = vmax.f32 %v300, %v301
    %v303 = vrot.slane %v302, 2
    %v304 = vmax.f32 %v302, %v303
    %v305 = vrot.slane %v304, 1
    %v306 = vmax.f32 %v304, %v305
    %v307 = vadd.f32 %v281, %v283
    %v308 = vadd.f32 %v307, %v285
    %v309 = vadd.f32 %v308, %v287
    %v310 = vrot.slane %v309, 4
    %v311 = vadd.f32 %v309, %v310
    %v312 = vrot.slane %v311, 2
    %v313 = vadd.f32 %v311, %v312
    %v314 = vrot.slane %v313, 1
    %v315 = vadd.f32 %v313, %v314
    %v316 = vadd.f32 %v282, %v284
    %v317 = vadd.f32 %v316, %v286
    %v318 = vadd.f32 %v317, %v288
    %v319 = vrot.slane %v318, 4
    %v320 = vadd.f32 %v318, %v319
    %v321 = vrot.slane %v320, 2
    %v322 = vadd.f32 %v320, %v321
    %v323 = vrot.slane %v322, 1
    %v324 = vadd.f32 %v322, %v323
    %v325 = vld [vmem:[%s0] sm:$0xff]
    %v326 = vld [vmem:[%s0 + $0x8] sm:$0xff]
    %v327 = vld [vmem:[%s0 + $0x10] sm:$0xff]
    %v328 = vld [vmem:[%s0 + $0x18] sm:$0xff]
    %v329 = vld [vmem:[%s0 + $0x20] sm:$0xff]
    %v330 = vld [vmem:[%s0 + $0x28] sm:$0xff]
    %v331 = vld [vmem:[%s0 + $0x30] sm:$0xff]
    %v332 = vld [vmem:[%s0 + $0x38] sm:$0xff]
    %v333 = vld [vmem:[%s0 + $0x40] sm:$0xff]
    %v334 = vld [vmem:[%s0 + $0x48] sm:$0xff]
    %v335 = vld [vmem:[%s0 + $0x50] sm:$0xff]
    %v336 = vld [vmem:[%s0 + $0x58] sm:$0xff]
    %v337 = vld [vmem:[%s0 + $0x60] sm:$0xff]
    %v338 = vld [vmem:[%s0 + $0x68] sm:$0xff]
    %v339 = vld [vmem:[%s0 + $0x70] sm:$0xff]
    %v340 = vld [vmem:[%s0 + $0x78] sm:$0xff]
    %v341 = vld [vmem:[%s0 + $0x80] sm:$0xff]
    %v342 = vld [vmem:[%s0 + $0x88] sm:$0xff]
    %v343 = vld [vmem:[%s0 + $0x90] sm:$0xff]
    %v344 = vld [vmem:[%s0 + $0x98] sm:$0xff]
    %v345 = vld [vmem:[%s0 + $0xa0] sm:$0xff]
    %v346 = vld [vmem:[%s0 + $0xa8] sm:$0xff]
    %v347 = vld [vmem:[%s0 + $0xb0] sm:$0xff]
    %v348 = vld [vmem:[%s0 + $0xb8] sm:$0xff]
    %v349 = vld [vmem:[%s0 + $0xc0] sm:$0xff]
    %v350 = vld [vmem:[%s0 + $0xc8] sm:$0xff]
    %v351 = vld [vmem:[%s0 + $0xd0] sm:$0xff]
    %v352 = vld [vmem:[%s0 + $0xd8] sm:$0xff]
    %v353 = vld [vmem:[%s0 + $0xe0] sm:$0xff]
    %v354 = vld [vmem:[%s0 + $0xe8] sm:$0xff]
    %v355 = vld [vmem:[%s0 + $0xf0] sm:$0xff]
    %v356 = vld [vmem:[%s0 + $0xf8] sm:$0xff]
    %v357 = vld [vmem:[%s0 + $0x100] sm:$0xff]
    %v358 = vld [vmem:[%s0 + $0x108] sm:$0xff]
    %v359 = vld [vmem:[%s0 + $0x110] sm:$0xff]
    %v360 = vld [vmem:[%s0 + $0x118] sm:$0xff]
    %v361 = vld [vmem:[%s0 + $0x120] sm:$0xff]
    %v362 = vld [vmem:[%s0 + $0x128] sm:$0xff]
    %v363 = vld [vmem:[%s0 + $0x130] sm:$0xff]
    %v364 = vld [vmem:[%s0 + $0x138] sm:$0xff]
    %v365 = vld [vmem:[%s0 + $0x140] sm:$0xff]
    %v366 = vld [vmem:[%s0 + $0x148] sm:$0xff]
    %v367 = vld [vmem:[%s0 + $0x150] sm:$0xff]
    %v368 = vld [vmem:[%s0 + $0x158] sm:$0xff]
    %v369 = vld [vmem:[%s0 + $0x160] sm:$0xff]
    %v370 = vld [vmem:[%s0 + $0x168] sm:$0xff]
    %v371 = vld [vmem:[%s0 + $0x170] sm:$0xff]
    %v372 = vld [vmem:[%s0 + $0x178] sm:$0xff]
    %v373 = vld [vmem:[%s0 + $0x180] sm:$0xff]
    %v374 = vld [vmem:[%s0 + $0x188] sm:$0xff]
    %v375 = vld [vmem:[%s0 + $0x190] sm:$0xff]
    %v376 = vld [vmem:[%s0 + $0x198] sm:$0xff]
    %v377 = vld [vmem:[%s0 + $0x1a0] sm:$0xff]
    %v378 = vld [vmem:[%s0 + $0x1a8] sm:$0xff]
    %v379 = vld [vmem:[%s0 + $0x1b0] sm:$0xff]
    %v380 = vld [vmem:[%s0 + $0x1b8] sm:$0xff]
    %v381 = vld [vmem:[%s0 + $0x1c0] sm:$0xff]
    %v382 = vld [vmem:[%s0 + $0x1c8] sm:$0xff]
    %v383 = vld [vmem:[%s0 + $0x1d0] sm:$0xff]
    %v384 = vld [vmem:[%s0 + $0x1d8] sm:$0xff]
    %v385 = vld [vmem:[%s0 + $0x1e0] sm:$0xff]
    %v386 = vld [vmem:[%s0 + $0x1e8] sm:$0xff]
    %v387 = vld [vmem:[%s0 + $0x1f0] sm:$0xff]
    %v388 = vld [vmem:[%s0 + $0x1f8] sm:$0xff]
    %v389 = vld [vmem:[%s1] sm:$0xff]
    %v390 = vld [vmem:[%s1 + $0x8] sm:$0xff]
    %v391 = vld [vmem:[%s1 + $0x10] sm:$0xff]
    %v392 = vld [vmem:[%s1 + $0x18] sm:$0xff]
    %v393 = vld [vmem:[%s1 + $0x20] sm:$0xff]
    %v394 = vld [vmem:[%s1 + $0x28] sm:$0xff]
    %v395 = vld [vmem:[%s1 + $0x30] sm:$0xff]
    %v396 = vld [vmem:[%s1 + $0x38] sm:$0xff]
    %v397 = vld [vmem:[%s1 + $0x40] sm:$0xff]
    %v398 = vld [vmem:[%s1 + $0x48] sm:$0xff]
    %v399 = vld [vmem:[%s1 + $0x50] sm:$0xff]
    %v400 = vld [vmem:[%s1 + $0x58] sm:$0xff]
    %v401 = vld [vmem:[%s1 + $0x60] sm:$0xff]
    %v402 = vld [vmem:[%s1 + $0x68] sm:$0xff]
    %v403 = vld [vmem:[%s1 + $0x70] sm:$0xff]
    %v404 = vld [vmem:[%s1 + $0x78] sm:$0xff]
    %v405 = vld [vmem:[%s1 + $0x80] sm:$0xff]
    %v406 = vld [vmem:[%s1 + $0x88] sm:$0xff]
    %v407 = vld [vmem:[%s1 + $0x90] sm:$0xff]
    %v408 = vld [vmem:[%s1 + $0x98] sm:$0xff]
    %v409 = vld [vmem:[%s1 + $0xa0] sm:$0xff]
    %v410 = vld [vmem:[%s1 + $0xa8] sm:$0xff]
    %v411 = vld [vmem:[%s1 + $0xb0] sm:$0xff]
    %v412 = vld [vmem:[%s1 + $0xb8] sm:$0xff]
    %v413 = vld [vmem:[%s1 + $0xc0] sm:$0xff]
    %v414 = vld [vmem:[%s1 + $0xc8] sm:$0xff]
    %v415 = vld [vmem:[%s1 + $0xd0] sm:$0xff]
    %v416 = vld [vmem:[%s1 + $0xd8] sm:$0xff]
    %v417 = vld [vmem:[%s1 + $0xe0] sm:$0xff]
    %v418 = vld [vmem:[%s1 + $0xe8] sm:$0xff]
    %v419 = vld [vmem:[%s1 + $0xf0] sm:$0xff]
    %v420 = vld [vmem:[%s1 + $0xf8] sm:$0xff]
    %v421 = vld [vmem:[%s1 + $0x100] sm:$0xff]
    %v422 = vld [vmem:[%s1 + $0x108] sm:$0xff]
    %v423 = vld [vmem:[%s1 + $0x110] sm:$0xff]
    %v424 = vld [vmem:[%s1 + $0x118] sm:$0xff]
    %v425 = vld [vmem:[%s1 + $0x120] sm:$0xff]
    %v426 = vld [vmem:[%s1 + $0x128] sm:$0xff]
    %v427 = vld [vmem:[%s1 + $0x130] sm:$0xff]
    %v428 = vld [vmem:[%s1 + $0x138] sm:$0xff]
    %v429 = vld [vmem:[%s1 + $0x140] sm:$0xff]
    %v430 = vld [vmem:[%s1 + $0x148] sm:$0xff]
    %v431 = vld [vmem:[%s1 + $0x150] sm:$0xff]
    %v432 = vld [vmem:[%s1 + $0x158] sm:$0xff]
    %v433 = vld [vmem:[%s1 + $0x160] sm:$0xff]
    %v434 = vld [vmem:[%s1 + $0x168] sm:$0xff]
    %v435 = vld [vmem:[%s1 + $0x170] sm:$0xff]
    %v436 = vld [vmem:[%s1 + $0x178] sm:$0xff]
    %v437 = vld [vmem:[%s1 + $0x180] sm:$0xff]
    %v438 = vld [vmem:[%s1 + $0x188] sm:$0xff]
    %v439 = vld [vmem:[%s1 + $0x190] sm:$0xff]
    %v440 = vld [vmem:[%s1 + $0x198] sm:$0xff]
    %v441 = vld [vmem:[%s1 + $0x1a0] sm:$0xff]
    %v442 = vld [vmem:[%s1 + $0x1a8] sm:$0xff]
    %v443 = vld [vmem:[%s1 + $0x1b0] sm:$0xff]
    %v444 = vld [vmem:[%s1 + $0x1b8] sm:$0xff]
    %v445 = vld [vmem:[%s1 + $0x1c0] sm:$0xff]
    %v446 = vld [vmem:[%s1 + $0x1c8] sm:$0xff]
    %v447 = vld [vmem:[%s1 + $0x1d0] sm:$0xff]
    %v448 = vld [vmem:[%s1 + $0x1d8] sm:$0xff]
    %v449 = vld [vmem:[%s1 + $0x1e0] sm:$0xff]
    %v450 = vld [vmem:[%s1 + $0x1e8] sm:$0xff]
    %v451 = vld [vmem:[%s1 + $0x1f0] sm:$0xff]
    %v452 = vld [vmem:[%s1 + $0x1f8] sm:$0xff]
    %453 = vmatpush.msra.mxu0 %v419
    %454 = vmatpush.msra.mxu0 %v417
    %455 = vmatpush.msra.mxu0 %v415
    %456 = vmatpush.msra.mxu0 %v413
    %457 = vmatpush.msra.mxu0 %v411
    %458 = vmatpush.msra.mxu0 %v409
    %459 = vmatpush.msra.mxu0 %v407
    %460 = vmatpush.msra.mxu0 %v405
    %461 = vmatpush.msra.mxu0 %v403
    %462 = vmatpush.msra.mxu0 %v401
    %463 = vmatpush.msra.mxu0 %v399
    %464 = vmatpush.msra.mxu0 %v397
    %465 = vmatpush.msra.mxu0 %v395
    %466 = vmatpush.msra.mxu0 %v393
    %467 = vmatpush.msra.mxu0 %v391
    %468 = vmatpush.msra.mxu0 %v389
    %469 = vmatmul.f32.gmra.mxu0 %v315
    %v470 = vpop.f32.mrf.mxu0
    %v471 = vadd.f32 0.0, %v470
    %472 = vdwg.mxu0
    %473 = vmatpush.msra.mxu0 %v451
    %474 = vmatpush.msra.mxu0 %v449
    %475 = vmatpush.msra.mxu0 %v447
    %476 = vmatpush.msra.mxu0 %v445
    %477 = vmatpush.msra.mxu0 %v443
    %478 = vmatpush.msra.mxu0 %v441
    %479 = vmatpush.msra.mxu0 %v439
    %480 = vmatpush.msra.mxu0 %v437
    %481 = vmatpush.msra.mxu0 %v435
    %482 = vmatpush.msra.mxu0 %v433
    %483 = vmatpush.msra.mxu0 %v431
    %484 = vmatpush.msra.mxu0 %v429
    %485 = vmatpush.msra.mxu0 %v427
    %486 = vmatpush.msra.mxu0 %v425
    %487 = vmatpush.msra.mxu0 %v423
    %488 = vmatpush.msra.mxu0 %v421
    %489 = vmatmul.f32.gmra.mxu0 %v324
    %v490 = vpop.f32.mrf.mxu0
    %v491 = vadd.f32 %v471, %v490
    %492 = vdwg.mxu0
    %493 = vmatpush.msra.mxu0 %v420
    %494 = vmatpush.msra.mxu0 %v418
    %495 = vmatpush.msra.mxu0 %v416
    %496 = vmatpush.msra.mxu0 %v414
    %497 = vmatpush.msra.mxu0 %v412
    %498 = vmatpush.msra.mxu0 %v410
    %499 = vmatpush.msra.mxu0 %v408
    %500 = vmatpush.msra.mxu0 %v406
    %501 = vmatpush.msra.mxu0 %v404
    %502 = vmatpush.msra.mxu0 %v402
    %503 = vmatpush.msra.mxu0 %v400
    %504 = vmatpush.msra.mxu0 %v398
    %505 = vmatpush.msra.mxu0 %v396
    %506 = vmatpush.msra.mxu0 %v394
    %507 = vmatpush.msra.mxu0 %v392
    %508 = vmatpush.msra.mxu0 %v390
    %509 = vmatmul.f32.gmra.mxu0 %v315
    %v510 = vpop.f32.mrf.mxu0
    %v511 = vadd.f32 0.0, %v510
    %512 = vdwg.mxu0
    %513 = vmatpush.msra.mxu0 %v452
    %514 = vmatpush.msra.mxu0 %v450
    %515 = vmatpush.msra.mxu0 %v448
    %516 = vmatpush.msra.mxu0 %v446
    %517 = vmatpush.msra.mxu0 %v444
    %518 = vmatpush.msra.mxu0 %v442
    %519 = vmatpush.msra.mxu0 %v440
    %520 = vmatpush.msra.mxu0 %v438
    %521 = vmatpush.msra.mxu0 %v436
    %522 = vmatpush.msra.mxu0 %v434
    %523 = vmatpush.msra.mxu0 %v432
    %524 = vmatpush.msra.mxu0 %v430
    %525 = vmatpush.msra.mxu0 %v428
    %526 = vmatpush.msra.mxu0 %v426
    %527 = vmatpush.msra.mxu0 %v424
    %528 = vmatpush.msra.mxu0 %v422
    %529 = vmatmul.f32.gmra.mxu0 %v324
    %v530 = vpop.f32.mrf.mxu0
    %v531 = vadd.f32 %v511, %v530
    %532 = vdwg.mxu0
    %533 = vmatpush.msra.mxu0 %v355
    %534 = vmatpush.msra.mxu0 %v353
    %535 = vmatpush.msra.mxu0 %v351
    %536 = vmatpush.msra.mxu0 %v349
    %537 = vmatpush.msra.mxu0 %v347
    %538 = vmatpush.msra.mxu0 %v345
    %539 = vmatpush.msra.mxu0 %v343
    %540 = vmatpush.msra.mxu0 %v341
    %541 = vmatpush.msra.mxu0 %v339
    %542 = vmatpush.msra.mxu0 %v337
    %543 = vmatpush.msra.mxu0 %v335
    %544 = vmatpush.msra.mxu0 %v333
    %545 = vmatpush.msra.mxu0 %v331
    %546 = vmatpush.msra.mxu0 %v329
    %547 = vmatpush.msra.mxu0 %v327
    %548 = vmatpush.msra.mxu0 %v325
    %549 = vmatmul.f32.gmra.mxu0 %v297
    %v550 = vpop.f32.mrf.mxu0
    %v551 = vadd.f32 %v491, %v550
    %552 = vdwg.mxu0
    %553 = vmatpush.msra.mxu0 %v387
    %554 = vmatpush.msra.mxu0 %v385
    %555 = vmatpush.msra.mxu0 %v383
    %556 = vmatpush.msra.mxu0 %v381
    %557 = vmatpush.msra.mxu0 %v379
    %558 = vmatpush.msra.mxu0 %v377
    %559 = vmatpush.msra.mxu0 %v375
    %560 = vmatpush.msra.mxu0 %v373
    %561 = vmatpush.msra.mxu0 %v371
    %562 = vmatpush.msra.mxu0 %v369
    %563 = vmatpush.msra.mxu0 %v367
    %564 = vmatpush.msra.mxu0 %v365
    %565 = vmatpush.msra.mxu0 %v363
    %566 = vmatpush.msra.mxu0 %v361
    %567 = vmatpush.msra.mxu0 %v359
    %568 = vmatpush.msra.mxu0 %v357
    %569 = vmatmul.f32.gmra.mxu0 %v306
    %v570 = vpop.f32.mrf.mxu0
    %v571 = vadd.f32 %v551, %v570
    %572 = vdwg.mxu0
    %573 = vmatpush.msra.mxu0 %v356
    %574 = vmatpush.msra.mxu0 %v354
    %575 = vmatpush.msra.mxu0 %v352
    %576 = vmatpush.msra.mxu0 %v350
    %577 = vmatpush.msra.mxu0 %v348
    %578 = vmatpush.msra.mxu0 %v346
    %579 = vmatpush.msra.mxu0 %v344
    %580 = vmatpush.msra.mxu0 %v342
    %581 = vmatpush.msra.mxu0 %v340
    %582 = vmatpush.msra.mxu0 %v338
    %583 = vmatpush.msra.mxu0 %v336
    %584 = vmatpush.msra.mxu0 %v334
    %585 = vmatpush.msra.mxu0 %v332
    %586 = vmatpush.msra.mxu0 %v330
    %587 = vmatpush.msra.mxu0 %v328
    %588 = vmatpush.msra.mxu0 %v326
    %589 = vmatmul.f32.gmra.mxu0 %v297
    %v590 = vpop.f32.mrf.mxu0
    %v591 = vadd.f32 %v531, %v590
    %592 = vdwg.mxu0
    %593 = vmatpush.msra.mxu0 %v388
    %594 = vmatpush.msra.mxu0 %v386
    %595 = vmatpush.msra.mxu0 %v384
    %596 = vmatpush.msra.mxu0 %v382
    %597 = vmatpush.msra.mxu0 %v380
    %598 = vmatpush.msra.mxu0 %v378
    %599 = vmatpush.msra.mxu0 %v376
    %600 = vmatpush.msra.mxu0 %v374
    %601 = vmatpush.msra.mxu0 %v372
    %602 = vmatpush.msra.mxu0 %v370
    %603 = vmatpush.msra.mxu0 %v368
    %604 = vmatpush.msra.mxu0 %v366
    %605 = vmatpush.msra.mxu0 %v364
    %606 = vmatpush.msra.mxu0 %v362
    %607 = vmatpush.msra.mxu0 %v360
    %608 = vmatpush.msra.mxu0 %v358
    %609 = vmatmul.f32.gmra.mxu0 %v306
    %v610 = vpop.f32.mrf.mxu0
    %v611 = vadd.f32 %v591, %v610
    %612 = vdwg.mxu0
    %v613 = vmul.f32 %v571, %v281
    %v614 = vmul.f32 %v611, %v282
    %v615 = vpack.c.bf16 %v613, %v613
    %v616 = vpack.c.bf16 %v614, %v614
    %v617 = vld [vmem:[%s6] sm:$0xf]
    %v618 = vld [vmem:[%s6 + $0x4] sm:$0xf]
    %v619 = vld [vmem:[%s6 + $0x8] sm:$0xf]
    %v620 = vld [vmem:[%s6 + $0xc] sm:$0xf]
    %v621 = vld [vmem:[%s6 + $0x10] sm:$0xf]
    %v622 = vld [vmem:[%s6 + $0x14] sm:$0xf]
    %v623 = vld [vmem:[%s6 + $0x18] sm:$0xf]
    %v624 = vld [vmem:[%s6 + $0x1c] sm:$0xf]
    %v625 = vld [vmem:[%s6 + $0x20] sm:$0xf]
    %v626 = vld [vmem:[%s6 + $0x24] sm:$0xf]
    %v627 = vld [vmem:[%s6 + $0x28] sm:$0xf]
    %v628 = vld [vmem:[%s6 + $0x2c] sm:$0xf]
    %v629 = vld [vmem:[%s6 + $0x30] sm:$0xf]
    %v630 = vld [vmem:[%s6 + $0x34] sm:$0xf]
    %v631 = vld [vmem:[%s6 + $0x38] sm:$0xf]
    %v632 = vld [vmem:[%s6 + $0x3c] sm:$0xf]
    %v633 = vld [vmem:[%s6 + $0x40] sm:$0xf]
    %v634 = vld [vmem:[%s6 + $0x44] sm:$0xf]
    %v635 = vld [vmem:[%s6 + $0x48] sm:$0xf]
    %v636 = vld [vmem:[%s6 + $0x4c] sm:$0xf]
    %v637 = vld [vmem:[%s6 + $0x50] sm:$0xf]
    %v638 = vld [vmem:[%s6 + $0x54] sm:$0xf]
    %v639 = vld [vmem:[%s6 + $0x58] sm:$0xf]
    %v640 = vld [vmem:[%s6 + $0x5c] sm:$0xf]
    %v641 = vld [vmem:[%s6 + $0x60] sm:$0xf]
    %v642 = vld [vmem:[%s6 + $0x64] sm:$0xf]
    %v643 = vld [vmem:[%s6 + $0x68] sm:$0xf]
    %v644 = vld [vmem:[%s6 + $0x6c] sm:$0xf]
    %v645 = vld [vmem:[%s6 + $0x70] sm:$0xf]
    %v646 = vld [vmem:[%s6 + $0x74] sm:$0xf]
    %v647 = vld [vmem:[%s6 + $0x78] sm:$0xf]
    %v648 = vld [vmem:[%s6 + $0x7c] sm:$0xf]
    %v651 = vrot.slane %v281, 1
    %v652 = vrot.slane %v282, 1
    %v655 = vmul.f32 %v571, %v651
    %v656 = vmul.f32 %v611, %v652
    %v657 = vpack.c.bf16 %v655, %v655
    %v658 = vpack.c.bf16 %v656, %v656
    %s659 = scalar_lea.vmem %s6, 128
    %v660 = vld [vmem:[%s659] sm:$0xf]
    %v661 = vld [vmem:[%s659 + $0x4] sm:$0xf]
    %v662 = vld [vmem:[%s659 + $0x8] sm:$0xf]
    %v663 = vld [vmem:[%s659 + $0xc] sm:$0xf]
    %v664 = vld [vmem:[%s659 + $0x10] sm:$0xf]
    %v665 = vld [vmem:[%s659 + $0x14] sm:$0xf]
    %v666 = vld [vmem:[%s659 + $0x18] sm:$0xf]
    %v667 = vld [vmem:[%s659 + $0x1c] sm:$0xf]
    %v668 = vld [vmem:[%s659 + $0x20] sm:$0xf]
    %v669 = vld [vmem:[%s659 + $0x24] sm:$0xf]
    %v670 = vld [vmem:[%s659 + $0x28] sm:$0xf]
    %v671 = vld [vmem:[%s659 + $0x2c] sm:$0xf]
    %v672 = vld [vmem:[%s659 + $0x30] sm:$0xf]
    %v673 = vld [vmem:[%s659 + $0x34] sm:$0xf]
    %v674 = vld [vmem:[%s659 + $0x38] sm:$0xf]
    %v675 = vld [vmem:[%s659 + $0x3c] sm:$0xf]
    %v676 = vld [vmem:[%s659 + $0x40] sm:$0xf]
    %v677 = vld [vmem:[%s659 + $0x44] sm:$0xf]
    %v678 = vld [vmem:[%s659 + $0x48] sm:$0xf]
    %v679 = vld [vmem:[%s659 + $0x4c] sm:$0xf]
    %v680 = vld [vmem:[%s659 + $0x50] sm:$0xf]
    %v681 = vld [vmem:[%s659 + $0x54] sm:$0xf]
    %v682 = vld [vmem:[%s659 + $0x58] sm:$0xf]
    %v683 = vld [vmem:[%s659 + $0x5c] sm:$0xf]
    %v684 = vld [vmem:[%s659 + $0x60] sm:$0xf]
    %v685 = vld [vmem:[%s659 + $0x64] sm:$0xf]
    %v686 = vld [vmem:[%s659 + $0x68] sm:$0xf]
    %v687 = vld [vmem:[%s659 + $0x6c] sm:$0xf]
    %v688 = vld [vmem:[%s659 + $0x70] sm:$0xf]
    %v689 = vld [vmem:[%s659 + $0x74] sm:$0xf]
    %v690 = vld [vmem:[%s659 + $0x78] sm:$0xf]
    %v691 = vld [vmem:[%s659 + $0x7c] sm:$0xf]
    %v724 = vunpack.c.l.b16 %v660
    %v725 = vunpack.c.l.b16 %v661
    %v726 = vunpack.c.l.b16 %v662
    %v727 = vunpack.c.l.b16 %v663
    %v728 = vunpack.c.l.b16 %v664
    %v729 = vunpack.c.l.b16 %v665
    %v730 = vunpack.c.l.b16 %v666
    %v731 = vunpack.c.l.b16 %v667
    %v732 = vunpack.c.l.b16 %v668
    %v733 = vunpack.c.l.b16 %v669
    %v734 = vunpack.c.l.b16 %v670
    %v735 = vunpack.c.l.b16 %v671
    %v736 = vunpack.c.l.b16 %v672
    %v737 = vunpack.c.l.b16 %v673
    %v738 = vunpack.c.l.b16 %v674
    %v739 = vunpack.c.l.b16 %v675
    %v740 = vunpack.c.l.b16 %v676
    %v741 = vunpack.c.l.b16 %v677
    %v742 = vunpack.c.l.b16 %v678
    %v743 = vunpack.c.l.b16 %v679
    %v744 = vunpack.c.l.b16 %v680
    %v745 = vunpack.c.l.b16 %v681
    %v746 = vunpack.c.l.b16 %v682
    %v747 = vunpack.c.l.b16 %v683
    %v748 = vunpack.c.l.b16 %v684
    %v749 = vunpack.c.l.b16 %v685
    %v750 = vunpack.c.l.b16 %v686
    %v751 = vunpack.c.l.b16 %v687
    %v752 = vunpack.c.l.b16 %v688
    %v753 = vunpack.c.l.b16 %v689
    %v754 = vunpack.c.l.b16 %v690
    %v755 = vunpack.c.l.b16 %v691
    %v756 = vpack.c.b16 %v725, %v724
    %v757 = vpack.c.b16 %v727, %v726
    %v758 = vpack.c.b16 %v729, %v728
    %v759 = vpack.c.b16 %v731, %v730
    %v760 = vpack.c.b16 %v733, %v732
    %v761 = vpack.c.b16 %v735, %v734
    %v762 = vpack.c.b16 %v737, %v736
    %v763 = vpack.c.b16 %v739, %v738
    %v764 = vpack.c.b16 %v741, %v740
    %v765 = vpack.c.b16 %v743, %v742
    %v766 = vpack.c.b16 %v745, %v744
    %v767 = vpack.c.b16 %v747, %v746
    %v768 = vpack.c.b16 %v749, %v748
    %v769 = vpack.c.b16 %v751, %v750
    %v770 = vpack.c.b16 %v753, %v752
    %v771 = vpack.c.b16 %v755, %v754
    %788 = vmatpush.bf16.msra.mxu0 %v763
    %789 = vmatpush.bf16.msra.mxu0 %v762
    %790 = vmatpush.bf16.msra.mxu0 %v761
    %791 = vmatpush.bf16.msra.mxu0 %v760
    %792 = vmatpush.bf16.msra.mxu0 %v759
    %793 = vmatpush.bf16.msra.mxu0 %v758
    %794 = vmatpush.bf16.msra.mxu0 %v757
    %795 = vmatpush.bf16.msra.mxu0 %v756
    %796 = vmatmul.bf16.gmra.mxu0 %v657
    %v797 = vpop.f32.mrf.mxu0
    %v798 = vadd.f32 0.0, %v797
    %v799 = vpop.f32.mrf.mxu0
    %800 = vdwg.mxu0
    %801 = vmatpush.bf16.msra.mxu0 %v771
    %802 = vmatpush.bf16.msra.mxu0 %v770
    %803 = vmatpush.bf16.msra.mxu0 %v769
    %804 = vmatpush.bf16.msra.mxu0 %v768
    %805 = vmatpush.bf16.msra.mxu0 %v767
    %806 = vmatpush.bf16.msra.mxu0 %v766
    %807 = vmatpush.bf16.msra.mxu0 %v765
    %808 = vmatpush.bf16.msra.mxu0 %v764
    %809 = vmatmul.bf16.gmra.mxu0 %v658
    %v810 = vpop.f32.mrf.mxu0
    %v811 = vadd.f32 %v798, %v810
    %v812 = vpop.f32.mrf.mxu0
    %813 = vdwg.mxu0
    %v846 = vunpack.c.l.b16 %v617
    %v847 = vunpack.c.l.b16 %v618
    %v848 = vunpack.c.l.b16 %v619
    %v849 = vunpack.c.l.b16 %v620
    %v850 = vunpack.c.l.b16 %v621
    %v851 = vunpack.c.l.b16 %v622
    %v852 = vunpack.c.l.b16 %v623
    %v853 = vunpack.c.l.b16 %v624
    %v854 = vunpack.c.l.b16 %v625
    %v855 = vunpack.c.l.b16 %v626
    %v856 = vunpack.c.l.b16 %v627
    %v857 = vunpack.c.l.b16 %v628
    %v858 = vunpack.c.l.b16 %v629
    %v859 = vunpack.c.l.b16 %v630
    %v860 = vunpack.c.l.b16 %v631
    %v861 = vunpack.c.l.b16 %v632
    %v862 = vunpack.c.l.b16 %v633
    %v863 = vunpack.c.l.b16 %v634
    %v864 = vunpack.c.l.b16 %v635
    %v865 = vunpack.c.l.b16 %v636
    %v866 = vunpack.c.l.b16 %v637
    %v867 = vunpack.c.l.b16 %v638
    %v868 = vunpack.c.l.b16 %v639
    %v869 = vunpack.c.l.b16 %v640
    %v870 = vunpack.c.l.b16 %v641
    %v871 = vunpack.c.l.b16 %v642
    %v872 = vunpack.c.l.b16 %v643
    %v873 = vunpack.c.l.b16 %v644
    %v874 = vunpack.c.l.b16 %v645
    %v875 = vunpack.c.l.b16 %v646
    %v876 = vunpack.c.l.b16 %v647
    %v877 = vunpack.c.l.b16 %v648
    %v878 = vpack.c.b16 %v847, %v846
    %v879 = vpack.c.b16 %v849, %v848
    %v880 = vpack.c.b16 %v851, %v850
    %v881 = vpack.c.b16 %v853, %v852
    %v882 = vpack.c.b16 %v855, %v854
    %v883 = vpack.c.b16 %v857, %v856
    %v884 = vpack.c.b16 %v859, %v858
    %v885 = vpack.c.b16 %v861, %v860
    %v886 = vpack.c.b16 %v863, %v862
    %v887 = vpack.c.b16 %v865, %v864
    %v888 = vpack.c.b16 %v867, %v866
    %v889 = vpack.c.b16 %v869, %v868
    %v890 = vpack.c.b16 %v871, %v870
    %v891 = vpack.c.b16 %v873, %v872
    %v892 = vpack.c.b16 %v875, %v874
    %v893 = vpack.c.b16 %v877, %v876
    %910 = vmatpush.bf16.msra.mxu0 %v885
    %911 = vmatpush.bf16.msra.mxu0 %v884
    %912 = vmatpush.bf16.msra.mxu0 %v883
    %913 = vmatpush.bf16.msra.mxu0 %v882
    %914 = vmatpush.bf16.msra.mxu0 %v881
    %915 = vmatpush.bf16.msra.mxu0 %v880
    %916 = vmatpush.bf16.msra.mxu0 %v879
    %917 = vmatpush.bf16.msra.mxu0 %v878
    %918 = vmatmul.bf16.gmra.mxu0 %v615
    %v919 = vpop.f32.mrf.mxu0
    %v920 = vadd.f32 %v811, %v919
    %v921 = vpop.f32.mrf.mxu0
    %922 = vdwg.mxu0
    %923 = vmatpush.bf16.msra.mxu0 %v893
    %924 = vmatpush.bf16.msra.mxu0 %v892
    %925 = vmatpush.bf16.msra.mxu0 %v891
    %926 = vmatpush.bf16.msra.mxu0 %v890
    %927 = vmatpush.bf16.msra.mxu0 %v889
    %928 = vmatpush.bf16.msra.mxu0 %v888
    %929 = vmatpush.bf16.msra.mxu0 %v887
    %930 = vmatpush.bf16.msra.mxu0 %v886
    %931 = vmatmul.bf16.gmra.mxu0 %v616
    %v932 = vpop.f32.mrf.mxu0
    %v933 = vadd.f32 %v920, %v932
    %v934 = vpop.f32.mrf.mxu0
    %935 = vdwg.mxu0
    %v936 = vrot.slane %v281, 2
    %v937 = vrot.slane %v282, 2
    %v940 = vmul.f32 %v571, %v936
    %v941 = vmul.f32 %v611, %v937
    %v942 = vpack.c.bf16 %v940, %v940
    %v943 = vpack.c.bf16 %v941, %v941
    %s944 = scalar_lea.vmem %s6, 256
    %v945 = vld [vmem:[%s944] sm:$0xf]
    %v946 = vld [vmem:[%s944 + $0x4] sm:$0xf]
    %v947 = vld [vmem:[%s944 + $0x8] sm:$0xf]
    %v948 = vld [vmem:[%s944 + $0xc] sm:$0xf]
    %v949 = vld [vmem:[%s944 + $0x10] sm:$0xf]
    %v950 = vld [vmem:[%s944 + $0x14] sm:$0xf]
    %v951 = vld [vmem:[%s944 + $0x18] sm:$0xf]
    %v952 = vld [vmem:[%s944 + $0x1c] sm:$0xf]
    %v953 = vld [vmem:[%s944 + $0x20] sm:$0xf]
    %v954 = vld [vmem:[%s944 + $0x24] sm:$0xf]
    %v955 = vld [vmem:[%s944 + $0x28] sm:$0xf]
    %v956 = vld [vmem:[%s944 + $0x2c] sm:$0xf]
    %v957 = vld [vmem:[%s944 + $0x30] sm:$0xf]
    %v958 = vld [vmem:[%s944 + $0x34] sm:$0xf]
    %v959 = vld [vmem:[%s944 + $0x38] sm:$0xf]
    %v960 = vld [vmem:[%s944 + $0x3c] sm:$0xf]
    %v961 = vld [vmem:[%s944 + $0x40] sm:$0xf]
    %v962 = vld [vmem:[%s944 + $0x44] sm:$0xf]
    %v963 = vld [vmem:[%s944 + $0x48] sm:$0xf]
    %v964 = vld [vmem:[%s944 + $0x4c] sm:$0xf]
    %v965 = vld [vmem:[%s944 + $0x50] sm:$0xf]
    %v966 = vld [vmem:[%s944 + $0x54] sm:$0xf]
    %v967 = vld [vmem:[%s944 + $0x58] sm:$0xf]
    %v968 = vld [vmem:[%s944 + $0x5c] sm:$0xf]
    %v969 = vld [vmem:[%s944 + $0x60] sm:$0xf]
    %v970 = vld [vmem:[%s944 + $0x64] sm:$0xf]
    %v971 = vld [vmem:[%s944 + $0x68] sm:$0xf]
    %v972 = vld [vmem:[%s944 + $0x6c] sm:$0xf]
    %v973 = vld [vmem:[%s944 + $0x70] sm:$0xf]
    %v974 = vld [vmem:[%s944 + $0x74] sm:$0xf]
    %v975 = vld [vmem:[%s944 + $0x78] sm:$0xf]
    %v976 = vld [vmem:[%s944 + $0x7c] sm:$0xf]
    %v1009 = vunpack.c.l.b16 %v945
    %v1010 = vunpack.c.l.b16 %v946
    %v1011 = vunpack.c.l.b16 %v947
    %v1012 = vunpack.c.l.b16 %v948
    %v1013 = vunpack.c.l.b16 %v949
    %v1014 = vunpack.c.l.b16 %v950
    %v1015 = vunpack.c.l.b16 %v951
    %v1016 = vunpack.c.l.b16 %v952
    %v1017 = vunpack.c.l.b16 %v953
    %v1018 = vunpack.c.l.b16 %v954
    %v1019 = vunpack.c.l.b16 %v955
    %v1020 = vunpack.c.l.b16 %v956
    %v1021 = vunpack.c.l.b16 %v957
    %v1022 = vunpack.c.l.b16 %v958
    %v1023 = vunpack.c.l.b16 %v959
    %v1024 = vunpack.c.l.b16 %v960
    %v1025 = vunpack.c.l.b16 %v961
    %v1026 = vunpack.c.l.b16 %v962
    %v1027 = vunpack.c.l.b16 %v963
    %v1028 = vunpack.c.l.b16 %v964
    %v1029 = vunpack.c.l.b16 %v965
    %v1030 = vunpack.c.l.b16 %v966
    %v1031 = vunpack.c.l.b16 %v967
    %v1032 = vunpack.c.l.b16 %v968
    %v1033 = vunpack.c.l.b16 %v969
    %v1034 = vunpack.c.l.b16 %v970
    %v1035 = vunpack.c.l.b16 %v971
    %v1036 = vunpack.c.l.b16 %v972
    %v1037 = vunpack.c.l.b16 %v973
    %v1038 = vunpack.c.l.b16 %v974
    %v1039 = vunpack.c.l.b16 %v975
    %v1040 = vunpack.c.l.b16 %v976
    %v1041 = vpack.c.b16 %v1010, %v1009
    %v1042 = vpack.c.b16 %v1012, %v1011
    %v1043 = vpack.c.b16 %v1014, %v1013
    %v1044 = vpack.c.b16 %v1016, %v1015
    %v1045 = vpack.c.b16 %v1018, %v1017
    %v1046 = vpack.c.b16 %v1020, %v1019
    %v1047 = vpack.c.b16 %v1022, %v1021
    %v1048 = vpack.c.b16 %v1024, %v1023
    %v1049 = vpack.c.b16 %v1026, %v1025
    %v1050 = vpack.c.b16 %v1028, %v1027
    %v1051 = vpack.c.b16 %v1030, %v1029
    %v1052 = vpack.c.b16 %v1032, %v1031
    %v1053 = vpack.c.b16 %v1034, %v1033
    %v1054 = vpack.c.b16 %v1036, %v1035
    %v1055 = vpack.c.b16 %v1038, %v1037
    %v1056 = vpack.c.b16 %v1040, %v1039
    %1073 = vmatpush.bf16.msra.mxu0 %v1048
    %1074 = vmatpush.bf16.msra.mxu0 %v1047
    %1075 = vmatpush.bf16.msra.mxu0 %v1046
    %1076 = vmatpush.bf16.msra.mxu0 %v1045
    %1077 = vmatpush.bf16.msra.mxu0 %v1044
    %1078 = vmatpush.bf16.msra.mxu0 %v1043
    %1079 = vmatpush.bf16.msra.mxu0 %v1042
    %1080 = vmatpush.bf16.msra.mxu0 %v1041
    %1081 = vmatmul.bf16.gmra.mxu0 %v942
    %v1082 = vpop.f32.mrf.mxu0
    %v1083 = vadd.f32 0.0, %v1082
    %v1084 = vpop.f32.mrf.mxu0
    %1085 = vdwg.mxu0
    %1086 = vmatpush.bf16.msra.mxu0 %v1056
    %1087 = vmatpush.bf16.msra.mxu0 %v1055
    %1088 = vmatpush.bf16.msra.mxu0 %v1054
    %1089 = vmatpush.bf16.msra.mxu0 %v1053
    %1090 = vmatpush.bf16.msra.mxu0 %v1052
    %1091 = vmatpush.bf16.msra.mxu0 %v1051
    %1092 = vmatpush.bf16.msra.mxu0 %v1050
    %1093 = vmatpush.bf16.msra.mxu0 %v1049
    %1094 = vmatmul.bf16.gmra.mxu0 %v943
    %v1095 = vpop.f32.mrf.mxu0
    %v1096 = vadd.f32 %v1083, %v1095
    %v1097 = vpop.f32.mrf.mxu0
    %1098 = vdwg.mxu0
    %v1099 = vadd.f32 %v933, %v1096
    %v1100 = vrot.slane %v281, 3
    %v1101 = vrot.slane %v282, 3
    %v1104 = vmul.f32 %v571, %v1100
    %v1105 = vmul.f32 %v611, %v1101
    %v1106 = vpack.c.bf16 %v1104, %v1104
    %v1107 = vpack.c.bf16 %v1105, %v1105
    %s1108 = scalar_lea.vmem %s6, 384
    %v1109 = vld [vmem:[%s1108] sm:$0xf]
    %v1110 = vld [vmem:[%s1108 + $0x4] sm:$0xf]
    %v1111 = vld [vmem:[%s1108 + $0x8] sm:$0xf]
    %v1112 = vld [vmem:[%s1108 + $0xc] sm:$0xf]
    %v1113 = vld [vmem:[%s1108 + $0x10] sm:$0xf]
    %v1114 = vld [vmem:[%s1108 + $0x14] sm:$0xf]
    %v1115 = vld [vmem:[%s1108 + $0x18] sm:$0xf]
    %v1116 = vld [vmem:[%s1108 + $0x1c] sm:$0xf]
    %v1117 = vld [vmem:[%s1108 + $0x20] sm:$0xf]
    %v1118 = vld [vmem:[%s1108 + $0x24] sm:$0xf]
    %v1119 = vld [vmem:[%s1108 + $0x28] sm:$0xf]
    %v1120 = vld [vmem:[%s1108 + $0x2c] sm:$0xf]
    %v1121 = vld [vmem:[%s1108 + $0x30] sm:$0xf]
    %v1122 = vld [vmem:[%s1108 + $0x34] sm:$0xf]
    %v1123 = vld [vmem:[%s1108 + $0x38] sm:$0xf]
    %v1124 = vld [vmem:[%s1108 + $0x3c] sm:$0xf]
    %v1125 = vld [vmem:[%s1108 + $0x40] sm:$0xf]
    %v1126 = vld [vmem:[%s1108 + $0x44] sm:$0xf]
    %v1127 = vld [vmem:[%s1108 + $0x48] sm:$0xf]
    %v1128 = vld [vmem:[%s1108 + $0x4c] sm:$0xf]
    %v1129 = vld [vmem:[%s1108 + $0x50] sm:$0xf]
    %v1130 = vld [vmem:[%s1108 + $0x54] sm:$0xf]
    %v1131 = vld [vmem:[%s1108 + $0x58] sm:$0xf]
    %v1132 = vld [vmem:[%s1108 + $0x5c] sm:$0xf]
    %v1133 = vld [vmem:[%s1108 + $0x60] sm:$0xf]
    %v1134 = vld [vmem:[%s1108 + $0x64] sm:$0xf]
    %v1135 = vld [vmem:[%s1108 + $0x68] sm:$0xf]
    %v1136 = vld [vmem:[%s1108 + $0x6c] sm:$0xf]
    %v1137 = vld [vmem:[%s1108 + $0x70] sm:$0xf]
    %v1138 = vld [vmem:[%s1108 + $0x74] sm:$0xf]
    %v1139 = vld [vmem:[%s1108 + $0x78] sm:$0xf]
    %v1140 = vld [vmem:[%s1108 + $0x7c] sm:$0xf]
    %v1173 = vunpack.c.l.b16 %v1109
    %v1174 = vunpack.c.l.b16 %v1110
    %v1175 = vunpack.c.l.b16 %v1111
    %v1176 = vunpack.c.l.b16 %v1112
    %v1177 = vunpack.c.l.b16 %v1113
    %v1178 = vunpack.c.l.b16 %v1114
    %v1179 = vunpack.c.l.b16 %v1115
    %v1180 = vunpack.c.l.b16 %v1116
    %v1181 = vunpack.c.l.b16 %v1117
    %v1182 = vunpack.c.l.b16 %v1118
    %v1183 = vunpack.c.l.b16 %v1119
    %v1184 = vunpack.c.l.b16 %v1120
    %v1185 = vunpack.c.l.b16 %v1121
    %v1186 = vunpack.c.l.b16 %v1122
    %v1187 = vunpack.c.l.b16 %v1123
    %v1188 = vunpack.c.l.b16 %v1124
    %v1189 = vunpack.c.l.b16 %v1125
    %v1190 = vunpack.c.l.b16 %v1126
    %v1191 = vunpack.c.l.b16 %v1127
    %v1192 = vunpack.c.l.b16 %v1128
    %v1193 = vunpack.c.l.b16 %v1129
    %v1194 = vunpack.c.l.b16 %v1130
    %v1195 = vunpack.c.l.b16 %v1131
    %v1196 = vunpack.c.l.b16 %v1132
    %v1197 = vunpack.c.l.b16 %v1133
    %v1198 = vunpack.c.l.b16 %v1134
    %v1199 = vunpack.c.l.b16 %v1135
    %v1200 = vunpack.c.l.b16 %v1136
    %v1201 = vunpack.c.l.b16 %v1137
    %v1202 = vunpack.c.l.b16 %v1138
    %v1203 = vunpack.c.l.b16 %v1139
    %v1204 = vunpack.c.l.b16 %v1140
    %v1205 = vpack.c.b16 %v1174, %v1173
    %v1206 = vpack.c.b16 %v1176, %v1175
    %v1207 = vpack.c.b16 %v1178, %v1177
    %v1208 = vpack.c.b16 %v1180, %v1179
    %v1209 = vpack.c.b16 %v1182, %v1181
    %v1210 = vpack.c.b16 %v1184, %v1183
    %v1211 = vpack.c.b16 %v1186, %v1185
    %v1212 = vpack.c.b16 %v1188, %v1187
    %v1213 = vpack.c.b16 %v1190, %v1189
    %v1214 = vpack.c.b16 %v1192, %v1191
    %v1215 = vpack.c.b16 %v1194, %v1193
    %v1216 = vpack.c.b16 %v1196, %v1195
    %v1217 = vpack.c.b16 %v1198, %v1197
    %v1218 = vpack.c.b16 %v1200, %v1199
    %v1219 = vpack.c.b16 %v1202, %v1201
    %v1220 = vpack.c.b16 %v1204, %v1203
    %1237 = vmatpush.bf16.msra.mxu0 %v1212
    %1238 = vmatpush.bf16.msra.mxu0 %v1211
    %1239 = vmatpush.bf16.msra.mxu0 %v1210
    %1240 = vmatpush.bf16.msra.mxu0 %v1209
    %1241 = vmatpush.bf16.msra.mxu0 %v1208
    %1242 = vmatpush.bf16.msra.mxu0 %v1207
    %1243 = vmatpush.bf16.msra.mxu0 %v1206
    %1244 = vmatpush.bf16.msra.mxu0 %v1205
    %1245 = vmatmul.bf16.gmra.mxu0 %v1106
    %v1246 = vpop.f32.mrf.mxu0
    %v1247 = vadd.f32 0.0, %v1246
    %v1248 = vpop.f32.mrf.mxu0
    %1249 = vdwg.mxu0
    %1250 = vmatpush.bf16.msra.mxu0 %v1220
    %1251 = vmatpush.bf16.msra.mxu0 %v1219
    %1252 = vmatpush.bf16.msra.mxu0 %v1218
    %1253 = vmatpush.bf16.msra.mxu0 %v1217
    %1254 = vmatpush.bf16.msra.mxu0 %v1216
    %1255 = vmatpush.bf16.msra.mxu0 %v1215
    %1256 = vmatpush.bf16.msra.mxu0 %v1214
    %1257 = vmatpush.bf16.msra.mxu0 %v1213
    %1258 = vmatmul.bf16.gmra.mxu0 %v1107
    %v1259 = vpop.f32.mrf.mxu0
    %v1260 = vadd.f32 %v1247, %v1259
    %v1261 = vpop.f32.mrf.mxu0
    %1262 = vdwg.mxu0
    %v1263 = vadd.f32 %v1099, %v1260
    %v1264 = vrot.slane %v281, 4
    %v1265 = vrot.slane %v282, 4
    %v1268 = vmul.f32 %v571, %v1264
    %v1269 = vmul.f32 %v611, %v1265
    %v1270 = vpack.c.bf16 %v1268, %v1268
    %v1271 = vpack.c.bf16 %v1269, %v1269
    %s1272 = scalar_lea.vmem %s6, 512
    %v1273 = vld [vmem:[%s1272] sm:$0xf]
    %v1274 = vld [vmem:[%s1272 + $0x4] sm:$0xf]
    %v1275 = vld [vmem:[%s1272 + $0x8] sm:$0xf]
    %v1276 = vld [vmem:[%s1272 + $0xc] sm:$0xf]
    %v1277 = vld [vmem:[%s1272 + $0x10] sm:$0xf]
    %v1278 = vld [vmem:[%s1272 + $0x14] sm:$0xf]
    %v1279 = vld [vmem:[%s1272 + $0x18] sm:$0xf]
    %v1280 = vld [vmem:[%s1272 + $0x1c] sm:$0xf]
    %v1281 = vld [vmem:[%s1272 + $0x20] sm:$0xf]
    %v1282 = vld [vmem:[%s1272 + $0x24] sm:$0xf]
    %v1283 = vld [vmem:[%s1272 + $0x28] sm:$0xf]
    %v1284 = vld [vmem:[%s1272 + $0x2c] sm:$0xf]
    %v1285 = vld [vmem:[%s1272 + $0x30] sm:$0xf]
    %v1286 = vld [vmem:[%s1272 + $0x34] sm:$0xf]
    %v1287 = vld [vmem:[%s1272 + $0x38] sm:$0xf]
    %v1288 = vld [vmem:[%s1272 + $0x3c] sm:$0xf]
    %v1289 = vld [vmem:[%s1272 + $0x40] sm:$0xf]
    %v1290 = vld [vmem:[%s1272 + $0x44] sm:$0xf]
    %v1291 = vld [vmem:[%s1272 + $0x48] sm:$0xf]
    %v1292 = vld [vmem:[%s1272 + $0x4c] sm:$0xf]
    %v1293 = vld [vmem:[%s1272 + $0x50] sm:$0xf]
    %v1294 = vld [vmem:[%s1272 + $0x54] sm:$0xf]
    %v1295 = vld [vmem:[%s1272 + $0x58] sm:$0xf]
    %v1296 = vld [vmem:[%s1272 + $0x5c] sm:$0xf]
    %v1297 = vld [vmem:[%s1272 + $0x60] sm:$0xf]
    %v1298 = vld [vmem:[%s1272 + $0x64] sm:$0xf]
    %v1299 = vld [vmem:[%s1272 + $0x68] sm:$0xf]
    %v1300 = vld [vmem:[%s1272 + $0x6c] sm:$0xf]
    %v1301 = vld [vmem:[%s1272 + $0x70] sm:$0xf]
    %v1302 = vld [vmem:[%s1272 + $0x74] sm:$0xf]
    %v1303 = vld [vmem:[%s1272 + $0x78] sm:$0xf]
    %v1304 = vld [vmem:[%s1272 + $0x7c] sm:$0xf]
    %v1337 = vunpack.c.l.b16 %v1273
    %v1338 = vunpack.c.l.b16 %v1274
    %v1339 = vunpack.c.l.b16 %v1275
    %v1340 = vunpack.c.l.b16 %v1276
    %v1341 = vunpack.c.l.b16 %v1277
    %v1342 = vunpack.c.l.b16 %v1278
    %v1343 = vunpack.c.l.b16 %v1279
    %v1344 = vunpack.c.l.b16 %v1280
    %v1345 = vunpack.c.l.b16 %v1281
    %v1346 = vunpack.c.l.b16 %v1282
    %v1347 = vunpack.c.l.b16 %v1283
    %v1348 = vunpack.c.l.b16 %v1284
    %v1349 = vunpack.c.l.b16 %v1285
    %v1350 = vunpack.c.l.b16 %v1286
    %v1351 = vunpack.c.l.b16 %v1287
    %v1352 = vunpack.c.l.b16 %v1288
    %v1353 = vunpack.c.l.b16 %v1289
    %v1354 = vunpack.c.l.b16 %v1290
    %v1355 = vunpack.c.l.b16 %v1291
    %v1356 = vunpack.c.l.b16 %v1292
    %v1357 = vunpack.c.l.b16 %v1293
    %v1358 = vunpack.c.l.b16 %v1294
    %v1359 = vunpack.c.l.b16 %v1295
    %v1360 = vunpack.c.l.b16 %v1296
    %v1361 = vunpack.c.l.b16 %v1297
    %v1362 = vunpack.c.l.b16 %v1298
    %v1363 = vunpack.c.l.b16 %v1299
    %v1364 = vunpack.c.l.b16 %v1300
    %v1365 = vunpack.c.l.b16 %v1301
    %v1366 = vunpack.c.l.b16 %v1302
    %v1367 = vunpack.c.l.b16 %v1303
    %v1368 = vunpack.c.l.b16 %v1304
    %v1369 = vpack.c.b16 %v1338, %v1337
    %v1370 = vpack.c.b16 %v1340, %v1339
    %v1371 = vpack.c.b16 %v1342, %v1341
    %v1372 = vpack.c.b16 %v1344, %v1343
    %v1373 = vpack.c.b16 %v1346, %v1345
    %v1374 = vpack.c.b16 %v1348, %v1347
    %v1375 = vpack.c.b16 %v1350, %v1349
    %v1376 = vpack.c.b16 %v1352, %v1351
    %v1377 = vpack.c.b16 %v1354, %v1353
    %v1378 = vpack.c.b16 %v1356, %v1355
    %v1379 = vpack.c.b16 %v1358, %v1357
    %v1380 = vpack.c.b16 %v1360, %v1359
    %v1381 = vpack.c.b16 %v1362, %v1361
    %v1382 = vpack.c.b16 %v1364, %v1363
    %v1383 = vpack.c.b16 %v1366, %v1365
    %v1384 = vpack.c.b16 %v1368, %v1367
    %1401 = vmatpush.bf16.msra.mxu0 %v1376
    %1402 = vmatpush.bf16.msra.mxu0 %v1375
    %1403 = vmatpush.bf16.msra.mxu0 %v1374
    %1404 = vmatpush.bf16.msra.mxu0 %v1373
    %1405 = vmatpush.bf16.msra.mxu0 %v1372
    %1406 = vmatpush.bf16.msra.mxu0 %v1371
    %1407 = vmatpush.bf16.msra.mxu0 %v1370
    %1408 = vmatpush.bf16.msra.mxu0 %v1369
    %1409 = vmatmul.bf16.gmra.mxu0 %v1270
    %v1410 = vpop.f32.mrf.mxu0
    %v1411 = vadd.f32 0.0, %v1410
    %v1412 = vpop.f32.mrf.mxu0
    %1413 = vdwg.mxu0
    %1414 = vmatpush.bf16.msra.mxu0 %v1384
    %1415 = vmatpush.bf16.msra.mxu0 %v1383
    %1416 = vmatpush.bf16.msra.mxu0 %v1382
    %1417 = vmatpush.bf16.msra.mxu0 %v1381
    %1418 = vmatpush.bf16.msra.mxu0 %v1380
    %1419 = vmatpush.bf16.msra.mxu0 %v1379
    %1420 = vmatpush.bf16.msra.mxu0 %v1378
    %1421 = vmatpush.bf16.msra.mxu0 %v1377
    %1422 = vmatmul.bf16.gmra.mxu0 %v1271
    %v1423 = vpop.f32.mrf.mxu0
    %v1424 = vadd.f32 %v1411, %v1423
    %v1425 = vpop.f32.mrf.mxu0
    %1426 = vdwg.mxu0
    %v1427 = vadd.f32 %v1263, %v1424
    %v1428 = vrot.slane %v281, 5
    %v1429 = vrot.slane %v282, 5
    %v1432 = vmul.f32 %v571, %v1428
    %v1433 = vmul.f32 %v611, %v1429
    %v1434 = vpack.c.bf16 %v1432, %v1432
    %v1435 = vpack.c.bf16 %v1433, %v1433
    %s1436 = scalar_lea.vmem %s6, 640
    %v1437 = vld [vmem:[%s1436] sm:$0xf]
    %v1438 = vld [vmem:[%s1436 + $0x4] sm:$0xf]
    %v1439 = vld [vmem:[%s1436 + $0x8] sm:$0xf]
    %v1440 = vld [vmem:[%s1436 + $0xc] sm:$0xf]
    %v1441 = vld [vmem:[%s1436 + $0x10] sm:$0xf]
    %v1442 = vld [vmem:[%s1436 + $0x14] sm:$0xf]
    %v1443 = vld [vmem:[%s1436 + $0x18] sm:$0xf]
    %v1444 = vld [vmem:[%s1436 + $0x1c] sm:$0xf]
    %v1445 = vld [vmem:[%s1436 + $0x20] sm:$0xf]
    %v1446 = vld [vmem:[%s1436 + $0x24] sm:$0xf]
    %v1447 = vld [vmem:[%s1436 + $0x28] sm:$0xf]
    %v1448 = vld [vmem:[%s1436 + $0x2c] sm:$0xf]
    %v1449 = vld [vmem:[%s1436 + $0x30] sm:$0xf]
    %v1450 = vld [vmem:[%s1436 + $0x34] sm:$0xf]
    %v1451 = vld [vmem:[%s1436 + $0x38] sm:$0xf]
    %v1452 = vld [vmem:[%s1436 + $0x3c] sm:$0xf]
    %v1453 = vld [vmem:[%s1436 + $0x40] sm:$0xf]
    %v1454 = vld [vmem:[%s1436 + $0x44] sm:$0xf]
    %v1455 = vld [vmem:[%s1436 + $0x48] sm:$0xf]
    %v1456 = vld [vmem:[%s1436 + $0x4c] sm:$0xf]
    %v1457 = vld [vmem:[%s1436 + $0x50] sm:$0xf]
    %v1458 = vld [vmem:[%s1436 + $0x54] sm:$0xf]
    %v1459 = vld [vmem:[%s1436 + $0x58] sm:$0xf]
    %v1460 = vld [vmem:[%s1436 + $0x5c] sm:$0xf]
    %v1461 = vld [vmem:[%s1436 + $0x60] sm:$0xf]
    %v1462 = vld [vmem:[%s1436 + $0x64] sm:$0xf]
    %v1463 = vld [vmem:[%s1436 + $0x68] sm:$0xf]
    %v1464 = vld [vmem:[%s1436 + $0x6c] sm:$0xf]
    %v1465 = vld [vmem:[%s1436 + $0x70] sm:$0xf]
    %v1466 = vld [vmem:[%s1436 + $0x74] sm:$0xf]
    %v1467 = vld [vmem:[%s1436 + $0x78] sm:$0xf]
    %v1468 = vld [vmem:[%s1436 + $0x7c] sm:$0xf]
    %v1501 = vunpack.c.l.b16 %v1437
    %v1502 = vunpack.c.l.b16 %v1438
    %v1503 = vunpack.c.l.b16 %v1439
    %v1504 = vunpack.c.l.b16 %v1440
    %v1505 = vunpack.c.l.b16 %v1441
    %v1506 = vunpack.c.l.b16 %v1442
    %v1507 = vunpack.c.l.b16 %v1443
    %v1508 = vunpack.c.l.b16 %v1444
    %v1509 = vunpack.c.l.b16 %v1445
    %v1510 = vunpack.c.l.b16 %v1446
    %v1511 = vunpack.c.l.b16 %v1447
    %v1512 = vunpack.c.l.b16 %v1448
    %v1513 = vunpack.c.l.b16 %v1449
    %v1514 = vunpack.c.l.b16 %v1450
    %v1515 = vunpack.c.l.b16 %v1451
    %v1516 = vunpack.c.l.b16 %v1452
    %v1517 = vunpack.c.l.b16 %v1453
    %v1518 = vunpack.c.l.b16 %v1454
    %v1519 = vunpack.c.l.b16 %v1455
    %v1520 = vunpack.c.l.b16 %v1456
    %v1521 = vunpack.c.l.b16 %v1457
    %v1522 = vunpack.c.l.b16 %v1458
    %v1523 = vunpack.c.l.b16 %v1459
    %v1524 = vunpack.c.l.b16 %v1460
    %v1525 = vunpack.c.l.b16 %v1461
    %v1526 = vunpack.c.l.b16 %v1462
    %v1527 = vunpack.c.l.b16 %v1463
    %v1528 = vunpack.c.l.b16 %v1464
    %v1529 = vunpack.c.l.b16 %v1465
    %v1530 = vunpack.c.l.b16 %v1466
    %v1531 = vunpack.c.l.b16 %v1467
    %v1532 = vunpack.c.l.b16 %v1468
    %v1533 = vpack.c.b16 %v1502, %v1501
    %v1534 = vpack.c.b16 %v1504, %v1503
    %v1535 = vpack.c.b16 %v1506, %v1505
    %v1536 = vpack.c.b16 %v1508, %v1507
    %v1537 = vpack.c.b16 %v1510, %v1509
    %v1538 = vpack.c.b16 %v1512, %v1511
    %v1539 = vpack.c.b16 %v1514, %v1513
    %v1540 = vpack.c.b16 %v1516, %v1515
    %v1541 = vpack.c.b16 %v1518, %v1517
    %v1542 = vpack.c.b16 %v1520, %v1519
    %v1543 = vpack.c.b16 %v1522, %v1521
    %v1544 = vpack.c.b16 %v1524, %v1523
    %v1545 = vpack.c.b16 %v1526, %v1525
    %v1546 = vpack.c.b16 %v1528, %v1527
    %v1547 = vpack.c.b16 %v1530, %v1529
    %v1548 = vpack.c.b16 %v1532, %v1531
    %1565 = vmatpush.bf16.msra.mxu0 %v1540
    %1566 = vmatpush.bf16.msra.mxu0 %v1539
    %1567 = vmatpush.bf16.msra.mxu0 %v1538
    %1568 = vmatpush.bf16.msra.mxu0 %v1537
    %1569 = vmatpush.bf16.msra.mxu0 %v1536
    %1570 = vmatpush.bf16.msra.mxu0 %v1535
    %1571 = vmatpush.bf16.msra.mxu0 %v1534
    %1572 = vmatpush.bf16.msra.mxu0 %v1533
    %1573 = vmatmul.bf16.gmra.mxu0 %v1434
    %v1574 = vpop.f32.mrf.mxu0
    %v1575 = vadd.f32 0.0, %v1574
    %v1576 = vpop.f32.mrf.mxu0
    %1577 = vdwg.mxu0
    %1578 = vmatpush.bf16.msra.mxu0 %v1548
    %1579 = vmatpush.bf16.msra.mxu0 %v1547
    %1580 = vmatpush.bf16.msra.mxu0 %v1546
    %1581 = vmatpush.bf16.msra.mxu0 %v1545
    %1582 = vmatpush.bf16.msra.mxu0 %v1544
    %1583 = vmatpush.bf16.msra.mxu0 %v1543
    %1584 = vmatpush.bf16.msra.mxu0 %v1542
    %1585 = vmatpush.bf16.msra.mxu0 %v1541
    %1586 = vmatmul.bf16.gmra.mxu0 %v1435
    %v1587 = vpop.f32.mrf.mxu0
    %v1588 = vadd.f32 %v1575, %v1587
    %v1589 = vpop.f32.mrf.mxu0
    %1590 = vdwg.mxu0
    %v1591 = vadd.f32 %v1427, %v1588
    %v1592 = vrot.slane %v281, 6
    %v1593 = vrot.slane %v282, 6
    %v1596 = vmul.f32 %v571, %v1592
    %v1597 = vmul.f32 %v611, %v1593
    %v1598 = vpack.c.bf16 %v1596, %v1596
    %v1599 = vpack.c.bf16 %v1597, %v1597
    %s1600 = scalar_lea.vmem %s6, 768
    %v1601 = vld [vmem:[%s1600] sm:$0xf]
    %v1602 = vld [vmem:[%s1600 + $0x4] sm:$0xf]
    %v1603 = vld [vmem:[%s1600 + $0x8] sm:$0xf]
    %v1604 = vld [vmem:[%s1600 + $0xc] sm:$0xf]
    %v1605 = vld [vmem:[%s1600 + $0x10] sm:$0xf]
    %v1606 = vld [vmem:[%s1600 + $0x14] sm:$0xf]
    %v1607 = vld [vmem:[%s1600 + $0x18] sm:$0xf]
    %v1608 = vld [vmem:[%s1600 + $0x1c] sm:$0xf]
    %v1609 = vld [vmem:[%s1600 + $0x20] sm:$0xf]
    %v1610 = vld [vmem:[%s1600 + $0x24] sm:$0xf]
    %v1611 = vld [vmem:[%s1600 + $0x28] sm:$0xf]
    %v1612 = vld [vmem:[%s1600 + $0x2c] sm:$0xf]
    %v1613 = vld [vmem:[%s1600 + $0x30] sm:$0xf]
    %v1614 = vld [vmem:[%s1600 + $0x34] sm:$0xf]
    %v1615 = vld [vmem:[%s1600 + $0x38] sm:$0xf]
    %v1616 = vld [vmem:[%s1600 + $0x3c] sm:$0xf]
    %v1617 = vld [vmem:[%s1600 + $0x40] sm:$0xf]
    %v1618 = vld [vmem:[%s1600 + $0x44] sm:$0xf]
    %v1619 = vld [vmem:[%s1600 + $0x48] sm:$0xf]
    %v1620 = vld [vmem:[%s1600 + $0x4c] sm:$0xf]
    %v1621 = vld [vmem:[%s1600 + $0x50] sm:$0xf]
    %v1622 = vld [vmem:[%s1600 + $0x54] sm:$0xf]
    %v1623 = vld [vmem:[%s1600 + $0x58] sm:$0xf]
    %v1624 = vld [vmem:[%s1600 + $0x5c] sm:$0xf]
    %v1625 = vld [vmem:[%s1600 + $0x60] sm:$0xf]
    %v1626 = vld [vmem:[%s1600 + $0x64] sm:$0xf]
    %v1627 = vld [vmem:[%s1600 + $0x68] sm:$0xf]
    %v1628 = vld [vmem:[%s1600 + $0x6c] sm:$0xf]
    %v1629 = vld [vmem:[%s1600 + $0x70] sm:$0xf]
    %v1630 = vld [vmem:[%s1600 + $0x74] sm:$0xf]
    %v1631 = vld [vmem:[%s1600 + $0x78] sm:$0xf]
    %v1632 = vld [vmem:[%s1600 + $0x7c] sm:$0xf]
    %v1665 = vunpack.c.l.b16 %v1601
    %v1666 = vunpack.c.l.b16 %v1602
    %v1667 = vunpack.c.l.b16 %v1603
    %v1668 = vunpack.c.l.b16 %v1604
    %v1669 = vunpack.c.l.b16 %v1605
    %v1670 = vunpack.c.l.b16 %v1606
    %v1671 = vunpack.c.l.b16 %v1607
    %v1672 = vunpack.c.l.b16 %v1608
    %v1673 = vunpack.c.l.b16 %v1609
    %v1674 = vunpack.c.l.b16 %v1610
    %v1675 = vunpack.c.l.b16 %v1611
    %v1676 = vunpack.c.l.b16 %v1612
    %v1677 = vunpack.c.l.b16 %v1613
    %v1678 = vunpack.c.l.b16 %v1614
    %v1679 = vunpack.c.l.b16 %v1615
    %v1680 = vunpack.c.l.b16 %v1616
    %v1681 = vunpack.c.l.b16 %v1617
    %v1682 = vunpack.c.l.b16 %v1618
    %v1683 = vunpack.c.l.b16 %v1619
    %v1684 = vunpack.c.l.b16 %v1620
    %v1685 = vunpack.c.l.b16 %v1621
    %v1686 = vunpack.c.l.b16 %v1622
    %v1687 = vunpack.c.l.b16 %v1623
    %v1688 = vunpack.c.l.b16 %v1624
    %v1689 = vunpack.c.l.b16 %v1625
    %v1690 = vunpack.c.l.b16 %v1626
    %v1691 = vunpack.c.l.b16 %v1627
    %v1692 = vunpack.c.l.b16 %v1628
    %v1693 = vunpack.c.l.b16 %v1629
    %v1694 = vunpack.c.l.b16 %v1630
    %v1695 = vunpack.c.l.b16 %v1631
    %v1696 = vunpack.c.l.b16 %v1632
    %v1697 = vpack.c.b16 %v1666, %v1665
    %v1698 = vpack.c.b16 %v1668, %v1667
    %v1699 = vpack.c.b16 %v1670, %v1669
    %v1700 = vpack.c.b16 %v1672, %v1671
    %v1701 = vpack.c.b16 %v1674, %v1673
    %v1702 = vpack.c.b16 %v1676, %v1675
    %v1703 = vpack.c.b16 %v1678, %v1677
    %v1704 = vpack.c.b16 %v1680, %v1679
    %v1705 = vpack.c.b16 %v1682, %v1681
    %v1706 = vpack.c.b16 %v1684, %v1683
    %v1707 = vpack.c.b16 %v1686, %v1685
    %v1708 = vpack.c.b16 %v1688, %v1687
    %v1709 = vpack.c.b16 %v1690, %v1689
    %v1710 = vpack.c.b16 %v1692, %v1691
    %v1711 = vpack.c.b16 %v1694, %v1693
    %v1712 = vpack.c.b16 %v1696, %v1695
    %1729 = vmatpush.bf16.msra.mxu0 %v1704
    %1730 = vmatpush.bf16.msra.mxu0 %v1703
    %1731 = vmatpush.bf16.msra.mxu0 %v1702
    %1732 = vmatpush.bf16.msra.mxu0 %v1701
    %1733 = vmatpush.bf16.msra.mxu0 %v1700
    %1734 = vmatpush.bf16.msra.mxu0 %v1699
    %1735 = vmatpush.bf16.msra.mxu0 %v1698
    %1736 = vmatpush.bf16.msra.mxu0 %v1697
    %1737 = vmatmul.bf16.gmra.mxu0 %v1598
    %v1738 = vpop.f32.mrf.mxu0
    %v1739 = vadd.f32 0.0, %v1738
    %v1740 = vpop.f32.mrf.mxu0
    %1741 = vdwg.mxu0
    %1742 = vmatpush.bf16.msra.mxu0 %v1712
    %1743 = vmatpush.bf16.msra.mxu0 %v1711
    %1744 = vmatpush.bf16.msra.mxu0 %v1710
    %1745 = vmatpush.bf16.msra.mxu0 %v1709
    %1746 = vmatpush.bf16.msra.mxu0 %v1708
    %1747 = vmatpush.bf16.msra.mxu0 %v1707
    %1748 = vmatpush.bf16.msra.mxu0 %v1706
    %1749 = vmatpush.bf16.msra.mxu0 %v1705
    %1750 = vmatmul.bf16.gmra.mxu0 %v1599
    %v1751 = vpop.f32.mrf.mxu0
    %v1752 = vadd.f32 %v1739, %v1751
    %v1753 = vpop.f32.mrf.mxu0
    %1754 = vdwg.mxu0
    %v1755 = vadd.f32 %v1591, %v1752
    %v1756 = vrot.slane %v281, 7
    %v1757 = vrot.slane %v282, 7
    %v1760 = vmul.f32 %v571, %v1756
    %v1761 = vmul.f32 %v611, %v1757
    %v1762 = vpack.c.bf16 %v1760, %v1760
    %v1763 = vpack.c.bf16 %v1761, %v1761
    %s1764 = scalar_lea.vmem %s6, 896
    %v1765 = vld [vmem:[%s1764] sm:$0xf]
    %v1766 = vld [vmem:[%s1764 + $0x4] sm:$0xf]
    %v1767 = vld [vmem:[%s1764 + $0x8] sm:$0xf]
    %v1768 = vld [vmem:[%s1764 + $0xc] sm:$0xf]
    %v1769 = vld [vmem:[%s1764 + $0x10] sm:$0xf]
    %v1770 = vld [vmem:[%s1764 + $0x14] sm:$0xf]
    %v1771 = vld [vmem:[%s1764 + $0x18] sm:$0xf]
    %v1772 = vld [vmem:[%s1764 + $0x1c] sm:$0xf]
    %v1773 = vld [vmem:[%s1764 + $0x20] sm:$0xf]
    %v1774 = vld [vmem:[%s1764 + $0x24] sm:$0xf]
    %v1775 = vld [vmem:[%s1764 + $0x28] sm:$0xf]
    %v1776 = vld [vmem:[%s1764 + $0x2c] sm:$0xf]
    %v1777 = vld [vmem:[%s1764 + $0x30] sm:$0xf]
    %v1778 = vld [vmem:[%s1764 + $0x34] sm:$0xf]
    %v1779 = vld [vmem:[%s1764 + $0x38] sm:$0xf]
    %v1780 = vld [vmem:[%s1764 + $0x3c] sm:$0xf]
    %v1781 = vld [vmem:[%s1764 + $0x40] sm:$0xf]
    %v1782 = vld [vmem:[%s1764 + $0x44] sm:$0xf]
    %v1783 = vld [vmem:[%s1764 + $0x48] sm:$0xf]
    %v1784 = vld [vmem:[%s1764 + $0x4c] sm:$0xf]
    %v1785 = vld [vmem:[%s1764 + $0x50] sm:$0xf]
    %v1786 = vld [vmem:[%s1764 + $0x54] sm:$0xf]
    %v1787 = vld [vmem:[%s1764 + $0x58] sm:$0xf]
    %v1788 = vld [vmem:[%s1764 + $0x5c] sm:$0xf]
    %v1789 = vld [vmem:[%s1764 + $0x60] sm:$0xf]
    %v1790 = vld [vmem:[%s1764 + $0x64] sm:$0xf]
    %v1791 = vld [vmem:[%s1764 + $0x68] sm:$0xf]
    %v1792 = vld [vmem:[%s1764 + $0x6c] sm:$0xf]
    %v1793 = vld [vmem:[%s1764 + $0x70] sm:$0xf]
    %v1794 = vld [vmem:[%s1764 + $0x74] sm:$0xf]
    %v1795 = vld [vmem:[%s1764 + $0x78] sm:$0xf]
    %v1796 = vld [vmem:[%s1764 + $0x7c] sm:$0xf]
    %v1829 = vunpack.c.l.b16 %v1765
    %v1830 = vunpack.c.l.b16 %v1766
    %v1831 = vunpack.c.l.b16 %v1767
    %v1832 = vunpack.c.l.b16 %v1768
    %v1833 = vunpack.c.l.b16 %v1769
    %v1834 = vunpack.c.l.b16 %v1770
    %v1835 = vunpack.c.l.b16 %v1771
    %v1836 = vunpack.c.l.b16 %v1772
    %v1837 = vunpack.c.l.b16 %v1773
    %v1838 = vunpack.c.l.b16 %v1774
    %v1839 = vunpack.c.l.b16 %v1775
    %v1840 = vunpack.c.l.b16 %v1776
    %v1841 = vunpack.c.l.b16 %v1777
    %v1842 = vunpack.c.l.b16 %v1778
    %v1843 = vunpack.c.l.b16 %v1779
    %v1844 = vunpack.c.l.b16 %v1780
    %v1845 = vunpack.c.l.b16 %v1781
    %v1846 = vunpack.c.l.b16 %v1782
    %v1847 = vunpack.c.l.b16 %v1783
    %v1848 = vunpack.c.l.b16 %v1784
    %v1849 = vunpack.c.l.b16 %v1785
    %v1850 = vunpack.c.l.b16 %v1786
    %v1851 = vunpack.c.l.b16 %v1787
    %v1852 = vunpack.c.l.b16 %v1788
    %v1853 = vunpack.c.l.b16 %v1789
    %v1854 = vunpack.c.l.b16 %v1790
    %v1855 = vunpack.c.l.b16 %v1791
    %v1856 = vunpack.c.l.b16 %v1792
    %v1857 = vunpack.c.l.b16 %v1793
    %v1858 = vunpack.c.l.b16 %v1794
    %v1859 = vunpack.c.l.b16 %v1795
    %v1860 = vunpack.c.l.b16 %v1796
    %v1861 = vpack.c.b16 %v1830, %v1829
    %v1862 = vpack.c.b16 %v1832, %v1831
    %v1863 = vpack.c.b16 %v1834, %v1833
    %v1864 = vpack.c.b16 %v1836, %v1835
    %v1865 = vpack.c.b16 %v1838, %v1837
    %v1866 = vpack.c.b16 %v1840, %v1839
    %v1867 = vpack.c.b16 %v1842, %v1841
    %v1868 = vpack.c.b16 %v1844, %v1843
    %v1869 = vpack.c.b16 %v1846, %v1845
    %v1870 = vpack.c.b16 %v1848, %v1847
    %v1871 = vpack.c.b16 %v1850, %v1849
    %v1872 = vpack.c.b16 %v1852, %v1851
    %v1873 = vpack.c.b16 %v1854, %v1853
    %v1874 = vpack.c.b16 %v1856, %v1855
    %v1875 = vpack.c.b16 %v1858, %v1857
    %v1876 = vpack.c.b16 %v1860, %v1859
    %1893 = vmatpush.bf16.msra.mxu0 %v1868
    %1894 = vmatpush.bf16.msra.mxu0 %v1867
    %1895 = vmatpush.bf16.msra.mxu0 %v1866
    %1896 = vmatpush.bf16.msra.mxu0 %v1865
    %1897 = vmatpush.bf16.msra.mxu0 %v1864
    %1898 = vmatpush.bf16.msra.mxu0 %v1863
    %1899 = vmatpush.bf16.msra.mxu0 %v1862
    %1900 = vmatpush.bf16.msra.mxu0 %v1861
    %1901 = vmatmul.bf16.gmra.mxu0 %v1762
    %v1902 = vpop.f32.mrf.mxu0
    %v1903 = vadd.f32 0.0, %v1902
    %v1904 = vpop.f32.mrf.mxu0
    %1905 = vdwg.mxu0
    %1906 = vmatpush.bf16.msra.mxu0 %v1876
    %1907 = vmatpush.bf16.msra.mxu0 %v1875
    %1908 = vmatpush.bf16.msra.mxu0 %v1874
    %1909 = vmatpush.bf16.msra.mxu0 %v1873
    %1910 = vmatpush.bf16.msra.mxu0 %v1872
    %1911 = vmatpush.bf16.msra.mxu0 %v1871
    %1912 = vmatpush.bf16.msra.mxu0 %v1870
    %1913 = vmatpush.bf16.msra.mxu0 %v1869
    %1914 = vmatmul.bf16.gmra.mxu0 %v1763
    %v1915 = vpop.f32.mrf.mxu0
    %v1916 = vadd.f32 %v1903, %v1915
    %v1917 = vpop.f32.mrf.mxu0
    %1918 = vdwg.mxu0
    %v1919 = vadd.f32 %v1755, %v1916
    %v1920 = vmul.f32 %v571, %v283
    %v1921 = vmul.f32 %v611, %v284
    %v1922 = vpack.c.bf16 %v1920, %v1920
    %v1923 = vpack.c.bf16 %v1921, %v1921
    %s1924 = scalar_lea.vmem %s6, 1024
    %v1925 = vld [vmem:[%s1924] sm:$0xf]
    %v1926 = vld [vmem:[%s1924 + $0x4] sm:$0xf]
    %v1927 = vld [vmem:[%s1924 + $0x8] sm:$0xf]
    %v1928 = vld [vmem:[%s1924 + $0xc] sm:$0xf]
    %v1929 = vld [vmem:[%s1924 + $0x10] sm:$0xf]
    %v1930 = vld [vmem:[%s1924 + $0x14] sm:$0xf]
    %v1931 = vld [vmem:[%s1924 + $0x18] sm:$0xf]
    %v1932 = vld [vmem:[%s1924 + $0x1c] sm:$0xf]
    %v1933 = vld [vmem:[%s1924 + $0x20] sm:$0xf]
    %v1934 = vld [vmem:[%s1924 + $0x24] sm:$0xf]
    %v1935 = vld [vmem:[%s1924 + $0x28] sm:$0xf]
    %v1936 = vld [vmem:[%s1924 + $0x2c] sm:$0xf]
    %v1937 = vld [vmem:[%s1924 + $0x30] sm:$0xf]
    %v1938 = vld [vmem:[%s1924 + $0x34] sm:$0xf]
    %v1939 = vld [vmem:[%s1924 + $0x38] sm:$0xf]
    %v1940 = vld [vmem:[%s1924 + $0x3c] sm:$0xf]
    %v1941 = vld [vmem:[%s1924 + $0x40] sm:$0xf]
    %v1942 = vld [vmem:[%s1924 + $0x44] sm:$0xf]
    %v1943 = vld [vmem:[%s1924 + $0x48] sm:$0xf]
    %v1944 = vld [vmem:[%s1924 + $0x4c] sm:$0xf]
    %v1945 = vld [vmem:[%s1924 + $0x50] sm:$0xf]
    %v1946 = vld [vmem:[%s1924 + $0x54] sm:$0xf]
    %v1947 = vld [vmem:[%s1924 + $0x58] sm:$0xf]
    %v1948 = vld [vmem:[%s1924 + $0x5c] sm:$0xf]
    %v1949 = vld [vmem:[%s1924 + $0x60] sm:$0xf]
    %v1950 = vld [vmem:[%s1924 + $0x64] sm:$0xf]
    %v1951 = vld [vmem:[%s1924 + $0x68] sm:$0xf]
    %v1952 = vld [vmem:[%s1924 + $0x6c] sm:$0xf]
    %v1953 = vld [vmem:[%s1924 + $0x70] sm:$0xf]
    %v1954 = vld [vmem:[%s1924 + $0x74] sm:$0xf]
    %v1955 = vld [vmem:[%s1924 + $0x78] sm:$0xf]
    %v1956 = vld [vmem:[%s1924 + $0x7c] sm:$0xf]
    %v1989 = vunpack.c.l.b16 %v1925
    %v1990 = vunpack.c.l.b16 %v1926
    %v1991 = vunpack.c.l.b16 %v1927
    %v1992 = vunpack.c.l.b16 %v1928
    %v1993 = vunpack.c.l.b16 %v1929
    %v1994 = vunpack.c.l.b16 %v1930
    %v1995 = vunpack.c.l.b16 %v1931
    %v1996 = vunpack.c.l.b16 %v1932
    %v1997 = vunpack.c.l.b16 %v1933
    %v1998 = vunpack.c.l.b16 %v1934
    %v1999 = vunpack.c.l.b16 %v1935
    %v2000 = vunpack.c.l.b16 %v1936
    %v2001 = vunpack.c.l.b16 %v1937
    %v2002 = vunpack.c.l.b16 %v1938
    %v2003 = vunpack.c.l.b16 %v1939
    %v2004 = vunpack.c.l.b16 %v1940
    %v2005 = vunpack.c.l.b16 %v1941
    %v2006 = vunpack.c.l.b16 %v1942
    %v2007 = vunpack.c.l.b16 %v1943
    %v2008 = vunpack.c.l.b16 %v1944
    %v2009 = vunpack.c.l.b16 %v1945
    %v2010 = vunpack.c.l.b16 %v1946
    %v2011 = vunpack.c.l.b16 %v1947
    %v2012 = vunpack.c.l.b16 %v1948
    %v2013 = vunpack.c.l.b16 %v1949
    %v2014 = vunpack.c.l.b16 %v1950
    %v2015 = vunpack.c.l.b16 %v1951
    %v2016 = vunpack.c.l.b16 %v1952
    %v2017 = vunpack.c.l.b16 %v1953
    %v2018 = vunpack.c.l.b16 %v1954
    %v2019 = vunpack.c.l.b16 %v1955
    %v2020 = vunpack.c.l.b16 %v1956
    %v2021 = vpack.c.b16 %v1990, %v1989
    %v2022 = vpack.c.b16 %v1992, %v1991
    %v2023 = vpack.c.b16 %v1994, %v1993
    %v2024 = vpack.c.b16 %v1996, %v1995
    %v2025 = vpack.c.b16 %v1998, %v1997
    %v2026 = vpack.c.b16 %v2000, %v1999
    %v2027 = vpack.c.b16 %v2002, %v2001
    %v2028 = vpack.c.b16 %v2004, %v2003
    %v2029 = vpack.c.b16 %v2006, %v2005
    %v2030 = vpack.c.b16 %v2008, %v2007
    %v2031 = vpack.c.b16 %v2010, %v2009
    %v2032 = vpack.c.b16 %v2012, %v2011
    %v2033 = vpack.c.b16 %v2014, %v2013
    %v2034 = vpack.c.b16 %v2016, %v2015
    %v2035 = vpack.c.b16 %v2018, %v2017
    %v2036 = vpack.c.b16 %v2020, %v2019
    %2053 = vmatpush.bf16.msra.mxu0 %v2028
    %2054 = vmatpush.bf16.msra.mxu0 %v2027
    %2055 = vmatpush.bf16.msra.mxu0 %v2026
    %2056 = vmatpush.bf16.msra.mxu0 %v2025
    %2057 = vmatpush.bf16.msra.mxu0 %v2024
    %2058 = vmatpush.bf16.msra.mxu0 %v2023
    %2059 = vmatpush.bf16.msra.mxu0 %v2022
    %2060 = vmatpush.bf16.msra.mxu0 %v2021
    %2061 = vmatmul.bf16.gmra.mxu0 %v1922
    %v2062 = vpop.f32.mrf.mxu0
    %v2063 = vadd.f32 0.0, %v2062
    %v2064 = vpop.f32.mrf.mxu0
    %2065 = vdwg.mxu0
    %2066 = vmatpush.bf16.msra.mxu0 %v2036
    %2067 = vmatpush.bf16.msra.mxu0 %v2035
    %2068 = vmatpush.bf16.msra.mxu0 %v2034
    %2069 = vmatpush.bf16.msra.mxu0 %v2033
    %2070 = vmatpush.bf16.msra.mxu0 %v2032
    %2071 = vmatpush.bf16.msra.mxu0 %v2031
    %2072 = vmatpush.bf16.msra.mxu0 %v2030
    %2073 = vmatpush.bf16.msra.mxu0 %v2029
    %2074 = vmatmul.bf16.gmra.mxu0 %v1923
    %v2075 = vpop.f32.mrf.mxu0
    %v2076 = vadd.f32 %v2063, %v2075
    %v2077 = vpop.f32.mrf.mxu0
    %2078 = vdwg.mxu0
    %v2079 = vadd.f32 %v1919, %v2076
    %v2082 = vrot.slane %v283, 1
    %v2083 = vrot.slane %v284, 1
    %v2086 = vmul.f32 %v571, %v2082
    %v2087 = vmul.f32 %v611, %v2083
    %v2088 = vpack.c.bf16 %v2086, %v2086
    %v2089 = vpack.c.bf16 %v2087, %v2087
    %s2090 = scalar_lea.vmem %s6, 1152
    %v2091 = vld [vmem:[%s2090] sm:$0xf]
    %v2092 = vld [vmem:[%s2090 + $0x4] sm:$0xf]
    %v2093 = vld [vmem:[%s2090 + $0x8] sm:$0xf]
    %v2094 = vld [vmem:[%s2090 + $0xc] sm:$0xf]
    %v2095 = vld [vmem:[%s2090 + $0x10] sm:$0xf]
    %v2096 = vld [vmem:[%s2090 + $0x14] sm:$0xf]
    %v2097 = vld [vmem:[%s2090 + $0x18] sm:$0xf]
    %v2098 = vld [vmem:[%s2090 + $0x1c] sm:$0xf]
    %v2099 = vld [vmem:[%s2090 + $0x20] sm:$0xf]
    %v2100 = vld [vmem:[%s2090 + $0x24] sm:$0xf]
    %v2101 = vld [vmem:[%s2090 + $0x28] sm:$0xf]
    %v2102 = vld [vmem:[%s2090 + $0x2c] sm:$0xf]
    %v2103 = vld [vmem:[%s2090 + $0x30] sm:$0xf]
    %v2104 = vld [vmem:[%s2090 + $0x34] sm:$0xf]
    %v2105 = vld [vmem:[%s2090 + $0x38] sm:$0xf]
    %v2106 = vld [vmem:[%s2090 + $0x3c] sm:$0xf]
    %v2107 = vld [vmem:[%s2090 + $0x40] sm:$0xf]
    %v2108 = vld [vmem:[%s2090 + $0x44] sm:$0xf]
    %v2109 = vld [vmem:[%s2090 + $0x48] sm:$0xf]
    %v2110 = vld [vmem:[%s2090 + $0x4c] sm:$0xf]
    %v2111 = vld [vmem:[%s2090 + $0x50] sm:$0xf]
    %v2112 = vld [vmem:[%s2090 + $0x54] sm:$0xf]
    %v2113 = vld [vmem:[%s2090 + $0x58] sm:$0xf]
    %v2114 = vld [vmem:[%s2090 + $0x5c] sm:$0xf]
    %v2115 = vld [vmem:[%s2090 + $0x60] sm:$0xf]
    %v2116 = vld [vmem:[%s2090 + $0x64] sm:$0xf]
    %v2117 = vld [vmem:[%s2090 + $0x68] sm:$0xf]
    %v2118 = vld [vmem:[%s2090 + $0x6c] sm:$0xf]
    %v2119 = vld [vmem:[%s2090 + $0x70] sm:$0xf]
    %v2120 = vld [vmem:[%s2090 + $0x74] sm:$0xf]
    %v2121 = vld [vmem:[%s2090 + $0x78] sm:$0xf]
    %v2122 = vld [vmem:[%s2090 + $0x7c] sm:$0xf]
    %v2155 = vunpack.c.l.b16 %v2091
    %v2156 = vunpack.c.l.b16 %v2092
    %v2157 = vunpack.c.l.b16 %v2093
    %v2158 = vunpack.c.l.b16 %v2094
    %v2159 = vunpack.c.l.b16 %v2095
    %v2160 = vunpack.c.l.b16 %v2096
    %v2161 = vunpack.c.l.b16 %v2097
    %v2162 = vunpack.c.l.b16 %v2098
    %v2163 = vunpack.c.l.b16 %v2099
    %v2164 = vunpack.c.l.b16 %v2100
    %v2165 = vunpack.c.l.b16 %v2101
    %v2166 = vunpack.c.l.b16 %v2102
    %v2167 = vunpack.c.l.b16 %v2103
    %v2168 = vunpack.c.l.b16 %v2104
    %v2169 = vunpack.c.l.b16 %v2105
    %v2170 = vunpack.c.l.b16 %v2106
    %v2171 = vunpack.c.l.b16 %v2107
    %v2172 = vunpack.c.l.b16 %v2108
    %v2173 = vunpack.c.l.b16 %v2109
    %v2174 = vunpack.c.l.b16 %v2110
    %v2175 = vunpack.c.l.b16 %v2111
    %v2176 = vunpack.c.l.b16 %v2112
    %v2177 = vunpack.c.l.b16 %v2113
    %v2178 = vunpack.c.l.b16 %v2114
    %v2179 = vunpack.c.l.b16 %v2115
    %v2180 = vunpack.c.l.b16 %v2116
    %v2181 = vunpack.c.l.b16 %v2117
    %v2182 = vunpack.c.l.b16 %v2118
    %v2183 = vunpack.c.l.b16 %v2119
    %v2184 = vunpack.c.l.b16 %v2120
    %v2185 = vunpack.c.l.b16 %v2121
    %v2186 = vunpack.c.l.b16 %v2122
    %v2187 = vpack.c.b16 %v2156, %v2155
    %v2188 = vpack.c.b16 %v2158, %v2157
    %v2189 = vpack.c.b16 %v2160, %v2159
    %v2190 = vpack.c.b16 %v2162, %v2161
    %v2191 = vpack.c.b16 %v2164, %v2163
    %v2192 = vpack.c.b16 %v2166, %v2165
    %v2193 = vpack.c.b16 %v2168, %v2167
    %v2194 = vpack.c.b16 %v2170, %v2169
    %v2195 = vpack.c.b16 %v2172, %v2171
    %v2196 = vpack.c.b16 %v2174, %v2173
    %v2197 = vpack.c.b16 %v2176, %v2175
    %v2198 = vpack.c.b16 %v2178, %v2177
    %v2199 = vpack.c.b16 %v2180, %v2179
    %v2200 = vpack.c.b16 %v2182, %v2181
    %v2201 = vpack.c.b16 %v2184, %v2183
    %v2202 = vpack.c.b16 %v2186, %v2185
    %2219 = vmatpush.bf16.msra.mxu0 %v2194
    %2220 = vmatpush.bf16.msra.mxu0 %v2193
    %2221 = vmatpush.bf16.msra.mxu0 %v2192
    %2222 = vmatpush.bf16.msra.mxu0 %v2191
    %2223 = vmatpush.bf16.msra.mxu0 %v2190
    %2224 = vmatpush.bf16.msra.mxu0 %v2189
    %2225 = vmatpush.bf16.msra.mxu0 %v2188
    %2226 = vmatpush.bf16.msra.mxu0 %v2187
    %2227 = vmatmul.bf16.gmra.mxu0 %v2088
    %v2228 = vpop.f32.mrf.mxu0
    %v2229 = vadd.f32 0.0, %v2228
    %v2230 = vpop.f32.mrf.mxu0
    %2231 = vdwg.mxu0
    %2232 = vmatpush.bf16.msra.mxu0 %v2202
    %2233 = vmatpush.bf16.msra.mxu0 %v2201
    %2234 = vmatpush.bf16.msra.mxu0 %v2200
    %2235 = vmatpush.bf16.msra.mxu0 %v2199
    %2236 = vmatpush.bf16.msra.mxu0 %v2198
    %2237 = vmatpush.bf16.msra.mxu0 %v2197
    %2238 = vmatpush.bf16.msra.mxu0 %v2196
    %2239 = vmatpush.bf16.msra.mxu0 %v2195
    %2240 = vmatmul.bf16.gmra.mxu0 %v2089
    %v2241 = vpop.f32.mrf.mxu0
    %v2242 = vadd.f32 %v2229, %v2241
    %v2243 = vpop.f32.mrf.mxu0
    %2244 = vdwg.mxu0
    %v2245 = vadd.f32 %v2079, %v2242
    %v2246 = vrot.slane %v283, 2
    %v2247 = vrot.slane %v284, 2
    %v2250 = vmul.f32 %v571, %v2246
    %v2251 = vmul.f32 %v611, %v2247
    %v2252 = vpack.c.bf16 %v2250, %v2250
    %v2253 = vpack.c.bf16 %v2251, %v2251
    %s2254 = scalar_lea.vmem %s6, 1280
    %v2255 = vld [vmem:[%s2254] sm:$0xf]
    %v2256 = vld [vmem:[%s2254 + $0x4] sm:$0xf]
    %v2257 = vld [vmem:[%s2254 + $0x8] sm:$0xf]
    %v2258 = vld [vmem:[%s2254 + $0xc] sm:$0xf]
    %v2259 = vld [vmem:[%s2254 + $0x10] sm:$0xf]
    %v2260 = vld [vmem:[%s2254 + $0x14] sm:$0xf]
    %v2261 = vld [vmem:[%s2254 + $0x18] sm:$0xf]
    %v2262 = vld [vmem:[%s2254 + $0x1c] sm:$0xf]
    %v2263 = vld [vmem:[%s2254 + $0x20] sm:$0xf]
    %v2264 = vld [vmem:[%s2254 + $0x24] sm:$0xf]
    %v2265 = vld [vmem:[%s2254 + $0x28] sm:$0xf]
    %v2266 = vld [vmem:[%s2254 + $0x2c] sm:$0xf]
    %v2267 = vld [vmem:[%s2254 + $0x30] sm:$0xf]
    %v2268 = vld [vmem:[%s2254 + $0x34] sm:$0xf]
    %v2269 = vld [vmem:[%s2254 + $0x38] sm:$0xf]
    %v2270 = vld [vmem:[%s2254 + $0x3c] sm:$0xf]
    %v2271 = vld [vmem:[%s2254 + $0x40] sm:$0xf]
    %v2272 = vld [vmem:[%s2254 + $0x44] sm:$0xf]
    %v2273 = vld [vmem:[%s2254 + $0x48] sm:$0xf]
    %v2274 = vld [vmem:[%s2254 + $0x4c] sm:$0xf]
    %v2275 = vld [vmem:[%s2254 + $0x50] sm:$0xf]
    %v2276 = vld [vmem:[%s2254 + $0x54] sm:$0xf]
    %v2277 = vld [vmem:[%s2254 + $0x58] sm:$0xf]
    %v2278 = vld [vmem:[%s2254 + $0x5c] sm:$0xf]
    %v2279 = vld [vmem:[%s2254 + $0x60] sm:$0xf]
    %v2280 = vld [vmem:[%s2254 + $0x64] sm:$0xf]
    %v2281 = vld [vmem:[%s2254 + $0x68] sm:$0xf]
    %v2282 = vld [vmem:[%s2254 + $0x6c] sm:$0xf]
    %v2283 = vld [vmem:[%s2254 + $0x70] sm:$0xf]
    %v2284 = vld [vmem:[%s2254 + $0x74] sm:$0xf]
    %v2285 = vld [vmem:[%s2254 + $0x78] sm:$0xf]
    %v2286 = vld [vmem:[%s2254 + $0x7c] sm:$0xf]
    %v2319 = vunpack.c.l.b16 %v2255
    %v2320 = vunpack.c.l.b16 %v2256
    %v2321 = vunpack.c.l.b16 %v2257
    %v2322 = vunpack.c.l.b16 %v2258
    %v2323 = vunpack.c.l.b16 %v2259
    %v2324 = vunpack.c.l.b16 %v2260
    %v2325 = vunpack.c.l.b16 %v2261
    %v2326 = vunpack.c.l.b16 %v2262
    %v2327 = vunpack.c.l.b16 %v2263
    %v2328 = vunpack.c.l.b16 %v2264
    %v2329 = vunpack.c.l.b16 %v2265
    %v2330 = vunpack.c.l.b16 %v2266
    %v2331 = vunpack.c.l.b16 %v2267
    %v2332 = vunpack.c.l.b16 %v2268
    %v2333 = vunpack.c.l.b16 %v2269
    %v2334 = vunpack.c.l.b16 %v2270
    %v2335 = vunpack.c.l.b16 %v2271
    %v2336 = vunpack.c.l.b16 %v2272
    %v2337 = vunpack.c.l.b16 %v2273
    %v2338 = vunpack.c.l.b16 %v2274
    %v2339 = vunpack.c.l.b16 %v2275
    %v2340 = vunpack.c.l.b16 %v2276
    %v2341 = vunpack.c.l.b16 %v2277
    %v2342 = vunpack.c.l.b16 %v2278
    %v2343 = vunpack.c.l.b16 %v2279
    %v2344 = vunpack.c.l.b16 %v2280
    %v2345 = vunpack.c.l.b16 %v2281
    %v2346 = vunpack.c.l.b16 %v2282
    %v2347 = vunpack.c.l.b16 %v2283
    %v2348 = vunpack.c.l.b16 %v2284
    %v2349 = vunpack.c.l.b16 %v2285
    %v2350 = vunpack.c.l.b16 %v2286
    %v2351 = vpack.c.b16 %v2320, %v2319
    %v2352 = vpack.c.b16 %v2322, %v2321
    %v2353 = vpack.c.b16 %v2324, %v2323
    %v2354 = vpack.c.b16 %v2326, %v2325
    %v2355 = vpack.c.b16 %v2328, %v2327
    %v2356 = vpack.c.b16 %v2330, %v2329
    %v2357 = vpack.c.b16 %v2332, %v2331
    %v2358 = vpack.c.b16 %v2334, %v2333
    %v2359 = vpack.c.b16 %v2336, %v2335
    %v2360 = vpack.c.b16 %v2338, %v2337
    %v2361 = vpack.c.b16 %v2340, %v2339
    %v2362 = vpack.c.b16 %v2342, %v2341
    %v2363 = vpack.c.b16 %v2344, %v2343
    %v2364 = vpack.c.b16 %v2346, %v2345
    %v2365 = vpack.c.b16 %v2348, %v2347
    %v2366 = vpack.c.b16 %v2350, %v2349
    %2383 = vmatpush.bf16.msra.mxu0 %v2358
    %2384 = vmatpush.bf16.msra.mxu0 %v2357
    %2385 = vmatpush.bf16.msra.mxu0 %v2356
    %2386 = vmatpush.bf16.msra.mxu0 %v2355
    %2387 = vmatpush.bf16.msra.mxu0 %v2354
    %2388 = vmatpush.bf16.msra.mxu0 %v2353
    %2389 = vmatpush.bf16.msra.mxu0 %v2352
    %2390 = vmatpush.bf16.msra.mxu0 %v2351
    %2391 = vmatmul.bf16.gmra.mxu0 %v2252
    %v2392 = vpop.f32.mrf.mxu0
    %v2393 = vadd.f32 0.0, %v2392
    %v2394 = vpop.f32.mrf.mxu0
    %2395 = vdwg.mxu0
    %2396 = vmatpush.bf16.msra.mxu0 %v2366
    %2397 = vmatpush.bf16.msra.mxu0 %v2365
    %2398 = vmatpush.bf16.msra.mxu0 %v2364
    %2399 = vmatpush.bf16.msra.mxu0 %v2363
    %2400 = vmatpush.bf16.msra.mxu0 %v2362
    %2401 = vmatpush.bf16.msra.mxu0 %v2361
    %2402 = vmatpush.bf16.msra.mxu0 %v2360
    %2403 = vmatpush.bf16.msra.mxu0 %v2359
    %2404 = vmatmul.bf16.gmra.mxu0 %v2253
    %v2405 = vpop.f32.mrf.mxu0
    %v2406 = vadd.f32 %v2393, %v2405
    %v2407 = vpop.f32.mrf.mxu0
    %2408 = vdwg.mxu0
    %v2409 = vadd.f32 %v2245, %v2406
    %v2410 = vrot.slane %v283, 3
    %v2411 = vrot.slane %v284, 3
    %v2414 = vmul.f32 %v571, %v2410
    %v2415 = vmul.f32 %v611, %v2411
    %v2416 = vpack.c.bf16 %v2414, %v2414
    %v2417 = vpack.c.bf16 %v2415, %v2415
    %s2418 = scalar_lea.vmem %s6, 1408
    %v2419 = vld [vmem:[%s2418] sm:$0xf]
    %v2420 = vld [vmem:[%s2418 + $0x4] sm:$0xf]
    %v2421 = vld [vmem:[%s2418 + $0x8] sm:$0xf]
    %v2422 = vld [vmem:[%s2418 + $0xc] sm:$0xf]
    %v2423 = vld [vmem:[%s2418 + $0x10] sm:$0xf]
    %v2424 = vld [vmem:[%s2418 + $0x14] sm:$0xf]
    %v2425 = vld [vmem:[%s2418 + $0x18] sm:$0xf]
    %v2426 = vld [vmem:[%s2418 + $0x1c] sm:$0xf]
    %v2427 = vld [vmem:[%s2418 + $0x20] sm:$0xf]
    %v2428 = vld [vmem:[%s2418 + $0x24] sm:$0xf]
    %v2429 = vld [vmem:[%s2418 + $0x28] sm:$0xf]
    %v2430 = vld [vmem:[%s2418 + $0x2c] sm:$0xf]
    %v2431 = vld [vmem:[%s2418 + $0x30] sm:$0xf]
    %v2432 = vld [vmem:[%s2418 + $0x34] sm:$0xf]
    %v2433 = vld [vmem:[%s2418 + $0x38] sm:$0xf]
    %v2434 = vld [vmem:[%s2418 + $0x3c] sm:$0xf]
    %v2435 = vld [vmem:[%s2418 + $0x40] sm:$0xf]
    %v2436 = vld [vmem:[%s2418 + $0x44] sm:$0xf]
    %v2437 = vld [vmem:[%s2418 + $0x48] sm:$0xf]
    %v2438 = vld [vmem:[%s2418 + $0x4c] sm:$0xf]
    %v2439 = vld [vmem:[%s2418 + $0x50] sm:$0xf]
    %v2440 = vld [vmem:[%s2418 + $0x54] sm:$0xf]
    %v2441 = vld [vmem:[%s2418 + $0x58] sm:$0xf]
    %v2442 = vld [vmem:[%s2418 + $0x5c] sm:$0xf]
    %v2443 = vld [vmem:[%s2418 + $0x60] sm:$0xf]
    %v2444 = vld [vmem:[%s2418 + $0x64] sm:$0xf]
    %v2445 = vld [vmem:[%s2418 + $0x68] sm:$0xf]
    %v2446 = vld [vmem:[%s2418 + $0x6c] sm:$0xf]
    %v2447 = vld [vmem:[%s2418 + $0x70] sm:$0xf]
    %v2448 = vld [vmem:[%s2418 + $0x74] sm:$0xf]
    %v2449 = vld [vmem:[%s2418 + $0x78] sm:$0xf]
    %v2450 = vld [vmem:[%s2418 + $0x7c] sm:$0xf]
    %v2483 = vunpack.c.l.b16 %v2419
    %v2484 = vunpack.c.l.b16 %v2420
    %v2485 = vunpack.c.l.b16 %v2421
    %v2486 = vunpack.c.l.b16 %v2422
    %v2487 = vunpack.c.l.b16 %v2423
    %v2488 = vunpack.c.l.b16 %v2424
    %v2489 = vunpack.c.l.b16 %v2425
    %v2490 = vunpack.c.l.b16 %v2426
    %v2491 = vunpack.c.l.b16 %v2427
    %v2492 = vunpack.c.l.b16 %v2428
    %v2493 = vunpack.c.l.b16 %v2429
    %v2494 = vunpack.c.l.b16 %v2430
    %v2495 = vunpack.c.l.b16 %v2431
    %v2496 = vunpack.c.l.b16 %v2432
    %v2497 = vunpack.c.l.b16 %v2433
    %v2498 = vunpack.c.l.b16 %v2434
    %v2499 = vunpack.c.l.b16 %v2435
    %v2500 = vunpack.c.l.b16 %v2436
    %v2501 = vunpack.c.l.b16 %v2437
    %v2502 = vunpack.c.l.b16 %v2438
    %v2503 = vunpack.c.l.b16 %v2439
    %v2504 = vunpack.c.l.b16 %v2440
    %v2505 = vunpack.c.l.b16 %v2441
    %v2506 = vunpack.c.l.b16 %v2442
    %v2507 = vunpack.c.l.b16 %v2443
    %v2508 = vunpack.c.l.b16 %v2444
    %v2509 = vunpack.c.l.b16 %v2445
    %v2510 = vunpack.c.l.b16 %v2446
    %v2511 = vunpack.c.l.b16 %v2447
    %v2512 = vunpack.c.l.b16 %v2448
    %v2513 = vunpack.c.l.b16 %v2449
    %v2514 = vunpack.c.l.b16 %v2450
    %v2515 = vpack.c.b16 %v2484, %v2483
    %v2516 = vpack.c.b16 %v2486, %v2485
    %v2517 = vpack.c.b16 %v2488, %v2487
    %v2518 = vpack.c.b16 %v2490, %v2489
    %v2519 = vpack.c.b16 %v2492, %v2491
    %v2520 = vpack.c.b16 %v2494, %v2493
    %v2521 = vpack.c.b16 %v2496, %v2495
    %v2522 = vpack.c.b16 %v2498, %v2497
    %v2523 = vpack.c.b16 %v2500, %v2499
    %v2524 = vpack.c.b16 %v2502, %v2501
    %v2525 = vpack.c.b16 %v2504, %v2503
    %v2526 = vpack.c.b16 %v2506, %v2505
    %v2527 = vpack.c.b16 %v2508, %v2507
    %v2528 = vpack.c.b16 %v2510, %v2509
    %v2529 = vpack.c.b16 %v2512, %v2511
    %v2530 = vpack.c.b16 %v2514, %v2513
    %2547 = vmatpush.bf16.msra.mxu0 %v2522
    %2548 = vmatpush.bf16.msra.mxu0 %v2521
    %2549 = vmatpush.bf16.msra.mxu0 %v2520
    %2550 = vmatpush.bf16.msra.mxu0 %v2519
    %2551 = vmatpush.bf16.msra.mxu0 %v2518
    %2552 = vmatpush.bf16.msra.mxu0 %v2517
    %2553 = vmatpush.bf16.msra.mxu0 %v2516
    %2554 = vmatpush.bf16.msra.mxu0 %v2515
    %2555 = vmatmul.bf16.gmra.mxu0 %v2416
    %v2556 = vpop.f32.mrf.mxu0
    %v2557 = vadd.f32 0.0, %v2556
    %v2558 = vpop.f32.mrf.mxu0
    %2559 = vdwg.mxu0
    %2560 = vmatpush.bf16.msra.mxu0 %v2530
    %2561 = vmatpush.bf16.msra.mxu0 %v2529
    %2562 = vmatpush.bf16.msra.mxu0 %v2528
    %2563 = vmatpush.bf16.msra.mxu0 %v2527
    %2564 = vmatpush.bf16.msra.mxu0 %v2526
    %2565 = vmatpush.bf16.msra.mxu0 %v2525
    %2566 = vmatpush.bf16.msra.mxu0 %v2524
    %2567 = vmatpush.bf16.msra.mxu0 %v2523
    %2568 = vmatmul.bf16.gmra.mxu0 %v2417
    %v2569 = vpop.f32.mrf.mxu0
    %v2570 = vadd.f32 %v2557, %v2569
    %v2571 = vpop.f32.mrf.mxu0
    %2572 = vdwg.mxu0
    %v2573 = vadd.f32 %v2409, %v2570
    %v2574 = vrot.slane %v283, 4
    %v2575 = vrot.slane %v284, 4
    %v2578 = vmul.f32 %v571, %v2574
    %v2579 = vmul.f32 %v611, %v2575
    %v2580 = vpack.c.bf16 %v2578, %v2578
    %v2581 = vpack.c.bf16 %v2579, %v2579
    %s2582 = scalar_lea.vmem %s6, 1536
    %v2583 = vld [vmem:[%s2582] sm:$0xf]
    %v2584 = vld [vmem:[%s2582 + $0x4] sm:$0xf]
    %v2585 = vld [vmem:[%s2582 + $0x8] sm:$0xf]
    %v2586 = vld [vmem:[%s2582 + $0xc] sm:$0xf]
    %v2587 = vld [vmem:[%s2582 + $0x10] sm:$0xf]
    %v2588 = vld [vmem:[%s2582 + $0x14] sm:$0xf]
    %v2589 = vld [vmem:[%s2582 + $0x18] sm:$0xf]
    %v2590 = vld [vmem:[%s2582 + $0x1c] sm:$0xf]
    %v2591 = vld [vmem:[%s2582 + $0x20] sm:$0xf]
    %v2592 = vld [vmem:[%s2582 + $0x24] sm:$0xf]
    %v2593 = vld [vmem:[%s2582 + $0x28] sm:$0xf]
    %v2594 = vld [vmem:[%s2582 + $0x2c] sm:$0xf]
    %v2595 = vld [vmem:[%s2582 + $0x30] sm:$0xf]
    %v2596 = vld [vmem:[%s2582 + $0x34] sm:$0xf]
    %v2597 = vld [vmem:[%s2582 + $0x38] sm:$0xf]
    %v2598 = vld [vmem:[%s2582 + $0x3c] sm:$0xf]
    %v2599 = vld [vmem:[%s2582 + $0x40] sm:$0xf]
    %v2600 = vld [vmem:[%s2582 + $0x44] sm:$0xf]
    %v2601 = vld [vmem:[%s2582 + $0x48] sm:$0xf]
    %v2602 = vld [vmem:[%s2582 + $0x4c] sm:$0xf]
    %v2603 = vld [vmem:[%s2582 + $0x50] sm:$0xf]
    %v2604 = vld [vmem:[%s2582 + $0x54] sm:$0xf]
    %v2605 = vld [vmem:[%s2582 + $0x58] sm:$0xf]
    %v2606 = vld [vmem:[%s2582 + $0x5c] sm:$0xf]
    %v2607 = vld [vmem:[%s2582 + $0x60] sm:$0xf]
    %v2608 = vld [vmem:[%s2582 + $0x64] sm:$0xf]
    %v2609 = vld [vmem:[%s2582 + $0x68] sm:$0xf]
    %v2610 = vld [vmem:[%s2582 + $0x6c] sm:$0xf]
    %v2611 = vld [vmem:[%s2582 + $0x70] sm:$0xf]
    %v2612 = vld [vmem:[%s2582 + $0x74] sm:$0xf]
    %v2613 = vld [vmem:[%s2582 + $0x78] sm:$0xf]
    %v2614 = vld [vmem:[%s2582 + $0x7c] sm:$0xf]
    %v2647 = vunpack.c.l.b16 %v2583
    %v2648 = vunpack.c.l.b16 %v2584
    %v2649 = vunpack.c.l.b16 %v2585
    %v2650 = vunpack.c.l.b16 %v2586
    %v2651 = vunpack.c.l.b16 %v2587
    %v2652 = vunpack.c.l.b16 %v2588
    %v2653 = vunpack.c.l.b16 %v2589
    %v2654 = vunpack.c.l.b16 %v2590
    %v2655 = vunpack.c.l.b16 %v2591
    %v2656 = vunpack.c.l.b16 %v2592
    %v2657 = vunpack.c.l.b16 %v2593
    %v2658 = vunpack.c.l.b16 %v2594
    %v2659 = vunpack.c.l.b16 %v2595
    %v2660 = vunpack.c.l.b16 %v2596
    %v2661 = vunpack.c.l.b16 %v2597
    %v2662 = vunpack.c.l.b16 %v2598
    %v2663 = vunpack.c.l.b16 %v2599
    %v2664 = vunpack.c.l.b16 %v2600
    %v2665 = vunpack.c.l.b16 %v2601
    %v2666 = vunpack.c.l.b16 %v2602
    %v2667 = vunpack.c.l.b16 %v2603
    %v2668 = vunpack.c.l.b16 %v2604
    %v2669 = vunpack.c.l.b16 %v2605
    %v2670 = vunpack.c.l.b16 %v2606
    %v2671 = vunpack.c.l.b16 %v2607
    %v2672 = vunpack.c.l.b16 %v2608
    %v2673 = vunpack.c.l.b16 %v2609
    %v2674 = vunpack.c.l.b16 %v2610
    %v2675 = vunpack.c.l.b16 %v2611
    %v2676 = vunpack.c.l.b16 %v2612
    %v2677 = vunpack.c.l.b16 %v2613
    %v2678 = vunpack.c.l.b16 %v2614
    %v2679 = vpack.c.b16 %v2648, %v2647
    %v2680 = vpack.c.b16 %v2650, %v2649
    %v2681 = vpack.c.b16 %v2652, %v2651
    %v2682 = vpack.c.b16 %v2654, %v2653
    %v2683 = vpack.c.b16 %v2656, %v2655
    %v2684 = vpack.c.b16 %v2658, %v2657
    %v2685 = vpack.c.b16 %v2660, %v2659
    %v2686 = vpack.c.b16 %v2662, %v2661
    %v2687 = vpack.c.b16 %v2664, %v2663
    %v2688 = vpack.c.b16 %v2666, %v2665
    %v2689 = vpack.c.b16 %v2668, %v2667
    %v2690 = vpack.c.b16 %v2670, %v2669
    %v2691 = vpack.c.b16 %v2672, %v2671
    %v2692 = vpack.c.b16 %v2674, %v2673
    %v2693 = vpack.c.b16 %v2676, %v2675
    %v2694 = vpack.c.b16 %v2678, %v2677
    %2711 = vmatpush.bf16.msra.mxu0 %v2686
    %2712 = vmatpush.bf16.msra.mxu0 %v2685
    %2713 = vmatpush.bf16.msra.mxu0 %v2684
    %2714 = vmatpush.bf16.msra.mxu0 %v2683
    %2715 = vmatpush.bf16.msra.mxu0 %v2682
    %2716 = vmatpush.bf16.msra.mxu0 %v2681
    %2717 = vmatpush.bf16.msra.mxu0 %v2680
    %2718 = vmatpush.bf16.msra.mxu0 %v2679
    %2719 = vmatmul.bf16.gmra.mxu0 %v2580
    %v2720 = vpop.f32.mrf.mxu0
    %v2721 = vadd.f32 0.0, %v2720
    %v2722 = vpop.f32.mrf.mxu0
    %2723 = vdwg.mxu0
    %2724 = vmatpush.bf16.msra.mxu0 %v2694
    %2725 = vmatpush.bf16.msra.mxu0 %v2693
    %2726 = vmatpush.bf16.msra.mxu0 %v2692
    %2727 = vmatpush.bf16.msra.mxu0 %v2691
    %2728 = vmatpush.bf16.msra.mxu0 %v2690
    %2729 = vmatpush.bf16.msra.mxu0 %v2689
    %2730 = vmatpush.bf16.msra.mxu0 %v2688
    %2731 = vmatpush.bf16.msra.mxu0 %v2687
    %2732 = vmatmul.bf16.gmra.mxu0 %v2581
    %v2733 = vpop.f32.mrf.mxu0
    %v2734 = vadd.f32 %v2721, %v2733
    %v2735 = vpop.f32.mrf.mxu0
    %2736 = vdwg.mxu0
    %v2737 = vadd.f32 %v2573, %v2734
    %v2738 = vrot.slane %v283, 5
    %v2739 = vrot.slane %v284, 5
    %v2742 = vmul.f32 %v571, %v2738
    %v2743 = vmul.f32 %v611, %v2739
    %v2744 = vpack.c.bf16 %v2742, %v2742
    %v2745 = vpack.c.bf16 %v2743, %v2743
    %s2746 = scalar_lea.vmem %s6, 1664
    %v2747 = vld [vmem:[%s2746] sm:$0xf]
    %v2748 = vld [vmem:[%s2746 + $0x4] sm:$0xf]
    %v2749 = vld [vmem:[%s2746 + $0x8] sm:$0xf]
    %v2750 = vld [vmem:[%s2746 + $0xc] sm:$0xf]
    %v2751 = vld [vmem:[%s2746 + $0x10] sm:$0xf]
    %v2752 = vld [vmem:[%s2746 + $0x14] sm:$0xf]
    %v2753 = vld [vmem:[%s2746 + $0x18] sm:$0xf]
    %v2754 = vld [vmem:[%s2746 + $0x1c] sm:$0xf]
    %v2755 = vld [vmem:[%s2746 + $0x20] sm:$0xf]
    %v2756 = vld [vmem:[%s2746 + $0x24] sm:$0xf]
    %v2757 = vld [vmem:[%s2746 + $0x28] sm:$0xf]
    %v2758 = vld [vmem:[%s2746 + $0x2c] sm:$0xf]
    %v2759 = vld [vmem:[%s2746 + $0x30] sm:$0xf]
    %v2760 = vld [vmem:[%s2746 + $0x34] sm:$0xf]
    %v2761 = vld [vmem:[%s2746 + $0x38] sm:$0xf]
    %v2762 = vld [vmem:[%s2746 + $0x3c] sm:$0xf]
    %v2763 = vld [vmem:[%s2746 + $0x40] sm:$0xf]
    %v2764 = vld [vmem:[%s2746 + $0x44] sm:$0xf]
    %v2765 = vld [vmem:[%s2746 + $0x48] sm:$0xf]
    %v2766 = vld [vmem:[%s2746 + $0x4c] sm:$0xf]
    %v2767 = vld [vmem:[%s2746 + $0x50] sm:$0xf]
    %v2768 = vld [vmem:[%s2746 + $0x54] sm:$0xf]
    %v2769 = vld [vmem:[%s2746 + $0x58] sm:$0xf]
    %v2770 = vld [vmem:[%s2746 + $0x5c] sm:$0xf]
    %v2771 = vld [vmem:[%s2746 + $0x60] sm:$0xf]
    %v2772 = vld [vmem:[%s2746 + $0x64] sm:$0xf]
    %v2773 = vld [vmem:[%s2746 + $0x68] sm:$0xf]
    %v2774 = vld [vmem:[%s2746 + $0x6c] sm:$0xf]
    %v2775 = vld [vmem:[%s2746 + $0x70] sm:$0xf]
    %v2776 = vld [vmem:[%s2746 + $0x74] sm:$0xf]
    %v2777 = vld [vmem:[%s2746 + $0x78] sm:$0xf]
    %v2778 = vld [vmem:[%s2746 + $0x7c] sm:$0xf]
    %v2811 = vunpack.c.l.b16 %v2747
    %v2812 = vunpack.c.l.b16 %v2748
    %v2813 = vunpack.c.l.b16 %v2749
    %v2814 = vunpack.c.l.b16 %v2750
    %v2815 = vunpack.c.l.b16 %v2751
    %v2816 = vunpack.c.l.b16 %v2752
    %v2817 = vunpack.c.l.b16 %v2753
    %v2818 = vunpack.c.l.b16 %v2754
    %v2819 = vunpack.c.l.b16 %v2755
    %v2820 = vunpack.c.l.b16 %v2756
    %v2821 = vunpack.c.l.b16 %v2757
    %v2822 = vunpack.c.l.b16 %v2758
    %v2823 = vunpack.c.l.b16 %v2759
    %v2824 = vunpack.c.l.b16 %v2760
    %v2825 = vunpack.c.l.b16 %v2761
    %v2826 = vunpack.c.l.b16 %v2762
    %v2827 = vunpack.c.l.b16 %v2763
    %v2828 = vunpack.c.l.b16 %v2764
    %v2829 = vunpack.c.l.b16 %v2765
    %v2830 = vunpack.c.l.b16 %v2766
    %v2831 = vunpack.c.l.b16 %v2767
    %v2832 = vunpack.c.l.b16 %v2768
    %v2833 = vunpack.c.l.b16 %v2769
    %v2834 = vunpack.c.l.b16 %v2770
    %v2835 = vunpack.c.l.b16 %v2771
    %v2836 = vunpack.c.l.b16 %v2772
    %v2837 = vunpack.c.l.b16 %v2773
    %v2838 = vunpack.c.l.b16 %v2774
    %v2839 = vunpack.c.l.b16 %v2775
    %v2840 = vunpack.c.l.b16 %v2776
    %v2841 = vunpack.c.l.b16 %v2777
    %v2842 = vunpack.c.l.b16 %v2778
    %v2843 = vpack.c.b16 %v2812, %v2811
    %v2844 = vpack.c.b16 %v2814, %v2813
    %v2845 = vpack.c.b16 %v2816, %v2815
    %v2846 = vpack.c.b16 %v2818, %v2817
    %v2847 = vpack.c.b16 %v2820, %v2819
    %v2848 = vpack.c.b16 %v2822, %v2821
    %v2849 = vpack.c.b16 %v2824, %v2823
    %v2850 = vpack.c.b16 %v2826, %v2825
    %v2851 = vpack.c.b16 %v2828, %v2827
    %v2852 = vpack.c.b16 %v2830, %v2829
    %v2853 = vpack.c.b16 %v2832, %v2831
    %v2854 = vpack.c.b16 %v2834, %v2833
    %v2855 = vpack.c.b16 %v2836, %v2835
    %v2856 = vpack.c.b16 %v2838, %v2837
    %v2857 = vpack.c.b16 %v2840, %v2839
    %v2858 = vpack.c.b16 %v2842, %v2841
    %2875 = vmatpush.bf16.msra.mxu0 %v2850
    %2876 = vmatpush.bf16.msra.mxu0 %v2849
    %2877 = vmatpush.bf16.msra.mxu0 %v2848
    %2878 = vmatpush.bf16.msra.mxu0 %v2847
    %2879 = vmatpush.bf16.msra.mxu0 %v2846
    %2880 = vmatpush.bf16.msra.mxu0 %v2845
    %2881 = vmatpush.bf16.msra.mxu0 %v2844
    %2882 = vmatpush.bf16.msra.mxu0 %v2843
    %2883 = vmatmul.bf16.gmra.mxu0 %v2744
    %v2884 = vpop.f32.mrf.mxu0
    %v2885 = vadd.f32 0.0, %v2884
    %v2886 = vpop.f32.mrf.mxu0
    %2887 = vdwg.mxu0
    %2888 = vmatpush.bf16.msra.mxu0 %v2858
    %2889 = vmatpush.bf16.msra.mxu0 %v2857
    %2890 = vmatpush.bf16.msra.mxu0 %v2856
    %2891 = vmatpush.bf16.msra.mxu0 %v2855
    %2892 = vmatpush.bf16.msra.mxu0 %v2854
    %2893 = vmatpush.bf16.msra.mxu0 %v2853
    %2894 = vmatpush.bf16.msra.mxu0 %v2852
    %2895 = vmatpush.bf16.msra.mxu0 %v2851
    %2896 = vmatmul.bf16.gmra.mxu0 %v2745
    %v2897 = vpop.f32.mrf.mxu0
    %v2898 = vadd.f32 %v2885, %v2897
    %v2899 = vpop.f32.mrf.mxu0
    %2900 = vdwg.mxu0
    %v2901 = vadd.f32 %v2737, %v2898
    %v2902 = vrot.slane %v283, 6
    %v2903 = vrot.slane %v284, 6
    %v2906 = vmul.f32 %v571, %v2902
    %v2907 = vmul.f32 %v611, %v2903
    %v2908 = vpack.c.bf16 %v2906, %v2906
    %v2909 = vpack.c.bf16 %v2907, %v2907
    %s2910 = scalar_lea.vmem %s6, 1792
    %v2911 = vld [vmem:[%s2910] sm:$0xf]
    %v2912 = vld [vmem:[%s2910 + $0x4] sm:$0xf]
    %v2913 = vld [vmem:[%s2910 + $0x8] sm:$0xf]
    %v2914 = vld [vmem:[%s2910 + $0xc] sm:$0xf]
    %v2915 = vld [vmem:[%s2910 + $0x10] sm:$0xf]
    %v2916 = vld [vmem:[%s2910 + $0x14] sm:$0xf]
    %v2917 = vld [vmem:[%s2910 + $0x18] sm:$0xf]
    %v2918 = vld [vmem:[%s2910 + $0x1c] sm:$0xf]
    %v2919 = vld [vmem:[%s2910 + $0x20] sm:$0xf]
    %v2920 = vld [vmem:[%s2910 + $0x24] sm:$0xf]
    %v2921 = vld [vmem:[%s2910 + $0x28] sm:$0xf]
    %v2922 = vld [vmem:[%s2910 + $0x2c] sm:$0xf]
    %v2923 = vld [vmem:[%s2910 + $0x30] sm:$0xf]
    %v2924 = vld [vmem:[%s2910 + $0x34] sm:$0xf]
    %v2925 = vld [vmem:[%s2910 + $0x38] sm:$0xf]
    %v2926 = vld [vmem:[%s2910 + $0x3c] sm:$0xf]
    %v2927 = vld [vmem:[%s2910 + $0x40] sm:$0xf]
    %v2928 = vld [vmem:[%s2910 + $0x44] sm:$0xf]
    %v2929 = vld [vmem:[%s2910 + $0x48] sm:$0xf]
    %v2930 = vld [vmem:[%s2910 + $0x4c] sm:$0xf]
    %v2931 = vld [vmem:[%s2910 + $0x50] sm:$0xf]
    %v2932 = vld [vmem:[%s2910 + $0x54] sm:$0xf]
    %v2933 = vld [vmem:[%s2910 + $0x58] sm:$0xf]
    %v2934 = vld [vmem:[%s2910 + $0x5c] sm:$0xf]
    %v2935 = vld [vmem:[%s2910 + $0x60] sm:$0xf]
    %v2936 = vld [vmem:[%s2910 + $0x64] sm:$0xf]
    %v2937 = vld [vmem:[%s2910 + $0x68] sm:$0xf]
    %v2938 = vld [vmem:[%s2910 + $0x6c] sm:$0xf]
    %v2939 = vld [vmem:[%s2910 + $0x70] sm:$0xf]
    %v2940 = vld [vmem:[%s2910 + $0x74] sm:$0xf]
    %v2941 = vld [vmem:[%s2910 + $0x78] sm:$0xf]
    %v2942 = vld [vmem:[%s2910 + $0x7c] sm:$0xf]
    %v2975 = vunpack.c.l.b16 %v2911
    %v2976 = vunpack.c.l.b16 %v2912
    %v2977 = vunpack.c.l.b16 %v2913
    %v2978 = vunpack.c.l.b16 %v2914
    %v2979 = vunpack.c.l.b16 %v2915
    %v2980 = vunpack.c.l.b16 %v2916
    %v2981 = vunpack.c.l.b16 %v2917
    %v2982 = vunpack.c.l.b16 %v2918
    %v2983 = vunpack.c.l.b16 %v2919
    %v2984 = vunpack.c.l.b16 %v2920
    %v2985 = vunpack.c.l.b16 %v2921
    %v2986 = vunpack.c.l.b16 %v2922
    %v2987 = vunpack.c.l.b16 %v2923
    %v2988 = vunpack.c.l.b16 %v2924
    %v2989 = vunpack.c.l.b16 %v2925
    %v2990 = vunpack.c.l.b16 %v2926
    %v2991 = vunpack.c.l.b16 %v2927
    %v2992 = vunpack.c.l.b16 %v2928
    %v2993 = vunpack.c.l.b16 %v2929
    %v2994 = vunpack.c.l.b16 %v2930
    %v2995 = vunpack.c.l.b16 %v2931
    %v2996 = vunpack.c.l.b16 %v2932
    %v2997 = vunpack.c.l.b16 %v2933
    %v2998 = vunpack.c.l.b16 %v2934
    %v2999 = vunpack.c.l.b16 %v2935
    %v3000 = vunpack.c.l.b16 %v2936
    %v3001 = vunpack.c.l.b16 %v2937
    %v3002 = vunpack.c.l.b16 %v2938
    %v3003 = vunpack.c.l.b16 %v2939
    %v3004 = vunpack.c.l.b16 %v2940
    %v3005 = vunpack.c.l.b16 %v2941
    %v3006 = vunpack.c.l.b16 %v2942
    %v3007 = vpack.c.b16 %v2976, %v2975
    %v3008 = vpack.c.b16 %v2978, %v2977
    %v3009 = vpack.c.b16 %v2980, %v2979
    %v3010 = vpack.c.b16 %v2982, %v2981
    %v3011 = vpack.c.b16 %v2984, %v2983
    %v3012 = vpack.c.b16 %v2986, %v2985
    %v3013 = vpack.c.b16 %v2988, %v2987
    %v3014 = vpack.c.b16 %v2990, %v2989
    %v3015 = vpack.c.b16 %v2992, %v2991
    %v3016 = vpack.c.b16 %v2994, %v2993
    %v3017 = vpack.c.b16 %v2996, %v2995
    %v3018 = vpack.c.b16 %v2998, %v2997
    %v3019 = vpack.c.b16 %v3000, %v2999
    %v3020 = vpack.c.b16 %v3002, %v3001
    %v3021 = vpack.c.b16 %v3004, %v3003
    %v3022 = vpack.c.b16 %v3006, %v3005
    %3039 = vmatpush.bf16.msra.mxu0 %v3014
    %3040 = vmatpush.bf16.msra.mxu0 %v3013
    %3041 = vmatpush.bf16.msra.mxu0 %v3012
    %3042 = vmatpush.bf16.msra.mxu0 %v3011
    %3043 = vmatpush.bf16.msra.mxu0 %v3010
    %3044 = vmatpush.bf16.msra.mxu0 %v3009
    %3045 = vmatpush.bf16.msra.mxu0 %v3008
    %3046 = vmatpush.bf16.msra.mxu0 %v3007
    %3047 = vmatmul.bf16.gmra.mxu0 %v2908
    %v3048 = vpop.f32.mrf.mxu0
    %v3049 = vadd.f32 0.0, %v3048
    %v3050 = vpop.f32.mrf.mxu0
    %3051 = vdwg.mxu0
    %3052 = vmatpush.bf16.msra.mxu0 %v3022
    %3053 = vmatpush.bf16.msra.mxu0 %v3021
    %3054 = vmatpush.bf16.msra.mxu0 %v3020
    %3055 = vmatpush.bf16.msra.mxu0 %v3019
    %3056 = vmatpush.bf16.msra.mxu0 %v3018
    %3057 = vmatpush.bf16.msra.mxu0 %v3017
    %3058 = vmatpush.bf16.msra.mxu0 %v3016
    %3059 = vmatpush.bf16.msra.mxu0 %v3015
    %3060 = vmatmul.bf16.gmra.mxu0 %v2909
    %v3061 = vpop.f32.mrf.mxu0
    %v3062 = vadd.f32 %v3049, %v3061
    %v3063 = vpop.f32.mrf.mxu0
    %3064 = vdwg.mxu0
    %v3065 = vadd.f32 %v2901, %v3062
    %v3066 = vrot.slane %v283, 7
    %v3067 = vrot.slane %v284, 7
    %v3070 = vmul.f32 %v571, %v3066
    %v3071 = vmul.f32 %v611, %v3067
    %v3072 = vpack.c.bf16 %v3070, %v3070
    %v3073 = vpack.c.bf16 %v3071, %v3071
    %s3074 = scalar_lea.vmem %s6, 1920
    %v3075 = vld [vmem:[%s3074] sm:$0xf]
    %v3076 = vld [vmem:[%s3074 + $0x4] sm:$0xf]
    %v3077 = vld [vmem:[%s3074 + $0x8] sm:$0xf]
    %v3078 = vld [vmem:[%s3074 + $0xc] sm:$0xf]
    %v3079 = vld [vmem:[%s3074 + $0x10] sm:$0xf]
    %v3080 = vld [vmem:[%s3074 + $0x14] sm:$0xf]
    %v3081 = vld [vmem:[%s3074 + $0x18] sm:$0xf]
    %v3082 = vld [vmem:[%s3074 + $0x1c] sm:$0xf]
    %v3083 = vld [vmem:[%s3074 + $0x20] sm:$0xf]
    %v3084 = vld [vmem:[%s3074 + $0x24] sm:$0xf]
    %v3085 = vld [vmem:[%s3074 + $0x28] sm:$0xf]
    %v3086 = vld [vmem:[%s3074 + $0x2c] sm:$0xf]
    %v3087 = vld [vmem:[%s3074 + $0x30] sm:$0xf]
    %v3088 = vld [vmem:[%s3074 + $0x34] sm:$0xf]
    %v3089 = vld [vmem:[%s3074 + $0x38] sm:$0xf]
    %v3090 = vld [vmem:[%s3074 + $0x3c] sm:$0xf]
    %v3091 = vld [vmem:[%s3074 + $0x40] sm:$0xf]
    %v3092 = vld [vmem:[%s3074 + $0x44] sm:$0xf]
    %v3093 = vld [vmem:[%s3074 + $0x48] sm:$0xf]
    %v3094 = vld [vmem:[%s3074 + $0x4c] sm:$0xf]
    %v3095 = vld [vmem:[%s3074 + $0x50] sm:$0xf]
    %v3096 = vld [vmem:[%s3074 + $0x54] sm:$0xf]
    %v3097 = vld [vmem:[%s3074 + $0x58] sm:$0xf]
    %v3098 = vld [vmem:[%s3074 + $0x5c] sm:$0xf]
    %v3099 = vld [vmem:[%s3074 + $0x60] sm:$0xf]
    %v3100 = vld [vmem:[%s3074 + $0x64] sm:$0xf]
    %v3101 = vld [vmem:[%s3074 + $0x68] sm:$0xf]
    %v3102 = vld [vmem:[%s3074 + $0x6c] sm:$0xf]
    %v3103 = vld [vmem:[%s3074 + $0x70] sm:$0xf]
    %v3104 = vld [vmem:[%s3074 + $0x74] sm:$0xf]
    %v3105 = vld [vmem:[%s3074 + $0x78] sm:$0xf]
    %v3106 = vld [vmem:[%s3074 + $0x7c] sm:$0xf]
    %v3139 = vunpack.c.l.b16 %v3075
    %v3140 = vunpack.c.l.b16 %v3076
    %v3141 = vunpack.c.l.b16 %v3077
    %v3142 = vunpack.c.l.b16 %v3078
    %v3143 = vunpack.c.l.b16 %v3079
    %v3144 = vunpack.c.l.b16 %v3080
    %v3145 = vunpack.c.l.b16 %v3081
    %v3146 = vunpack.c.l.b16 %v3082
    %v3147 = vunpack.c.l.b16 %v3083
    %v3148 = vunpack.c.l.b16 %v3084
    %v3149 = vunpack.c.l.b16 %v3085
    %v3150 = vunpack.c.l.b16 %v3086
    %v3151 = vunpack.c.l.b16 %v3087
    %v3152 = vunpack.c.l.b16 %v3088
    %v3153 = vunpack.c.l.b16 %v3089
    %v3154 = vunpack.c.l.b16 %v3090
    %v3155 = vunpack.c.l.b16 %v3091
    %v3156 = vunpack.c.l.b16 %v3092
    %v3157 = vunpack.c.l.b16 %v3093
    %v3158 = vunpack.c.l.b16 %v3094
    %v3159 = vunpack.c.l.b16 %v3095
    %v3160 = vunpack.c.l.b16 %v3096
    %v3161 = vunpack.c.l.b16 %v3097
    %v3162 = vunpack.c.l.b16 %v3098
    %v3163 = vunpack.c.l.b16 %v3099
    %v3164 = vunpack.c.l.b16 %v3100
    %v3165 = vunpack.c.l.b16 %v3101
    %v3166 = vunpack.c.l.b16 %v3102
    %v3167 = vunpack.c.l.b16 %v3103
    %v3168 = vunpack.c.l.b16 %v3104
    %v3169 = vunpack.c.l.b16 %v3105
    %v3170 = vunpack.c.l.b16 %v3106
    %v3171 = vpack.c.b16 %v3140, %v3139
    %v3172 = vpack.c.b16 %v3142, %v3141
    %v3173 = vpack.c.b16 %v3144, %v3143
    %v3174 = vpack.c.b16 %v3146, %v3145
    %v3175 = vpack.c.b16 %v3148, %v3147
    %v3176 = vpack.c.b16 %v3150, %v3149
    %v3177 = vpack.c.b16 %v3152, %v3151
    %v3178 = vpack.c.b16 %v3154, %v3153
    %v3179 = vpack.c.b16 %v3156, %v3155
    %v3180 = vpack.c.b16 %v3158, %v3157
    %v3181 = vpack.c.b16 %v3160, %v3159
    %v3182 = vpack.c.b16 %v3162, %v3161
    %v3183 = vpack.c.b16 %v3164, %v3163
    %v3184 = vpack.c.b16 %v3166, %v3165
    %v3185 = vpack.c.b16 %v3168, %v3167
    %v3186 = vpack.c.b16 %v3170, %v3169
    %3203 = vmatpush.bf16.msra.mxu0 %v3178
    %3204 = vmatpush.bf16.msra.mxu0 %v3177
    %3205 = vmatpush.bf16.msra.mxu0 %v3176
    %3206 = vmatpush.bf16.msra.mxu0 %v3175
    %3207 = vmatpush.bf16.msra.mxu0 %v3174
    %3208 = vmatpush.bf16.msra.mxu0 %v3173
    %3209 = vmatpush.bf16.msra.mxu0 %v3172
    %3210 = vmatpush.bf16.msra.mxu0 %v3171
    %3211 = vmatmul.bf16.gmra.mxu0 %v3072
    %v3212 = vpop.f32.mrf.mxu0
    %v3213 = vadd.f32 0.0, %v3212
    %v3214 = vpop.f32.mrf.mxu0
    %3215 = vdwg.mxu0
    %3216 = vmatpush.bf16.msra.mxu0 %v3186
    %3217 = vmatpush.bf16.msra.mxu0 %v3185
    %3218 = vmatpush.bf16.msra.mxu0 %v3184
    %3219 = vmatpush.bf16.msra.mxu0 %v3183
    %3220 = vmatpush.bf16.msra.mxu0 %v3182
    %3221 = vmatpush.bf16.msra.mxu0 %v3181
    %3222 = vmatpush.bf16.msra.mxu0 %v3180
    %3223 = vmatpush.bf16.msra.mxu0 %v3179
    %3224 = vmatmul.bf16.gmra.mxu0 %v3073
    %v3225 = vpop.f32.mrf.mxu0
    %v3226 = vadd.f32 %v3213, %v3225
    %v3227 = vpop.f32.mrf.mxu0
    %3228 = vdwg.mxu0
    %v3229 = vadd.f32 %v3065, %v3226
    %v3230 = vmul.f32 %v571, %v285
    %v3231 = vmul.f32 %v611, %v286
    %v3232 = vpack.c.bf16 %v3230, %v3230
    %v3233 = vpack.c.bf16 %v3231, %v3231
    %s3234 = scalar_lea.vmem %s6, 2048
    %v3235 = vld [vmem:[%s3234] sm:$0xf]
    %v3236 = vld [vmem:[%s3234 + $0x4] sm:$0xf]
    %v3237 = vld [vmem:[%s3234 + $0x8] sm:$0xf]
    %v3238 = vld [vmem:[%s3234 + $0xc] sm:$0xf]
    %v3239 = vld [vmem:[%s3234 + $0x10] sm:$0xf]
    %v3240 = vld [vmem:[%s3234 + $0x14] sm:$0xf]
    %v3241 = vld [vmem:[%s3234 + $0x18] sm:$0xf]
    %v3242 = vld [vmem:[%s3234 + $0x1c] sm:$0xf]
    %v3243 = vld [vmem:[%s3234 + $0x20] sm:$0xf]
    %v3244 = vld [vmem:[%s3234 + $0x24] sm:$0xf]
    %v3245 = vld [vmem:[%s3234 + $0x28] sm:$0xf]
    %v3246 = vld [vmem:[%s3234 + $0x2c] sm:$0xf]
    %v3247 = vld [vmem:[%s3234 + $0x30] sm:$0xf]
    %v3248 = vld [vmem:[%s3234 + $0x34] sm:$0xf]
    %v3249 = vld [vmem:[%s3234 + $0x38] sm:$0xf]
    %v3250 = vld [vmem:[%s3234 + $0x3c] sm:$0xf]
    %v3251 = vld [vmem:[%s3234 + $0x40] sm:$0xf]
    %v3252 = vld [vmem:[%s3234 + $0x44] sm:$0xf]
    %v3253 = vld [vmem:[%s3234 + $0x48] sm:$0xf]
    %v3254 = vld [vmem:[%s3234 + $0x4c] sm:$0xf]
    %v3255 = vld [vmem:[%s3234 + $0x50] sm:$0xf]
    %v3256 = vld [vmem:[%s3234 + $0x54] sm:$0xf]
    %v3257 = vld [vmem:[%s3234 + $0x58] sm:$0xf]
    %v3258 = vld [vmem:[%s3234 + $0x5c] sm:$0xf]
    %v3259 = vld [vmem:[%s3234 + $0x60] sm:$0xf]
    %v3260 = vld [vmem:[%s3234 + $0x64] sm:$0xf]
    %v3261 = vld [vmem:[%s3234 + $0x68] sm:$0xf]
    %v3262 = vld [vmem:[%s3234 + $0x6c] sm:$0xf]
    %v3263 = vld [vmem:[%s3234 + $0x70] sm:$0xf]
    %v3264 = vld [vmem:[%s3234 + $0x74] sm:$0xf]
    %v3265 = vld [vmem:[%s3234 + $0x78] sm:$0xf]
    %v3266 = vld [vmem:[%s3234 + $0x7c] sm:$0xf]
    %v3299 = vunpack.c.l.b16 %v3235
    %v3300 = vunpack.c.l.b16 %v3236
    %v3301 = vunpack.c.l.b16 %v3237
    %v3302 = vunpack.c.l.b16 %v3238
    %v3303 = vunpack.c.l.b16 %v3239
    %v3304 = vunpack.c.l.b16 %v3240
    %v3305 = vunpack.c.l.b16 %v3241
    %v3306 = vunpack.c.l.b16 %v3242
    %v3307 = vunpack.c.l.b16 %v3243
    %v3308 = vunpack.c.l.b16 %v3244
    %v3309 = vunpack.c.l.b16 %v3245
    %v3310 = vunpack.c.l.b16 %v3246
    %v3311 = vunpack.c.l.b16 %v3247
    %v3312 = vunpack.c.l.b16 %v3248
    %v3313 = vunpack.c.l.b16 %v3249
    %v3314 = vunpack.c.l.b16 %v3250
    %v3315 = vunpack.c.l.b16 %v3251
    %v3316 = vunpack.c.l.b16 %v3252
    %v3317 = vunpack.c.l.b16 %v3253
    %v3318 = vunpack.c.l.b16 %v3254
    %v3319 = vunpack.c.l.b16 %v3255
    %v3320 = vunpack.c.l.b16 %v3256
    %v3321 = vunpack.c.l.b16 %v3257
    %v3322 = vunpack.c.l.b16 %v3258
    %v3323 = vunpack.c.l.b16 %v3259
    %v3324 = vunpack.c.l.b16 %v3260
    %v3325 = vunpack.c.l.b16 %v3261
    %v3326 = vunpack.c.l.b16 %v3262
    %v3327 = vunpack.c.l.b16 %v3263
    %v3328 = vunpack.c.l.b16 %v3264
    %v3329 = vunpack.c.l.b16 %v3265
    %v3330 = vunpack.c.l.b16 %v3266
    %v3331 = vpack.c.b16 %v3300, %v3299
    %v3332 = vpack.c.b16 %v3302, %v3301
    %v3333 = vpack.c.b16 %v3304, %v3303
    %v3334 = vpack.c.b16 %v3306, %v3305
    %v3335 = vpack.c.b16 %v3308, %v3307
    %v3336 = vpack.c.b16 %v3310, %v3309
    %v3337 = vpack.c.b16 %v3312, %v3311
    %v3338 = vpack.c.b16 %v3314, %v3313
    %v3339 = vpack.c.b16 %v3316, %v3315
    %v3340 = vpack.c.b16 %v3318, %v3317
    %v3341 = vpack.c.b16 %v3320, %v3319
    %v3342 = vpack.c.b16 %v3322, %v3321
    %v3343 = vpack.c.b16 %v3324, %v3323
    %v3344 = vpack.c.b16 %v3326, %v3325
    %v3345 = vpack.c.b16 %v3328, %v3327
    %v3346 = vpack.c.b16 %v3330, %v3329
    %3363 = vmatpush.bf16.msra.mxu0 %v3338
    %3364 = vmatpush.bf16.msra.mxu0 %v3337
    %3365 = vmatpush.bf16.msra.mxu0 %v3336
    %3366 = vmatpush.bf16.msra.mxu0 %v3335
    %3367 = vmatpush.bf16.msra.mxu0 %v3334
    %3368 = vmatpush.bf16.msra.mxu0 %v3333
    %3369 = vmatpush.bf16.msra.mxu0 %v3332
    %3370 = vmatpush.bf16.msra.mxu0 %v3331
    %3371 = vmatmul.bf16.gmra.mxu0 %v3232
    %v3372 = vpop.f32.mrf.mxu0
    %v3373 = vadd.f32 0.0, %v3372
    %v3374 = vpop.f32.mrf.mxu0
    %3375 = vdwg.mxu0
    %3376 = vmatpush.bf16.msra.mxu0 %v3346
    %3377 = vmatpush.bf16.msra.mxu0 %v3345
    %3378 = vmatpush.bf16.msra.mxu0 %v3344
    %3379 = vmatpush.bf16.msra.mxu0 %v3343
    %3380 = vmatpush.bf16.msra.mxu0 %v3342
    %3381 = vmatpush.bf16.msra.mxu0 %v3341
    %3382 = vmatpush.bf16.msra.mxu0 %v3340
    %3383 = vmatpush.bf16.msra.mxu0 %v3339
    %3384 = vmatmul.bf16.gmra.mxu0 %v3233
    %v3385 = vpop.f32.mrf.mxu0
    %v3386 = vadd.f32 %v3373, %v3385
    %v3387 = vpop.f32.mrf.mxu0
    %3388 = vdwg.mxu0
    %v3389 = vadd.f32 %v3229, %v3386
    %v3392 = vrot.slane %v285, 1
    %v3393 = vrot.slane %v286, 1
    %v3396 = vmul.f32 %v571, %v3392
    %v3397 = vmul.f32 %v611, %v3393
    %v3398 = vpack.c.bf16 %v3396, %v3396
    %v3399 = vpack.c.bf16 %v3397, %v3397
    %s3400 = scalar_lea.vmem %s6, 2176
    %v3401 = vld [vmem:[%s3400] sm:$0xf]
    %v3402 = vld [vmem:[%s3400 + $0x4] sm:$0xf]
    %v3403 = vld [vmem:[%s3400 + $0x8] sm:$0xf]
    %v3404 = vld [vmem:[%s3400 + $0xc] sm:$0xf]
    %v3405 = vld [vmem:[%s3400 + $0x10] sm:$0xf]
    %v3406 = vld [vmem:[%s3400 + $0x14] sm:$0xf]
    %v3407 = vld [vmem:[%s3400 + $0x18] sm:$0xf]
    %v3408 = vld [vmem:[%s3400 + $0x1c] sm:$0xf]
    %v3409 = vld [vmem:[%s3400 + $0x20] sm:$0xf]
    %v3410 = vld [vmem:[%s3400 + $0x24] sm:$0xf]
    %v3411 = vld [vmem:[%s3400 + $0x28] sm:$0xf]
    %v3412 = vld [vmem:[%s3400 + $0x2c] sm:$0xf]
    %v3413 = vld [vmem:[%s3400 + $0x30] sm:$0xf]
    %v3414 = vld [vmem:[%s3400 + $0x34] sm:$0xf]
    %v3415 = vld [vmem:[%s3400 + $0x38] sm:$0xf]
    %v3416 = vld [vmem:[%s3400 + $0x3c] sm:$0xf]
    %v3417 = vld [vmem:[%s3400 + $0x40] sm:$0xf]
    %v3418 = vld [vmem:[%s3400 + $0x44] sm:$0xf]
    %v3419 = vld [vmem:[%s3400 + $0x48] sm:$0xf]
    %v3420 = vld [vmem:[%s3400 + $0x4c] sm:$0xf]
    %v3421 = vld [vmem:[%s3400 + $0x50] sm:$0xf]
    %v3422 = vld [vmem:[%s3400 + $0x54] sm:$0xf]
    %v3423 = vld [vmem:[%s3400 + $0x58] sm:$0xf]
    %v3424 = vld [vmem:[%s3400 + $0x5c] sm:$0xf]
    %v3425 = vld [vmem:[%s3400 + $0x60] sm:$0xf]
    %v3426 = vld [vmem:[%s3400 + $0x64] sm:$0xf]
    %v3427 = vld [vmem:[%s3400 + $0x68] sm:$0xf]
    %v3428 = vld [vmem:[%s3400 + $0x6c] sm:$0xf]
    %v3429 = vld [vmem:[%s3400 + $0x70] sm:$0xf]
    %v3430 = vld [vmem:[%s3400 + $0x74] sm:$0xf]
    %v3431 = vld [vmem:[%s3400 + $0x78] sm:$0xf]
    %v3432 = vld [vmem:[%s3400 + $0x7c] sm:$0xf]
    %v3465 = vunpack.c.l.b16 %v3401
    %v3466 = vunpack.c.l.b16 %v3402
    %v3467 = vunpack.c.l.b16 %v3403
    %v3468 = vunpack.c.l.b16 %v3404
    %v3469 = vunpack.c.l.b16 %v3405
    %v3470 = vunpack.c.l.b16 %v3406
    %v3471 = vunpack.c.l.b16 %v3407
    %v3472 = vunpack.c.l.b16 %v3408
    %v3473 = vunpack.c.l.b16 %v3409
    %v3474 = vunpack.c.l.b16 %v3410
    %v3475 = vunpack.c.l.b16 %v3411
    %v3476 = vunpack.c.l.b16 %v3412
    %v3477 = vunpack.c.l.b16 %v3413
    %v3478 = vunpack.c.l.b16 %v3414
    %v3479 = vunpack.c.l.b16 %v3415
    %v3480 = vunpack.c.l.b16 %v3416
    %v3481 = vunpack.c.l.b16 %v3417
    %v3482 = vunpack.c.l.b16 %v3418
    %v3483 = vunpack.c.l.b16 %v3419
    %v3484 = vunpack.c.l.b16 %v3420
    %v3485 = vunpack.c.l.b16 %v3421
    %v3486 = vunpack.c.l.b16 %v3422
    %v3487 = vunpack.c.l.b16 %v3423
    %v3488 = vunpack.c.l.b16 %v3424
    %v3489 = vunpack.c.l.b16 %v3425
    %v3490 = vunpack.c.l.b16 %v3426
    %v3491 = vunpack.c.l.b16 %v3427
    %v3492 = vunpack.c.l.b16 %v3428
    %v3493 = vunpack.c.l.b16 %v3429
    %v3494 = vunpack.c.l.b16 %v3430
    %v3495 = vunpack.c.l.b16 %v3431
    %v3496 = vunpack.c.l.b16 %v3432
    %v3497 = vpack.c.b16 %v3466, %v3465
    %v3498 = vpack.c.b16 %v3468, %v3467
    %v3499 = vpack.c.b16 %v3470, %v3469
    %v3500 = vpack.c.b16 %v3472, %v3471
    %v3501 = vpack.c.b16 %v3474, %v3473
    %v3502 = vpack.c.b16 %v3476, %v3475
    %v3503 = vpack.c.b16 %v3478, %v3477
    %v3504 = vpack.c.b16 %v3480, %v3479
    %v3505 = vpack.c.b16 %v3482, %v3481
    %v3506 = vpack.c.b16 %v3484, %v3483
    %v3507 = vpack.c.b16 %v3486, %v3485
    %v3508 = vpack.c.b16 %v3488, %v3487
    %v3509 = vpack.c.b16 %v3490, %v3489
    %v3510 = vpack.c.b16 %v3492, %v3491
    %v3511 = vpack.c.b16 %v3494, %v3493
    %v3512 = vpack.c.b16 %v3496, %v3495
    %3529 = vmatpush.bf16.msra.mxu0 %v3504
    %3530 = vmatpush.bf16.msra.mxu0 %v3503
    %3531 = vmatpush.bf16.msra.mxu0 %v3502
    %3532 = vmatpush.bf16.msra.mxu0 %v3501
    %3533 = vmatpush.bf16.msra.mxu0 %v3500
    %3534 = vmatpush.bf16.msra.mxu0 %v3499
    %3535 = vmatpush.bf16.msra.mxu0 %v3498
    %3536 = vmatpush.bf16.msra.mxu0 %v3497
    %3537 = vmatmul.bf16.gmra.mxu0 %v3398
    %v3538 = vpop.f32.mrf.mxu0
    %v3539 = vadd.f32 0.0, %v3538
    %v3540 = vpop.f32.mrf.mxu0
    %3541 = vdwg.mxu0
    %3542 = vmatpush.bf16.msra.mxu0 %v3512
    %3543 = vmatpush.bf16.msra.mxu0 %v3511
    %3544 = vmatpush.bf16.msra.mxu0 %v3510
    %3545 = vmatpush.bf16.msra.mxu0 %v3509
    %3546 = vmatpush.bf16.msra.mxu0 %v3508
    %3547 = vmatpush.bf16.msra.mxu0 %v3507
    %3548 = vmatpush.bf16.msra.mxu0 %v3506
    %3549 = vmatpush.bf16.msra.mxu0 %v3505
    %3550 = vmatmul.bf16.gmra.mxu0 %v3399
    %v3551 = vpop.f32.mrf.mxu0
    %v3552 = vadd.f32 %v3539, %v3551
    %v3553 = vpop.f32.mrf.mxu0
    %3554 = vdwg.mxu0
    %v3555 = vadd.f32 %v3389, %v3552
    %v3556 = vrot.slane %v285, 2
    %v3557 = vrot.slane %v286, 2
    %v3560 = vmul.f32 %v571, %v3556
    %v3561 = vmul.f32 %v611, %v3557
    %v3562 = vpack.c.bf16 %v3560, %v3560
    %v3563 = vpack.c.bf16 %v3561, %v3561
    %s3564 = scalar_lea.vmem %s6, 2304
    %v3565 = vld [vmem:[%s3564] sm:$0xf]
    %v3566 = vld [vmem:[%s3564 + $0x4] sm:$0xf]
    %v3567 = vld [vmem:[%s3564 + $0x8] sm:$0xf]
    %v3568 = vld [vmem:[%s3564 + $0xc] sm:$0xf]
    %v3569 = vld [vmem:[%s3564 + $0x10] sm:$0xf]
    %v3570 = vld [vmem:[%s3564 + $0x14] sm:$0xf]
    %v3571 = vld [vmem:[%s3564 + $0x18] sm:$0xf]
    %v3572 = vld [vmem:[%s3564 + $0x1c] sm:$0xf]
    %v3573 = vld [vmem:[%s3564 + $0x20] sm:$0xf]
    %v3574 = vld [vmem:[%s3564 + $0x24] sm:$0xf]
    %v3575 = vld [vmem:[%s3564 + $0x28] sm:$0xf]
    %v3576 = vld [vmem:[%s3564 + $0x2c] sm:$0xf]
    %v3577 = vld [vmem:[%s3564 + $0x30] sm:$0xf]
    %v3578 = vld [vmem:[%s3564 + $0x34] sm:$0xf]
    %v3579 = vld [vmem:[%s3564 + $0x38] sm:$0xf]
    %v3580 = vld [vmem:[%s3564 + $0x3c] sm:$0xf]
    %v3581 = vld [vmem:[%s3564 + $0x40] sm:$0xf]
    %v3582 = vld [vmem:[%s3564 + $0x44] sm:$0xf]
    %v3583 = vld [vmem:[%s3564 + $0x48] sm:$0xf]
    %v3584 = vld [vmem:[%s3564 + $0x4c] sm:$0xf]
    %v3585 = vld [vmem:[%s3564 + $0x50] sm:$0xf]
    %v3586 = vld [vmem:[%s3564 + $0x54] sm:$0xf]
    %v3587 = vld [vmem:[%s3564 + $0x58] sm:$0xf]
    %v3588 = vld [vmem:[%s3564 + $0x5c] sm:$0xf]
    %v3589 = vld [vmem:[%s3564 + $0x60] sm:$0xf]
    %v3590 = vld [vmem:[%s3564 + $0x64] sm:$0xf]
    %v3591 = vld [vmem:[%s3564 + $0x68] sm:$0xf]
    %v3592 = vld [vmem:[%s3564 + $0x6c] sm:$0xf]
    %v3593 = vld [vmem:[%s3564 + $0x70] sm:$0xf]
    %v3594 = vld [vmem:[%s3564 + $0x74] sm:$0xf]
    %v3595 = vld [vmem:[%s3564 + $0x78] sm:$0xf]
    %v3596 = vld [vmem:[%s3564 + $0x7c] sm:$0xf]
    %v3629 = vunpack.c.l.b16 %v3565
    %v3630 = vunpack.c.l.b16 %v3566
    %v3631 = vunpack.c.l.b16 %v3567
    %v3632 = vunpack.c.l.b16 %v3568
    %v3633 = vunpack.c.l.b16 %v3569
    %v3634 = vunpack.c.l.b16 %v3570
    %v3635 = vunpack.c.l.b16 %v3571
    %v3636 = vunpack.c.l.b16 %v3572
    %v3637 = vunpack.c.l.b16 %v3573
    %v3638 = vunpack.c.l.b16 %v3574
    %v3639 = vunpack.c.l.b16 %v3575
    %v3640 = vunpack.c.l.b16 %v3576
    %v3641 = vunpack.c.l.b16 %v3577
    %v3642 = vunpack.c.l.b16 %v3578
    %v3643 = vunpack.c.l.b16 %v3579
    %v3644 = vunpack.c.l.b16 %v3580
    %v3645 = vunpack.c.l.b16 %v3581
    %v3646 = vunpack.c.l.b16 %v3582
    %v3647 = vunpack.c.l.b16 %v3583
    %v3648 = vunpack.c.l.b16 %v3584
    %v3649 = vunpack.c.l.b16 %v3585
    %v3650 = vunpack.c.l.b16 %v3586
    %v3651 = vunpack.c.l.b16 %v3587
    %v3652 = vunpack.c.l.b16 %v3588
    %v3653 = vunpack.c.l.b16 %v3589
    %v3654 = vunpack.c.l.b16 %v3590
    %v3655 = vunpack.c.l.b16 %v3591
    %v3656 = vunpack.c.l.b16 %v3592
    %v3657 = vunpack.c.l.b16 %v3593
    %v3658 = vunpack.c.l.b16 %v3594
    %v3659 = vunpack.c.l.b16 %v3595
    %v3660 = vunpack.c.l.b16 %v3596
    %v3661 = vpack.c.b16 %v3630, %v3629
    %v3662 = vpack.c.b16 %v3632, %v3631
    %v3663 = vpack.c.b16 %v3634, %v3633
    %v3664 = vpack.c.b16 %v3636, %v3635
    %v3665 = vpack.c.b16 %v3638, %v3637
    %v3666 = vpack.c.b16 %v3640, %v3639
    %v3667 = vpack.c.b16 %v3642, %v3641
    %v3668 = vpack.c.b16 %v3644, %v3643
    %v3669 = vpack.c.b16 %v3646, %v3645
    %v3670 = vpack.c.b16 %v3648, %v3647
    %v3671 = vpack.c.b16 %v3650, %v3649
    %v3672 = vpack.c.b16 %v3652, %v3651
    %v3673 = vpack.c.b16 %v3654, %v3653
    %v3674 = vpack.c.b16 %v3656, %v3655
    %v3675 = vpack.c.b16 %v3658, %v3657
    %v3676 = vpack.c.b16 %v3660, %v3659
    %3693 = vmatpush.bf16.msra.mxu0 %v3668
    %3694 = vmatpush.bf16.msra.mxu0 %v3667
    %3695 = vmatpush.bf16.msra.mxu0 %v3666
    %3696 = vmatpush.bf16.msra.mxu0 %v3665
    %3697 = vmatpush.bf16.msra.mxu0 %v3664
    %3698 = vmatpush.bf16.msra.mxu0 %v3663
    %3699 = vmatpush.bf16.msra.mxu0 %v3662
    %3700 = vmatpush.bf16.msra.mxu0 %v3661
    %3701 = vmatmul.bf16.gmra.mxu0 %v3562
    %v3702 = vpop.f32.mrf.mxu0
    %v3703 = vadd.f32 0.0, %v3702
    %v3704 = vpop.f32.mrf.mxu0
    %3705 = vdwg.mxu0
    %3706 = vmatpush.bf16.msra.mxu0 %v3676
    %3707 = vmatpush.bf16.msra.mxu0 %v3675
    %3708 = vmatpush.bf16.msra.mxu0 %v3674
    %3709 = vmatpush.bf16.msra.mxu0 %v3673
    %3710 = vmatpush.bf16.msra.mxu0 %v3672
    %3711 = vmatpush.bf16.msra.mxu0 %v3671
    %3712 = vmatpush.bf16.msra.mxu0 %v3670
    %3713 = vmatpush.bf16.msra.mxu0 %v3669
    %3714 = vmatmul.bf16.gmra.mxu0 %v3563
    %v3715 = vpop.f32.mrf.mxu0
    %v3716 = vadd.f32 %v3703, %v3715
    %v3717 = vpop.f32.mrf.mxu0
    %3718 = vdwg.mxu0
    %v3719 = vadd.f32 %v3555, %v3716
    %v3720 = vrot.slane %v285, 3
    %v3721 = vrot.slane %v286, 3
    %v3724 = vmul.f32 %v571, %v3720
    %v3725 = vmul.f32 %v611, %v3721
    %v3726 = vpack.c.bf16 %v3724, %v3724
    %v3727 = vpack.c.bf16 %v3725, %v3725
    %s3728 = scalar_lea.vmem %s6, 2432
    %v3729 = vld [vmem:[%s3728] sm:$0xf]
    %v3730 = vld [vmem:[%s3728 + $0x4] sm:$0xf]
    %v3731 = vld [vmem:[%s3728 + $0x8] sm:$0xf]
    %v3732 = vld [vmem:[%s3728 + $0xc] sm:$0xf]
    %v3733 = vld [vmem:[%s3728 + $0x10] sm:$0xf]
    %v3734 = vld [vmem:[%s3728 + $0x14] sm:$0xf]
    %v3735 = vld [vmem:[%s3728 + $0x18] sm:$0xf]
    %v3736 = vld [vmem:[%s3728 + $0x1c] sm:$0xf]
    %v3737 = vld [vmem:[%s3728 + $0x20] sm:$0xf]
    %v3738 = vld [vmem:[%s3728 + $0x24] sm:$0xf]
    %v3739 = vld [vmem:[%s3728 + $0x28] sm:$0xf]
    %v3740 = vld [vmem:[%s3728 + $0x2c] sm:$0xf]
    %v3741 = vld [vmem:[%s3728 + $0x30] sm:$0xf]
    %v3742 = vld [vmem:[%s3728 + $0x34] sm:$0xf]
    %v3743 = vld [vmem:[%s3728 + $0x38] sm:$0xf]
    %v3744 = vld [vmem:[%s3728 + $0x3c] sm:$0xf]
    %v3745 = vld [vmem:[%s3728 + $0x40] sm:$0xf]
    %v3746 = vld [vmem:[%s3728 + $0x44] sm:$0xf]
    %v3747 = vld [vmem:[%s3728 + $0x48] sm:$0xf]
    %v3748 = vld [vmem:[%s3728 + $0x4c] sm:$0xf]
    %v3749 = vld [vmem:[%s3728 + $0x50] sm:$0xf]
    %v3750 = vld [vmem:[%s3728 + $0x54] sm:$0xf]
    %v3751 = vld [vmem:[%s3728 + $0x58] sm:$0xf]
    %v3752 = vld [vmem:[%s3728 + $0x5c] sm:$0xf]
    %v3753 = vld [vmem:[%s3728 + $0x60] sm:$0xf]
    %v3754 = vld [vmem:[%s3728 + $0x64] sm:$0xf]
    %v3755 = vld [vmem:[%s3728 + $0x68] sm:$0xf]
    %v3756 = vld [vmem:[%s3728 + $0x6c] sm:$0xf]
    %v3757 = vld [vmem:[%s3728 + $0x70] sm:$0xf]
    %v3758 = vld [vmem:[%s3728 + $0x74] sm:$0xf]
    %v3759 = vld [vmem:[%s3728 + $0x78] sm:$0xf]
    %v3760 = vld [vmem:[%s3728 + $0x7c] sm:$0xf]
    %v3793 = vunpack.c.l.b16 %v3729
    %v3794 = vunpack.c.l.b16 %v3730
    %v3795 = vunpack.c.l.b16 %v3731
    %v3796 = vunpack.c.l.b16 %v3732
    %v3797 = vunpack.c.l.b16 %v3733
    %v3798 = vunpack.c.l.b16 %v3734
    %v3799 = vunpack.c.l.b16 %v3735
    %v3800 = vunpack.c.l.b16 %v3736
    %v3801 = vunpack.c.l.b16 %v3737
    %v3802 = vunpack.c.l.b16 %v3738
    %v3803 = vunpack.c.l.b16 %v3739
    %v3804 = vunpack.c.l.b16 %v3740
    %v3805 = vunpack.c.l.b16 %v3741
    %v3806 = vunpack.c.l.b16 %v3742
    %v3807 = vunpack.c.l.b16 %v3743
    %v3808 = vunpack.c.l.b16 %v3744
    %v3809 = vunpack.c.l.b16 %v3745
    %v3810 = vunpack.c.l.b16 %v3746
    %v3811 = vunpack.c.l.b16 %v3747
    %v3812 = vunpack.c.l.b16 %v3748
    %v3813 = vunpack.c.l.b16 %v3749
    %v3814 = vunpack.c.l.b16 %v3750
    %v3815 = vunpack.c.l.b16 %v3751
    %v3816 = vunpack.c.l.b16 %v3752
    %v3817 = vunpack.c.l.b16 %v3753
    %v3818 = vunpack.c.l.b16 %v3754
    %v3819 = vunpack.c.l.b16 %v3755
    %v3820 = vunpack.c.l.b16 %v3756
    %v3821 = vunpack.c.l.b16 %v3757
    %v3822 = vunpack.c.l.b16 %v3758
    %v3823 = vunpack.c.l.b16 %v3759
    %v3824 = vunpack.c.l.b16 %v3760
    %v3825 = vpack.c.b16 %v3794, %v3793
    %v3826 = vpack.c.b16 %v3796, %v3795
    %v3827 = vpack.c.b16 %v3798, %v3797
    %v3828 = vpack.c.b16 %v3800, %v3799
    %v3829 = vpack.c.b16 %v3802, %v3801
    %v3830 = vpack.c.b16 %v3804, %v3803
    %v3831 = vpack.c.b16 %v3806, %v3805
    %v3832 = vpack.c.b16 %v3808, %v3807
    %v3833 = vpack.c.b16 %v3810, %v3809
    %v3834 = vpack.c.b16 %v3812, %v3811
    %v3835 = vpack.c.b16 %v3814, %v3813
    %v3836 = vpack.c.b16 %v3816, %v3815
    %v3837 = vpack.c.b16 %v3818, %v3817
    %v3838 = vpack.c.b16 %v3820, %v3819
    %v3839 = vpack.c.b16 %v3822, %v3821
    %v3840 = vpack.c.b16 %v3824, %v3823
    %3857 = vmatpush.bf16.msra.mxu0 %v3832
    %3858 = vmatpush.bf16.msra.mxu0 %v3831
    %3859 = vmatpush.bf16.msra.mxu0 %v3830
    %3860 = vmatpush.bf16.msra.mxu0 %v3829
    %3861 = vmatpush.bf16.msra.mxu0 %v3828
    %3862 = vmatpush.bf16.msra.mxu0 %v3827
    %3863 = vmatpush.bf16.msra.mxu0 %v3826
    %3864 = vmatpush.bf16.msra.mxu0 %v3825
    %3865 = vmatmul.bf16.gmra.mxu0 %v3726
    %v3866 = vpop.f32.mrf.mxu0
    %v3867 = vadd.f32 0.0, %v3866
    %v3868 = vpop.f32.mrf.mxu0
    %3869 = vdwg.mxu0
    %3870 = vmatpush.bf16.msra.mxu0 %v3840
    %3871 = vmatpush.bf16.msra.mxu0 %v3839
    %3872 = vmatpush.bf16.msra.mxu0 %v3838
    %3873 = vmatpush.bf16.msra.mxu0 %v3837
    %3874 = vmatpush.bf16.msra.mxu0 %v3836
    %3875 = vmatpush.bf16.msra.mxu0 %v3835
    %3876 = vmatpush.bf16.msra.mxu0 %v3834
    %3877 = vmatpush.bf16.msra.mxu0 %v3833
    %3878 = vmatmul.bf16.gmra.mxu0 %v3727
    %v3879 = vpop.f32.mrf.mxu0
    %v3880 = vadd.f32 %v3867, %v3879
    %v3881 = vpop.f32.mrf.mxu0
    %3882 = vdwg.mxu0
    %v3883 = vadd.f32 %v3719, %v3880
    %v3884 = vrot.slane %v285, 4
    %v3885 = vrot.slane %v286, 4
    %v3888 = vmul.f32 %v571, %v3884
    %v3889 = vmul.f32 %v611, %v3885
    %v3890 = vpack.c.bf16 %v3888, %v3888
    %v3891 = vpack.c.bf16 %v3889, %v3889
    %s3892 = scalar_lea.vmem %s6, 2560
    %v3893 = vld [vmem:[%s3892] sm:$0xf]
    %v3894 = vld [vmem:[%s3892 + $0x4] sm:$0xf]
    %v3895 = vld [vmem:[%s3892 + $0x8] sm:$0xf]
    %v3896 = vld [vmem:[%s3892 + $0xc] sm:$0xf]
    %v3897 = vld [vmem:[%s3892 + $0x10] sm:$0xf]
    %v3898 = vld [vmem:[%s3892 + $0x14] sm:$0xf]
    %v3899 = vld [vmem:[%s3892 + $0x18] sm:$0xf]
    %v3900 = vld [vmem:[%s3892 + $0x1c] sm:$0xf]
    %v3901 = vld [vmem:[%s3892 + $0x20] sm:$0xf]
    %v3902 = vld [vmem:[%s3892 + $0x24] sm:$0xf]
    %v3903 = vld [vmem:[%s3892 + $0x28] sm:$0xf]
    %v3904 = vld [vmem:[%s3892 + $0x2c] sm:$0xf]
    %v3905 = vld [vmem:[%s3892 + $0x30] sm:$0xf]
    %v3906 = vld [vmem:[%s3892 + $0x34] sm:$0xf]
    %v3907 = vld [vmem:[%s3892 + $0x38] sm:$0xf]
    %v3908 = vld [vmem:[%s3892 + $0x3c] sm:$0xf]
    %v3909 = vld [vmem:[%s3892 + $0x40] sm:$0xf]
    %v3910 = vld [vmem:[%s3892 + $0x44] sm:$0xf]
    %v3911 = vld [vmem:[%s3892 + $0x48] sm:$0xf]
    %v3912 = vld [vmem:[%s3892 + $0x4c] sm:$0xf]
    %v3913 = vld [vmem:[%s3892 + $0x50] sm:$0xf]
    %v3914 = vld [vmem:[%s3892 + $0x54] sm:$0xf]
    %v3915 = vld [vmem:[%s3892 + $0x58] sm:$0xf]
    %v3916 = vld [vmem:[%s3892 + $0x5c] sm:$0xf]
    %v3917 = vld [vmem:[%s3892 + $0x60] sm:$0xf]
    %v3918 = vld [vmem:[%s3892 + $0x64] sm:$0xf]
    %v3919 = vld [vmem:[%s3892 + $0x68] sm:$0xf]
    %v3920 = vld [vmem:[%s3892 + $0x6c] sm:$0xf]
    %v3921 = vld [vmem:[%s3892 + $0x70] sm:$0xf]
    %v3922 = vld [vmem:[%s3892 + $0x74] sm:$0xf]
    %v3923 = vld [vmem:[%s3892 + $0x78] sm:$0xf]
    %v3924 = vld [vmem:[%s3892 + $0x7c] sm:$0xf]
    %v3957 = vunpack.c.l.b16 %v3893
    %v3958 = vunpack.c.l.b16 %v3894
    %v3959 = vunpack.c.l.b16 %v3895
    %v3960 = vunpack.c.l.b16 %v3896
    %v3961 = vunpack.c.l.b16 %v3897
    %v3962 = vunpack.c.l.b16 %v3898
    %v3963 = vunpack.c.l.b16 %v3899
    %v3964 = vunpack.c.l.b16 %v3900
    %v3965 = vunpack.c.l.b16 %v3901
    %v3966 = vunpack.c.l.b16 %v3902
    %v3967 = vunpack.c.l.b16 %v3903
    %v3968 = vunpack.c.l.b16 %v3904
    %v3969 = vunpack.c.l.b16 %v3905
    %v3970 = vunpack.c.l.b16 %v3906
    %v3971 = vunpack.c.l.b16 %v3907
    %v3972 = vunpack.c.l.b16 %v3908
    %v3973 = vunpack.c.l.b16 %v3909
    %v3974 = vunpack.c.l.b16 %v3910
    %v3975 = vunpack.c.l.b16 %v3911
    %v3976 = vunpack.c.l.b16 %v3912
    %v3977 = vunpack.c.l.b16 %v3913
    %v3978 = vunpack.c.l.b16 %v3914
    %v3979 = vunpack.c.l.b16 %v3915
    %v3980 = vunpack.c.l.b16 %v3916
    %v3981 = vunpack.c.l.b16 %v3917
    %v3982 = vunpack.c.l.b16 %v3918
    %v3983 = vunpack.c.l.b16 %v3919
    %v3984 = vunpack.c.l.b16 %v3920
    %v3985 = vunpack.c.l.b16 %v3921
    %v3986 = vunpack.c.l.b16 %v3922
    %v3987 = vunpack.c.l.b16 %v3923
    %v3988 = vunpack.c.l.b16 %v3924
    %v3989 = vpack.c.b16 %v3958, %v3957
    %v3990 = vpack.c.b16 %v3960, %v3959
    %v3991 = vpack.c.b16 %v3962, %v3961
    %v3992 = vpack.c.b16 %v3964, %v3963
    %v3993 = vpack.c.b16 %v3966, %v3965
    %v3994 = vpack.c.b16 %v3968, %v3967
    %v3995 = vpack.c.b16 %v3970, %v3969
    %v3996 = vpack.c.b16 %v3972, %v3971
    %v3997 = vpack.c.b16 %v3974, %v3973
    %v3998 = vpack.c.b16 %v3976, %v3975
    %v3999 = vpack.c.b16 %v3978, %v3977
    %v4000 = vpack.c.b16 %v3980, %v3979
    %v4001 = vpack.c.b16 %v3982, %v3981
    %v4002 = vpack.c.b16 %v3984, %v3983
    %v4003 = vpack.c.b16 %v3986, %v3985
    %v4004 = vpack.c.b16 %v3988, %v3987
    %4021 = vmatpush.bf16.msra.mxu0 %v3996
    %4022 = vmatpush.bf16.msra.mxu0 %v3995
    %4023 = vmatpush.bf16.msra.mxu0 %v3994
    %4024 = vmatpush.bf16.msra.mxu0 %v3993
    %4025 = vmatpush.bf16.msra.mxu0 %v3992
    %4026 = vmatpush.bf16.msra.mxu0 %v3991
    %4027 = vmatpush.bf16.msra.mxu0 %v3990
    %4028 = vmatpush.bf16.msra.mxu0 %v3989
    %4029 = vmatmul.bf16.gmra.mxu0 %v3890
    %v4030 = vpop.f32.mrf.mxu0
    %v4031 = vadd.f32 0.0, %v4030
    %v4032 = vpop.f32.mrf.mxu0
    %4033 = vdwg.mxu0
    %4034 = vmatpush.bf16.msra.mxu0 %v4004
    %4035 = vmatpush.bf16.msra.mxu0 %v4003
    %4036 = vmatpush.bf16.msra.mxu0 %v4002
    %4037 = vmatpush.bf16.msra.mxu0 %v4001
    %4038 = vmatpush.bf16.msra.mxu0 %v4000
    %4039 = vmatpush.bf16.msra.mxu0 %v3999
    %4040 = vmatpush.bf16.msra.mxu0 %v3998
    %4041 = vmatpush.bf16.msra.mxu0 %v3997
    %4042 = vmatmul.bf16.gmra.mxu0 %v3891
    %v4043 = vpop.f32.mrf.mxu0
    %v4044 = vadd.f32 %v4031, %v4043
    %v4045 = vpop.f32.mrf.mxu0
    %4046 = vdwg.mxu0
    %v4047 = vadd.f32 %v3883, %v4044
    %v4048 = vrot.slane %v285, 5
    %v4049 = vrot.slane %v286, 5
    %v4052 = vmul.f32 %v571, %v4048
    %v4053 = vmul.f32 %v611, %v4049
    %v4054 = vpack.c.bf16 %v4052, %v4052
    %v4055 = vpack.c.bf16 %v4053, %v4053
    %s4056 = scalar_lea.vmem %s6, 2688
    %v4057 = vld [vmem:[%s4056] sm:$0xf]
    %v4058 = vld [vmem:[%s4056 + $0x4] sm:$0xf]
    %v4059 = vld [vmem:[%s4056 + $0x8] sm:$0xf]
    %v4060 = vld [vmem:[%s4056 + $0xc] sm:$0xf]
    %v4061 = vld [vmem:[%s4056 + $0x10] sm:$0xf]
    %v4062 = vld [vmem:[%s4056 + $0x14] sm:$0xf]
    %v4063 = vld [vmem:[%s4056 + $0x18] sm:$0xf]
    %v4064 = vld [vmem:[%s4056 + $0x1c] sm:$0xf]
    %v4065 = vld [vmem:[%s4056 + $0x20] sm:$0xf]
    %v4066 = vld [vmem:[%s4056 + $0x24] sm:$0xf]
    %v4067 = vld [vmem:[%s4056 + $0x28] sm:$0xf]
    %v4068 = vld [vmem:[%s4056 + $0x2c] sm:$0xf]
    %v4069 = vld [vmem:[%s4056 + $0x30] sm:$0xf]
    %v4070 = vld [vmem:[%s4056 + $0x34] sm:$0xf]
    %v4071 = vld [vmem:[%s4056 + $0x38] sm:$0xf]
    %v4072 = vld [vmem:[%s4056 + $0x3c] sm:$0xf]
    %v4073 = vld [vmem:[%s4056 + $0x40] sm:$0xf]
    %v4074 = vld [vmem:[%s4056 + $0x44] sm:$0xf]
    %v4075 = vld [vmem:[%s4056 + $0x48] sm:$0xf]
    %v4076 = vld [vmem:[%s4056 + $0x4c] sm:$0xf]
    %v4077 = vld [vmem:[%s4056 + $0x50] sm:$0xf]
    %v4078 = vld [vmem:[%s4056 + $0x54] sm:$0xf]
    %v4079 = vld [vmem:[%s4056 + $0x58] sm:$0xf]
    %v4080 = vld [vmem:[%s4056 + $0x5c] sm:$0xf]
    %v4081 = vld [vmem:[%s4056 + $0x60] sm:$0xf]
    %v4082 = vld [vmem:[%s4056 + $0x64] sm:$0xf]
    %v4083 = vld [vmem:[%s4056 + $0x68] sm:$0xf]
    %v4084 = vld [vmem:[%s4056 + $0x6c] sm:$0xf]
    %v4085 = vld [vmem:[%s4056 + $0x70] sm:$0xf]
    %v4086 = vld [vmem:[%s4056 + $0x74] sm:$0xf]
    %v4087 = vld [vmem:[%s4056 + $0x78] sm:$0xf]
    %v4088 = vld [vmem:[%s4056 + $0x7c] sm:$0xf]
    %v4121 = vunpack.c.l.b16 %v4057
    %v4122 = vunpack.c.l.b16 %v4058
    %v4123 = vunpack.c.l.b16 %v4059
    %v4124 = vunpack.c.l.b16 %v4060
    %v4125 = vunpack.c.l.b16 %v4061
    %v4126 = vunpack.c.l.b16 %v4062
    %v4127 = vunpack.c.l.b16 %v4063
    %v4128 = vunpack.c.l.b16 %v4064
    %v4129 = vunpack.c.l.b16 %v4065
    %v4130 = vunpack.c.l.b16 %v4066
    %v4131 = vunpack.c.l.b16 %v4067
    %v4132 = vunpack.c.l.b16 %v4068
    %v4133 = vunpack.c.l.b16 %v4069
    %v4134 = vunpack.c.l.b16 %v4070
    %v4135 = vunpack.c.l.b16 %v4071
    %v4136 = vunpack.c.l.b16 %v4072
    %v4137 = vunpack.c.l.b16 %v4073
    %v4138 = vunpack.c.l.b16 %v4074
    %v4139 = vunpack.c.l.b16 %v4075
    %v4140 = vunpack.c.l.b16 %v4076
    %v4141 = vunpack.c.l.b16 %v4077
    %v4142 = vunpack.c.l.b16 %v4078
    %v4143 = vunpack.c.l.b16 %v4079
    %v4144 = vunpack.c.l.b16 %v4080
    %v4145 = vunpack.c.l.b16 %v4081
    %v4146 = vunpack.c.l.b16 %v4082
    %v4147 = vunpack.c.l.b16 %v4083
    %v4148 = vunpack.c.l.b16 %v4084
    %v4149 = vunpack.c.l.b16 %v4085
    %v4150 = vunpack.c.l.b16 %v4086
    %v4151 = vunpack.c.l.b16 %v4087
    %v4152 = vunpack.c.l.b16 %v4088
    %v4153 = vpack.c.b16 %v4122, %v4121
    %v4154 = vpack.c.b16 %v4124, %v4123
    %v4155 = vpack.c.b16 %v4126, %v4125
    %v4156 = vpack.c.b16 %v4128, %v4127
    %v4157 = vpack.c.b16 %v4130, %v4129
    %v4158 = vpack.c.b16 %v4132, %v4131
    %v4159 = vpack.c.b16 %v4134, %v4133
    %v4160 = vpack.c.b16 %v4136, %v4135
    %v4161 = vpack.c.b16 %v4138, %v4137
    %v4162 = vpack.c.b16 %v4140, %v4139
    %v4163 = vpack.c.b16 %v4142, %v4141
    %v4164 = vpack.c.b16 %v4144, %v4143
    %v4165 = vpack.c.b16 %v4146, %v4145
    %v4166 = vpack.c.b16 %v4148, %v4147
    %v4167 = vpack.c.b16 %v4150, %v4149
    %v4168 = vpack.c.b16 %v4152, %v4151
    %4185 = vmatpush.bf16.msra.mxu0 %v4160
    %4186 = vmatpush.bf16.msra.mxu0 %v4159
    %4187 = vmatpush.bf16.msra.mxu0 %v4158
    %4188 = vmatpush.bf16.msra.mxu0 %v4157
    %4189 = vmatpush.bf16.msra.mxu0 %v4156
    %4190 = vmatpush.bf16.msra.mxu0 %v4155
    %4191 = vmatpush.bf16.msra.mxu0 %v4154
    %4192 = vmatpush.bf16.msra.mxu0 %v4153
    %4193 = vmatmul.bf16.gmra.mxu0 %v4054
    %v4194 = vpop.f32.mrf.mxu0
    %v4195 = vadd.f32 0.0, %v4194
    %v4196 = vpop.f32.mrf.mxu0
    %4197 = vdwg.mxu0
    %4198 = vmatpush.bf16.msra.mxu0 %v4168
    %4199 = vmatpush.bf16.msra.mxu0 %v4167
    %4200 = vmatpush.bf16.msra.mxu0 %v4166
    %4201 = vmatpush.bf16.msra.mxu0 %v4165
    %4202 = vmatpush.bf16.msra.mxu0 %v4164
    %4203 = vmatpush.bf16.msra.mxu0 %v4163
    %4204 = vmatpush.bf16.msra.mxu0 %v4162
    %4205 = vmatpush.bf16.msra.mxu0 %v4161
    %4206 = vmatmul.bf16.gmra.mxu0 %v4055
    %v4207 = vpop.f32.mrf.mxu0
    %v4208 = vadd.f32 %v4195, %v4207
    %v4209 = vpop.f32.mrf.mxu0
    %4210 = vdwg.mxu0
    %v4211 = vadd.f32 %v4047, %v4208
    %v4212 = vrot.slane %v285, 6
    %v4213 = vrot.slane %v286, 6
    %v4216 = vmul.f32 %v571, %v4212
    %v4217 = vmul.f32 %v611, %v4213
    %v4218 = vpack.c.bf16 %v4216, %v4216
    %v4219 = vpack.c.bf16 %v4217, %v4217
    %s4220 = scalar_lea.vmem %s6, 2816
    %v4221 = vld [vmem:[%s4220] sm:$0xf]
    %v4222 = vld [vmem:[%s4220 + $0x4] sm:$0xf]
    %v4223 = vld [vmem:[%s4220 + $0x8] sm:$0xf]
    %v4224 = vld [vmem:[%s4220 + $0xc] sm:$0xf]
    %v4225 = vld [vmem:[%s4220 + $0x10] sm:$0xf]
    %v4226 = vld [vmem:[%s4220 + $0x14] sm:$0xf]
    %v4227 = vld [vmem:[%s4220 + $0x18] sm:$0xf]
    %v4228 = vld [vmem:[%s4220 + $0x1c] sm:$0xf]
    %v4229 = vld [vmem:[%s4220 + $0x20] sm:$0xf]
    %v4230 = vld [vmem:[%s4220 + $0x24] sm:$0xf]
    %v4231 = vld [vmem:[%s4220 + $0x28] sm:$0xf]
    %v4232 = vld [vmem:[%s4220 + $0x2c] sm:$0xf]
    %v4233 = vld [vmem:[%s4220 + $0x30] sm:$0xf]
    %v4234 = vld [vmem:[%s4220 + $0x34] sm:$0xf]
    %v4235 = vld [vmem:[%s4220 + $0x38] sm:$0xf]
    %v4236 = vld [vmem:[%s4220 + $0x3c] sm:$0xf]
    %v4237 = vld [vmem:[%s4220 + $0x40] sm:$0xf]
    %v4238 = vld [vmem:[%s4220 + $0x44] sm:$0xf]
    %v4239 = vld [vmem:[%s4220 + $0x48] sm:$0xf]
    %v4240 = vld [vmem:[%s4220 + $0x4c] sm:$0xf]
    %v4241 = vld [vmem:[%s4220 + $0x50] sm:$0xf]
    %v4242 = vld [vmem:[%s4220 + $0x54] sm:$0xf]
    %v4243 = vld [vmem:[%s4220 + $0x58] sm:$0xf]
    %v4244 = vld [vmem:[%s4220 + $0x5c] sm:$0xf]
    %v4245 = vld [vmem:[%s4220 + $0x60] sm:$0xf]
    %v4246 = vld [vmem:[%s4220 + $0x64] sm:$0xf]
    %v4247 = vld [vmem:[%s4220 + $0x68] sm:$0xf]
    %v4248 = vld [vmem:[%s4220 + $0x6c] sm:$0xf]
    %v4249 = vld [vmem:[%s4220 + $0x70] sm:$0xf]
    %v4250 = vld [vmem:[%s4220 + $0x74] sm:$0xf]
    %v4251 = vld [vmem:[%s4220 + $0x78] sm:$0xf]
    %v4252 = vld [vmem:[%s4220 + $0x7c] sm:$0xf]
    %v4285 = vunpack.c.l.b16 %v4221
    %v4286 = vunpack.c.l.b16 %v4222
    %v4287 = vunpack.c.l.b16 %v4223
    %v4288 = vunpack.c.l.b16 %v4224
    %v4289 = vunpack.c.l.b16 %v4225
    %v4290 = vunpack.c.l.b16 %v4226
    %v4291 = vunpack.c.l.b16 %v4227
    %v4292 = vunpack.c.l.b16 %v4228
    %v4293 = vunpack.c.l.b16 %v4229
    %v4294 = vunpack.c.l.b16 %v4230
    %v4295 = vunpack.c.l.b16 %v4231
    %v4296 = vunpack.c.l.b16 %v4232
    %v4297 = vunpack.c.l.b16 %v4233
    %v4298 = vunpack.c.l.b16 %v4234
    %v4299 = vunpack.c.l.b16 %v4235
    %v4300 = vunpack.c.l.b16 %v4236
    %v4301 = vunpack.c.l.b16 %v4237
    %v4302 = vunpack.c.l.b16 %v4238
    %v4303 = vunpack.c.l.b16 %v4239
    %v4304 = vunpack.c.l.b16 %v4240
    %v4305 = vunpack.c.l.b16 %v4241
    %v4306 = vunpack.c.l.b16 %v4242
    %v4307 = vunpack.c.l.b16 %v4243
    %v4308 = vunpack.c.l.b16 %v4244
    %v4309 = vunpack.c.l.b16 %v4245
    %v4310 = vunpack.c.l.b16 %v4246
    %v4311 = vunpack.c.l.b16 %v4247
    %v4312 = vunpack.c.l.b16 %v4248
    %v4313 = vunpack.c.l.b16 %v4249
    %v4314 = vunpack.c.l.b16 %v4250
    %v4315 = vunpack.c.l.b16 %v4251
    %v4316 = vunpack.c.l.b16 %v4252
    %v4317 = vpack.c.b16 %v4286, %v4285
    %v4318 = vpack.c.b16 %v4288, %v4287
    %v4319 = vpack.c.b16 %v4290, %v4289
    %v4320 = vpack.c.b16 %v4292, %v4291
    %v4321 = vpack.c.b16 %v4294, %v4293
    %v4322 = vpack.c.b16 %v4296, %v4295
    %v4323 = vpack.c.b16 %v4298, %v4297
    %v4324 = vpack.c.b16 %v4300, %v4299
    %v4325 = vpack.c.b16 %v4302, %v4301
    %v4326 = vpack.c.b16 %v4304, %v4303
    %v4327 = vpack.c.b16 %v4306, %v4305
    %v4328 = vpack.c.b16 %v4308, %v4307
    %v4329 = vpack.c.b16 %v4310, %v4309
    %v4330 = vpack.c.b16 %v4312, %v4311
    %v4331 = vpack.c.b16 %v4314, %v4313
    %v4332 = vpack.c.b16 %v4316, %v4315
    %4349 = vmatpush.bf16.msra.mxu0 %v4324
    %4350 = vmatpush.bf16.msra.mxu0 %v4323
    %4351 = vmatpush.bf16.msra.mxu0 %v4322
    %4352 = vmatpush.bf16.msra.mxu0 %v4321
    %4353 = vmatpush.bf16.msra.mxu0 %v4320
    %4354 = vmatpush.bf16.msra.mxu0 %v4319
    %4355 = vmatpush.bf16.msra.mxu0 %v4318
    %4356 = vmatpush.bf16.msra.mxu0 %v4317
    %4357 = vmatmul.bf16.gmra.mxu0 %v4218
    %v4358 = vpop.f32.mrf.mxu0
    %v4359 = vadd.f32 0.0, %v4358
    %v4360 = vpop.f32.mrf.mxu0
    %4361 = vdwg.mxu0
    %4362 = vmatpush.bf16.msra.mxu0 %v4332
    %4363 = vmatpush.bf16.msra.mxu0 %v4331
    %4364 = vmatpush.bf16.msra.mxu0 %v4330
    %4365 = vmatpush.bf16.msra.mxu0 %v4329
    %4366 = vmatpush.bf16.msra.mxu0 %v4328
    %4367 = vmatpush.bf16.msra.mxu0 %v4327
    %4368 = vmatpush.bf16.msra.mxu0 %v4326
    %4369 = vmatpush.bf16.msra.mxu0 %v4325
    %4370 = vmatmul.bf16.gmra.mxu0 %v4219
    %v4371 = vpop.f32.mrf.mxu0
    %v4372 = vadd.f32 %v4359, %v4371
    %v4373 = vpop.f32.mrf.mxu0
    %4374 = vdwg.mxu0
    %v4375 = vadd.f32 %v4211, %v4372
    %v4376 = vrot.slane %v285, 7
    %v4377 = vrot.slane %v286, 7
    %v4380 = vmul.f32 %v571, %v4376
    %v4381 = vmul.f32 %v611, %v4377
    %v4382 = vpack.c.bf16 %v4380, %v4380
    %v4383 = vpack.c.bf16 %v4381, %v4381
    %s4384 = scalar_lea.vmem %s6, 2944
    %v4385 = vld [vmem:[%s4384] sm:$0xf]
    %v4386 = vld [vmem:[%s4384 + $0x4] sm:$0xf]
    %v4387 = vld [vmem:[%s4384 + $0x8] sm:$0xf]
    %v4388 = vld [vmem:[%s4384 + $0xc] sm:$0xf]
    %v4389 = vld [vmem:[%s4384 + $0x10] sm:$0xf]
    %v4390 = vld [vmem:[%s4384 + $0x14] sm:$0xf]
    %v4391 = vld [vmem:[%s4384 + $0x18] sm:$0xf]
    %v4392 = vld [vmem:[%s4384 + $0x1c] sm:$0xf]
    %v4393 = vld [vmem:[%s4384 + $0x20] sm:$0xf]
    %v4394 = vld [vmem:[%s4384 + $0x24] sm:$0xf]
    %v4395 = vld [vmem:[%s4384 + $0x28] sm:$0xf]
    %v4396 = vld [vmem:[%s4384 + $0x2c] sm:$0xf]
    %v4397 = vld [vmem:[%s4384 + $0x30] sm:$0xf]
    %v4398 = vld [vmem:[%s4384 + $0x34] sm:$0xf]
    %v4399 = vld [vmem:[%s4384 + $0x38] sm:$0xf]
    %v4400 = vld [vmem:[%s4384 + $0x3c] sm:$0xf]
    %v4401 = vld [vmem:[%s4384 + $0x40] sm:$0xf]
    %v4402 = vld [vmem:[%s4384 + $0x44] sm:$0xf]
    %v4403 = vld [vmem:[%s4384 + $0x48] sm:$0xf]
    %v4404 = vld [vmem:[%s4384 + $0x4c] sm:$0xf]
    %v4405 = vld [vmem:[%s4384 + $0x50] sm:$0xf]
    %v4406 = vld [vmem:[%s4384 + $0x54] sm:$0xf]
    %v4407 = vld [vmem:[%s4384 + $0x58] sm:$0xf]
    %v4408 = vld [vmem:[%s4384 + $0x5c] sm:$0xf]
    %v4409 = vld [vmem:[%s4384 + $0x60] sm:$0xf]
    %v4410 = vld [vmem:[%s4384 + $0x64] sm:$0xf]
    %v4411 = vld [vmem:[%s4384 + $0x68] sm:$0xf]
    %v4412 = vld [vmem:[%s4384 + $0x6c] sm:$0xf]
    %v4413 = vld [vmem:[%s4384 + $0x70] sm:$0xf]
    %v4414 = vld [vmem:[%s4384 + $0x74] sm:$0xf]
    %v4415 = vld [vmem:[%s4384 + $0x78] sm:$0xf]
    %v4416 = vld [vmem:[%s4384 + $0x7c] sm:$0xf]
    %v4449 = vunpack.c.l.b16 %v4385
    %v4450 = vunpack.c.l.b16 %v4386
    %v4451 = vunpack.c.l.b16 %v4387
    %v4452 = vunpack.c.l.b16 %v4388
    %v4453 = vunpack.c.l.b16 %v4389
    %v4454 = vunpack.c.l.b16 %v4390
    %v4455 = vunpack.c.l.b16 %v4391
    %v4456 = vunpack.c.l.b16 %v4392
    %v4457 = vunpack.c.l.b16 %v4393
    %v4458 = vunpack.c.l.b16 %v4394
    %v4459 = vunpack.c.l.b16 %v4395
    %v4460 = vunpack.c.l.b16 %v4396
    %v4461 = vunpack.c.l.b16 %v4397
    %v4462 = vunpack.c.l.b16 %v4398
    %v4463 = vunpack.c.l.b16 %v4399
    %v4464 = vunpack.c.l.b16 %v4400
    %v4465 = vunpack.c.l.b16 %v4401
    %v4466 = vunpack.c.l.b16 %v4402
    %v4467 = vunpack.c.l.b16 %v4403
    %v4468 = vunpack.c.l.b16 %v4404
    %v4469 = vunpack.c.l.b16 %v4405
    %v4470 = vunpack.c.l.b16 %v4406
    %v4471 = vunpack.c.l.b16 %v4407
    %v4472 = vunpack.c.l.b16 %v4408
    %v4473 = vunpack.c.l.b16 %v4409
    %v4474 = vunpack.c.l.b16 %v4410
    %v4475 = vunpack.c.l.b16 %v4411
    %v4476 = vunpack.c.l.b16 %v4412
    %v4477 = vunpack.c.l.b16 %v4413
    %v4478 = vunpack.c.l.b16 %v4414
    %v4479 = vunpack.c.l.b16 %v4415
    %v4480 = vunpack.c.l.b16 %v4416
    %v4481 = vpack.c.b16 %v4450, %v4449
    %v4482 = vpack.c.b16 %v4452, %v4451
    %v4483 = vpack.c.b16 %v4454, %v4453
    %v4484 = vpack.c.b16 %v4456, %v4455
    %v4485 = vpack.c.b16 %v4458, %v4457
    %v4486 = vpack.c.b16 %v4460, %v4459
    %v4487 = vpack.c.b16 %v4462, %v4461
    %v4488 = vpack.c.b16 %v4464, %v4463
    %v4489 = vpack.c.b16 %v4466, %v4465
    %v4490 = vpack.c.b16 %v4468, %v4467
    %v4491 = vpack.c.b16 %v4470, %v4469
    %v4492 = vpack.c.b16 %v4472, %v4471
    %v4493 = vpack.c.b16 %v4474, %v4473
    %v4494 = vpack.c.b16 %v4476, %v4475
    %v4495 = vpack.c.b16 %v4478, %v4477
    %v4496 = vpack.c.b16 %v4480, %v4479
    %4513 = vmatpush.bf16.msra.mxu0 %v4488
    %4514 = vmatpush.bf16.msra.mxu0 %v4487
    %4515 = vmatpush.bf16.msra.mxu0 %v4486
    %4516 = vmatpush.bf16.msra.mxu0 %v4485
    %4517 = vmatpush.bf16.msra.mxu0 %v4484
    %4518 = vmatpush.bf16.msra.mxu0 %v4483
    %4519 = vmatpush.bf16.msra.mxu0 %v4482
    %4520 = vmatpush.bf16.msra.mxu0 %v4481
    %4521 = vmatmul.bf16.gmra.mxu0 %v4382
    %v4522 = vpop.f32.mrf.mxu0
    %v4523 = vadd.f32 0.0, %v4522
    %v4524 = vpop.f32.mrf.mxu0
    %4525 = vdwg.mxu0
    %4526 = vmatpush.bf16.msra.mxu0 %v4496
    %4527 = vmatpush.bf16.msra.mxu0 %v4495
    %4528 = vmatpush.bf16.msra.mxu0 %v4494
    %4529 = vmatpush.bf16.msra.mxu0 %v4493
    %4530 = vmatpush.bf16.msra.mxu0 %v4492
    %4531 = vmatpush.bf16.msra.mxu0 %v4491
    %4532 = vmatpush.bf16.msra.mxu0 %v4490
    %4533 = vmatpush.bf16.msra.mxu0 %v4489
    %4534 = vmatmul.bf16.gmra.mxu0 %v4383
    %v4535 = vpop.f32.mrf.mxu0
    %v4536 = vadd.f32 %v4523, %v4535
    %v4537 = vpop.f32.mrf.mxu0
    %4538 = vdwg.mxu0
    %v4539 = vadd.f32 %v4375, %v4536
    %v4540 = vmul.f32 %v571, %v287
    %v4541 = vmul.f32 %v611, %v288
    %v4542 = vpack.c.bf16 %v4540, %v4540
    %v4543 = vpack.c.bf16 %v4541, %v4541
    %s4544 = scalar_lea.vmem %s6, 3072
    %v4545 = vld [vmem:[%s4544] sm:$0xf]
    %v4546 = vld [vmem:[%s4544 + $0x4] sm:$0xf]
    %v4547 = vld [vmem:[%s4544 + $0x8] sm:$0xf]
    %v4548 = vld [vmem:[%s4544 + $0xc] sm:$0xf]
    %v4549 = vld [vmem:[%s4544 + $0x10] sm:$0xf]
    %v4550 = vld [vmem:[%s4544 + $0x14] sm:$0xf]
    %v4551 = vld [vmem:[%s4544 + $0x18] sm:$0xf]
    %v4552 = vld [vmem:[%s4544 + $0x1c] sm:$0xf]
    %v4553 = vld [vmem:[%s4544 + $0x20] sm:$0xf]
    %v4554 = vld [vmem:[%s4544 + $0x24] sm:$0xf]
    %v4555 = vld [vmem:[%s4544 + $0x28] sm:$0xf]
    %v4556 = vld [vmem:[%s4544 + $0x2c] sm:$0xf]
    %v4557 = vld [vmem:[%s4544 + $0x30] sm:$0xf]
    %v4558 = vld [vmem:[%s4544 + $0x34] sm:$0xf]
    %v4559 = vld [vmem:[%s4544 + $0x38] sm:$0xf]
    %v4560 = vld [vmem:[%s4544 + $0x3c] sm:$0xf]
    %v4561 = vld [vmem:[%s4544 + $0x40] sm:$0xf]
    %v4562 = vld [vmem:[%s4544 + $0x44] sm:$0xf]
    %v4563 = vld [vmem:[%s4544 + $0x48] sm:$0xf]
    %v4564 = vld [vmem:[%s4544 + $0x4c] sm:$0xf]
    %v4565 = vld [vmem:[%s4544 + $0x50] sm:$0xf]
    %v4566 = vld [vmem:[%s4544 + $0x54] sm:$0xf]
    %v4567 = vld [vmem:[%s4544 + $0x58] sm:$0xf]
    %v4568 = vld [vmem:[%s4544 + $0x5c] sm:$0xf]
    %v4569 = vld [vmem:[%s4544 + $0x60] sm:$0xf]
    %v4570 = vld [vmem:[%s4544 + $0x64] sm:$0xf]
    %v4571 = vld [vmem:[%s4544 + $0x68] sm:$0xf]
    %v4572 = vld [vmem:[%s4544 + $0x6c] sm:$0xf]
    %v4573 = vld [vmem:[%s4544 + $0x70] sm:$0xf]
    %v4574 = vld [vmem:[%s4544 + $0x74] sm:$0xf]
    %v4575 = vld [vmem:[%s4544 + $0x78] sm:$0xf]
    %v4576 = vld [vmem:[%s4544 + $0x7c] sm:$0xf]
    %v4609 = vunpack.c.l.b16 %v4545
    %v4610 = vunpack.c.l.b16 %v4546
    %v4611 = vunpack.c.l.b16 %v4547
    %v4612 = vunpack.c.l.b16 %v4548
    %v4613 = vunpack.c.l.b16 %v4549
    %v4614 = vunpack.c.l.b16 %v4550
    %v4615 = vunpack.c.l.b16 %v4551
    %v4616 = vunpack.c.l.b16 %v4552
    %v4617 = vunpack.c.l.b16 %v4553
    %v4618 = vunpack.c.l.b16 %v4554
    %v4619 = vunpack.c.l.b16 %v4555
    %v4620 = vunpack.c.l.b16 %v4556
    %v4621 = vunpack.c.l.b16 %v4557
    %v4622 = vunpack.c.l.b16 %v4558
    %v4623 = vunpack.c.l.b16 %v4559
    %v4624 = vunpack.c.l.b16 %v4560
    %v4625 = vunpack.c.l.b16 %v4561
    %v4626 = vunpack.c.l.b16 %v4562
    %v4627 = vunpack.c.l.b16 %v4563
    %v4628 = vunpack.c.l.b16 %v4564
    %v4629 = vunpack.c.l.b16 %v4565
    %v4630 = vunpack.c.l.b16 %v4566
    %v4631 = vunpack.c.l.b16 %v4567
    %v4632 = vunpack.c.l.b16 %v4568
    %v4633 = vunpack.c.l.b16 %v4569
    %v4634 = vunpack.c.l.b16 %v4570
    %v4635 = vunpack.c.l.b16 %v4571
    %v4636 = vunpack.c.l.b16 %v4572
    %v4637 = vunpack.c.l.b16 %v4573
    %v4638 = vunpack.c.l.b16 %v4574
    %v4639 = vunpack.c.l.b16 %v4575
    %v4640 = vunpack.c.l.b16 %v4576
    %v4641 = vpack.c.b16 %v4610, %v4609
    %v4642 = vpack.c.b16 %v4612, %v4611
    %v4643 = vpack.c.b16 %v4614, %v4613
    %v4644 = vpack.c.b16 %v4616, %v4615
    %v4645 = vpack.c.b16 %v4618, %v4617
    %v4646 = vpack.c.b16 %v4620, %v4619
    %v4647 = vpack.c.b16 %v4622, %v4621
    %v4648 = vpack.c.b16 %v4624, %v4623
    %v4649 = vpack.c.b16 %v4626, %v4625
    %v4650 = vpack.c.b16 %v4628, %v4627
    %v4651 = vpack.c.b16 %v4630, %v4629
    %v4652 = vpack.c.b16 %v4632, %v4631
    %v4653 = vpack.c.b16 %v4634, %v4633
    %v4654 = vpack.c.b16 %v4636, %v4635
    %v4655 = vpack.c.b16 %v4638, %v4637
    %v4656 = vpack.c.b16 %v4640, %v4639
    %4673 = vmatpush.bf16.msra.mxu0 %v4648
    %4674 = vmatpush.bf16.msra.mxu0 %v4647
    %4675 = vmatpush.bf16.msra.mxu0 %v4646
    %4676 = vmatpush.bf16.msra.mxu0 %v4645
    %4677 = vmatpush.bf16.msra.mxu0 %v4644
    %4678 = vmatpush.bf16.msra.mxu0 %v4643
    %4679 = vmatpush.bf16.msra.mxu0 %v4642
    %4680 = vmatpush.bf16.msra.mxu0 %v4641
    %4681 = vmatmul.bf16.gmra.mxu0 %v4542
    %v4682 = vpop.f32.mrf.mxu0
    %v4683 = vadd.f32 0.0, %v4682
    %v4684 = vpop.f32.mrf.mxu0
    %4685 = vdwg.mxu0
    %4686 = vmatpush.bf16.msra.mxu0 %v4656
    %4687 = vmatpush.bf16.msra.mxu0 %v4655
    %4688 = vmatpush.bf16.msra.mxu0 %v4654
    %4689 = vmatpush.bf16.msra.mxu0 %v4653
    %4690 = vmatpush.bf16.msra.mxu0 %v4652
    %4691 = vmatpush.bf16.msra.mxu0 %v4651
    %4692 = vmatpush.bf16.msra.mxu0 %v4650
    %4693 = vmatpush.bf16.msra.mxu0 %v4649
    %4694 = vmatmul.bf16.gmra.mxu0 %v4543
    %v4695 = vpop.f32.mrf.mxu0
    %v4696 = vadd.f32 %v4683, %v4695
    %v4697 = vpop.f32.mrf.mxu0
    %4698 = vdwg.mxu0
    %v4699 = vadd.f32 %v4539, %v4696
    %v4702 = vrot.slane %v287, 1
    %v4703 = vrot.slane %v288, 1
    %v4706 = vmul.f32 %v571, %v4702
    %v4707 = vmul.f32 %v611, %v4703
    %v4708 = vpack.c.bf16 %v4706, %v4706
    %v4709 = vpack.c.bf16 %v4707, %v4707
    %s4710 = scalar_lea.vmem %s6, 3200
    %v4711 = vld [vmem:[%s4710] sm:$0xf]
    %v4712 = vld [vmem:[%s4710 + $0x4] sm:$0xf]
    %v4713 = vld [vmem:[%s4710 + $0x8] sm:$0xf]
    %v4714 = vld [vmem:[%s4710 + $0xc] sm:$0xf]
    %v4715 = vld [vmem:[%s4710 + $0x10] sm:$0xf]
    %v4716 = vld [vmem:[%s4710 + $0x14] sm:$0xf]
    %v4717 = vld [vmem:[%s4710 + $0x18] sm:$0xf]
    %v4718 = vld [vmem:[%s4710 + $0x1c] sm:$0xf]
    %v4719 = vld [vmem:[%s4710 + $0x20] sm:$0xf]
    %v4720 = vld [vmem:[%s4710 + $0x24] sm:$0xf]
    %v4721 = vld [vmem:[%s4710 + $0x28] sm:$0xf]
    %v4722 = vld [vmem:[%s4710 + $0x2c] sm:$0xf]
    %v4723 = vld [vmem:[%s4710 + $0x30] sm:$0xf]
    %v4724 = vld [vmem:[%s4710 + $0x34] sm:$0xf]
    %v4725 = vld [vmem:[%s4710 + $0x38] sm:$0xf]
    %v4726 = vld [vmem:[%s4710 + $0x3c] sm:$0xf]
    %v4727 = vld [vmem:[%s4710 + $0x40] sm:$0xf]
    %v4728 = vld [vmem:[%s4710 + $0x44] sm:$0xf]
    %v4729 = vld [vmem:[%s4710 + $0x48] sm:$0xf]
    %v4730 = vld [vmem:[%s4710 + $0x4c] sm:$0xf]
    %v4731 = vld [vmem:[%s4710 + $0x50] sm:$0xf]
    %v4732 = vld [vmem:[%s4710 + $0x54] sm:$0xf]
    %v4733 = vld [vmem:[%s4710 + $0x58] sm:$0xf]
    %v4734 = vld [vmem:[%s4710 + $0x5c] sm:$0xf]
    %v4735 = vld [vmem:[%s4710 + $0x60] sm:$0xf]
    %v4736 = vld [vmem:[%s4710 + $0x64] sm:$0xf]
    %v4737 = vld [vmem:[%s4710 + $0x68] sm:$0xf]
    %v4738 = vld [vmem:[%s4710 + $0x6c] sm:$0xf]
    %v4739 = vld [vmem:[%s4710 + $0x70] sm:$0xf]
    %v4740 = vld [vmem:[%s4710 + $0x74] sm:$0xf]
    %v4741 = vld [vmem:[%s4710 + $0x78] sm:$0xf]
    %v4742 = vld [vmem:[%s4710 + $0x7c] sm:$0xf]
    %v4775 = vunpack.c.l.b16 %v4711
    %v4776 = vunpack.c.l.b16 %v4712
    %v4777 = vunpack.c.l.b16 %v4713
    %v4778 = vunpack.c.l.b16 %v4714
    %v4779 = vunpack.c.l.b16 %v4715
    %v4780 = vunpack.c.l.b16 %v4716
    %v4781 = vunpack.c.l.b16 %v4717
    %v4782 = vunpack.c.l.b16 %v4718
    %v4783 = vunpack.c.l.b16 %v4719
    %v4784 = vunpack.c.l.b16 %v4720
    %v4785 = vunpack.c.l.b16 %v4721
    %v4786 = vunpack.c.l.b16 %v4722
    %v4787 = vunpack.c.l.b16 %v4723
    %v4788 = vunpack.c.l.b16 %v4724
    %v4789 = vunpack.c.l.b16 %v4725
    %v4790 = vunpack.c.l.b16 %v4726
    %v4791 = vunpack.c.l.b16 %v4727
    %v4792 = vunpack.c.l.b16 %v4728
    %v4793 = vunpack.c.l.b16 %v4729
    %v4794 = vunpack.c.l.b16 %v4730
    %v4795 = vunpack.c.l.b16 %v4731
    %v4796 = vunpack.c.l.b16 %v4732
    %v4797 = vunpack.c.l.b16 %v4733
    %v4798 = vunpack.c.l.b16 %v4734
    %v4799 = vunpack.c.l.b16 %v4735
    %v4800 = vunpack.c.l.b16 %v4736
    %v4801 = vunpack.c.l.b16 %v4737
    %v4802 = vunpack.c.l.b16 %v4738
    %v4803 = vunpack.c.l.b16 %v4739
    %v4804 = vunpack.c.l.b16 %v4740
    %v4805 = vunpack.c.l.b16 %v4741
    %v4806 = vunpack.c.l.b16 %v4742
    %v4807 = vpack.c.b16 %v4776, %v4775
    %v4808 = vpack.c.b16 %v4778, %v4777
    %v4809 = vpack.c.b16 %v4780, %v4779
    %v4810 = vpack.c.b16 %v4782, %v4781
    %v4811 = vpack.c.b16 %v4784, %v4783
    %v4812 = vpack.c.b16 %v4786, %v4785
    %v4813 = vpack.c.b16 %v4788, %v4787
    %v4814 = vpack.c.b16 %v4790, %v4789
    %v4815 = vpack.c.b16 %v4792, %v4791
    %v4816 = vpack.c.b16 %v4794, %v4793
    %v4817 = vpack.c.b16 %v4796, %v4795
    %v4818 = vpack.c.b16 %v4798, %v4797
    %v4819 = vpack.c.b16 %v4800, %v4799
    %v4820 = vpack.c.b16 %v4802, %v4801
    %v4821 = vpack.c.b16 %v4804, %v4803
    %v4822 = vpack.c.b16 %v4806, %v4805
    %4839 = vmatpush.bf16.msra.mxu0 %v4814
    %4840 = vmatpush.bf16.msra.mxu0 %v4813
    %4841 = vmatpush.bf16.msra.mxu0 %v4812
    %4842 = vmatpush.bf16.msra.mxu0 %v4811
    %4843 = vmatpush.bf16.msra.mxu0 %v4810
    %4844 = vmatpush.bf16.msra.mxu0 %v4809
    %4845 = vmatpush.bf16.msra.mxu0 %v4808
    %4846 = vmatpush.bf16.msra.mxu0 %v4807
    %4847 = vmatmul.bf16.gmra.mxu0 %v4708
    %v4848 = vpop.f32.mrf.mxu0
    %v4849 = vadd.f32 0.0, %v4848
    %v4850 = vpop.f32.mrf.mxu0
    %4851 = vdwg.mxu0
    %4852 = vmatpush.bf16.msra.mxu0 %v4822
    %4853 = vmatpush.bf16.msra.mxu0 %v4821
    %4854 = vmatpush.bf16.msra.mxu0 %v4820
    %4855 = vmatpush.bf16.msra.mxu0 %v4819
    %4856 = vmatpush.bf16.msra.mxu0 %v4818
    %4857 = vmatpush.bf16.msra.mxu0 %v4817
    %4858 = vmatpush.bf16.msra.mxu0 %v4816
    %4859 = vmatpush.bf16.msra.mxu0 %v4815
    %4860 = vmatmul.bf16.gmra.mxu0 %v4709
    %v4861 = vpop.f32.mrf.mxu0
    %v4862 = vadd.f32 %v4849, %v4861
    %v4863 = vpop.f32.mrf.mxu0
    %4864 = vdwg.mxu0
    %v4865 = vadd.f32 %v4699, %v4862
    %v4866 = vrot.slane %v287, 2
    %v4867 = vrot.slane %v288, 2
    %v4870 = vmul.f32 %v571, %v4866
    %v4871 = vmul.f32 %v611, %v4867
    %v4872 = vpack.c.bf16 %v4870, %v4870
    %v4873 = vpack.c.bf16 %v4871, %v4871
    %s4874 = scalar_lea.vmem %s6, 3328
    %v4875 = vld [vmem:[%s4874] sm:$0xf]
    %v4876 = vld [vmem:[%s4874 + $0x4] sm:$0xf]
    %v4877 = vld [vmem:[%s4874 + $0x8] sm:$0xf]
    %v4878 = vld [vmem:[%s4874 + $0xc] sm:$0xf]
    %v4879 = vld [vmem:[%s4874 + $0x10] sm:$0xf]
    %v4880 = vld [vmem:[%s4874 + $0x14] sm:$0xf]
    %v4881 = vld [vmem:[%s4874 + $0x18] sm:$0xf]
    %v4882 = vld [vmem:[%s4874 + $0x1c] sm:$0xf]
    %v4883 = vld [vmem:[%s4874 + $0x20] sm:$0xf]
    %v4884 = vld [vmem:[%s4874 + $0x24] sm:$0xf]
    %v4885 = vld [vmem:[%s4874 + $0x28] sm:$0xf]
    %v4886 = vld [vmem:[%s4874 + $0x2c] sm:$0xf]
    %v4887 = vld [vmem:[%s4874 + $0x30] sm:$0xf]
    %v4888 = vld [vmem:[%s4874 + $0x34] sm:$0xf]
    %v4889 = vld [vmem:[%s4874 + $0x38] sm:$0xf]
    %v4890 = vld [vmem:[%s4874 + $0x3c] sm:$0xf]
    %v4891 = vld [vmem:[%s4874 + $0x40] sm:$0xf]
    %v4892 = vld [vmem:[%s4874 + $0x44] sm:$0xf]
    %v4893 = vld [vmem:[%s4874 + $0x48] sm:$0xf]
    %v4894 = vld [vmem:[%s4874 + $0x4c] sm:$0xf]
    %v4895 = vld [vmem:[%s4874 + $0x50] sm:$0xf]
    %v4896 = vld [vmem:[%s4874 + $0x54] sm:$0xf]
    %v4897 = vld [vmem:[%s4874 + $0x58] sm:$0xf]
    %v4898 = vld [vmem:[%s4874 + $0x5c] sm:$0xf]
    %v4899 = vld [vmem:[%s4874 + $0x60] sm:$0xf]
    %v4900 = vld [vmem:[%s4874 + $0x64] sm:$0xf]
    %v4901 = vld [vmem:[%s4874 + $0x68] sm:$0xf]
    %v4902 = vld [vmem:[%s4874 + $0x6c] sm:$0xf]
    %v4903 = vld [vmem:[%s4874 + $0x70] sm:$0xf]
    %v4904 = vld [vmem:[%s4874 + $0x74] sm:$0xf]
    %v4905 = vld [vmem:[%s4874 + $0x78] sm:$0xf]
    %v4906 = vld [vmem:[%s4874 + $0x7c] sm:$0xf]
    %v4939 = vunpack.c.l.b16 %v4875
    %v4940 = vunpack.c.l.b16 %v4876
    %v4941 = vunpack.c.l.b16 %v4877
    %v4942 = vunpack.c.l.b16 %v4878
    %v4943 = vunpack.c.l.b16 %v4879
    %v4944 = vunpack.c.l.b16 %v4880
    %v4945 = vunpack.c.l.b16 %v4881
    %v4946 = vunpack.c.l.b16 %v4882
    %v4947 = vunpack.c.l.b16 %v4883
    %v4948 = vunpack.c.l.b16 %v4884
    %v4949 = vunpack.c.l.b16 %v4885
    %v4950 = vunpack.c.l.b16 %v4886
    %v4951 = vunpack.c.l.b16 %v4887
    %v4952 = vunpack.c.l.b16 %v4888
    %v4953 = vunpack.c.l.b16 %v4889
    %v4954 = vunpack.c.l.b16 %v4890
    %v4955 = vunpack.c.l.b16 %v4891
    %v4956 = vunpack.c.l.b16 %v4892
    %v4957 = vunpack.c.l.b16 %v4893
    %v4958 = vunpack.c.l.b16 %v4894
    %v4959 = vunpack.c.l.b16 %v4895
    %v4960 = vunpack.c.l.b16 %v4896
    %v4961 = vunpack.c.l.b16 %v4897
    %v4962 = vunpack.c.l.b16 %v4898
    %v4963 = vunpack.c.l.b16 %v4899
    %v4964 = vunpack.c.l.b16 %v4900
    %v4965 = vunpack.c.l.b16 %v4901
    %v4966 = vunpack.c.l.b16 %v4902
    %v4967 = vunpack.c.l.b16 %v4903
    %v4968 = vunpack.c.l.b16 %v4904
    %v4969 = vunpack.c.l.b16 %v4905
    %v4970 = vunpack.c.l.b16 %v4906
    %v4971 = vpack.c.b16 %v4940, %v4939
    %v4972 = vpack.c.b16 %v4942, %v4941
    %v4973 = vpack.c.b16 %v4944, %v4943
    %v4974 = vpack.c.b16 %v4946, %v4945
    %v4975 = vpack.c.b16 %v4948, %v4947
    %v4976 = vpack.c.b16 %v4950, %v4949
    %v4977 = vpack.c.b16 %v4952, %v4951
    %v4978 = vpack.c.b16 %v4954, %v4953
    %v4979 = vpack.c.b16 %v4956, %v4955
    %v4980 = vpack.c.b16 %v4958, %v4957
    %v4981 = vpack.c.b16 %v4960, %v4959
    %v4982 = vpack.c.b16 %v4962, %v4961
    %v4983 = vpack.c.b16 %v4964, %v4963
    %v4984 = vpack.c.b16 %v4966, %v4965
    %v4985 = vpack.c.b16 %v4968, %v4967
    %v4986 = vpack.c.b16 %v4970, %v4969
    %5003 = vmatpush.bf16.msra.mxu0 %v4978
    %5004 = vmatpush.bf16.msra.mxu0 %v4977
    %5005 = vmatpush.bf16.msra.mxu0 %v4976
    %5006 = vmatpush.bf16.msra.mxu0 %v4975
    %5007 = vmatpush.bf16.msra.mxu0 %v4974
    %5008 = vmatpush.bf16.msra.mxu0 %v4973
    %5009 = vmatpush.bf16.msra.mxu0 %v4972
    %5010 = vmatpush.bf16.msra.mxu0 %v4971
    %5011 = vmatmul.bf16.gmra.mxu0 %v4872
    %v5012 = vpop.f32.mrf.mxu0
    %v5013 = vadd.f32 0.0, %v5012
    %v5014 = vpop.f32.mrf.mxu0
    %5015 = vdwg.mxu0
    %5016 = vmatpush.bf16.msra.mxu0 %v4986
    %5017 = vmatpush.bf16.msra.mxu0 %v4985
    %5018 = vmatpush.bf16.msra.mxu0 %v4984
    %5019 = vmatpush.bf16.msra.mxu0 %v4983
    %5020 = vmatpush.bf16.msra.mxu0 %v4982
    %5021 = vmatpush.bf16.msra.mxu0 %v4981
    %5022 = vmatpush.bf16.msra.mxu0 %v4980
    %5023 = vmatpush.bf16.msra.mxu0 %v4979
    %5024 = vmatmul.bf16.gmra.mxu0 %v4873
    %v5025 = vpop.f32.mrf.mxu0
    %v5026 = vadd.f32 %v5013, %v5025
    %v5027 = vpop.f32.mrf.mxu0
    %5028 = vdwg.mxu0
    %v5029 = vadd.f32 %v4865, %v5026
    %v5030 = vrot.slane %v287, 3
    %v5031 = vrot.slane %v288, 3
    %v5034 = vmul.f32 %v571, %v5030
    %v5035 = vmul.f32 %v611, %v5031
    %v5036 = vpack.c.bf16 %v5034, %v5034
    %v5037 = vpack.c.bf16 %v5035, %v5035
    %s5038 = scalar_lea.vmem %s6, 3456
    %v5039 = vld [vmem:[%s5038] sm:$0xf]
    %v5040 = vld [vmem:[%s5038 + $0x4] sm:$0xf]
    %v5041 = vld [vmem:[%s5038 + $0x8] sm:$0xf]
    %v5042 = vld [vmem:[%s5038 + $0xc] sm:$0xf]
    %v5043 = vld [vmem:[%s5038 + $0x10] sm:$0xf]
    %v5044 = vld [vmem:[%s5038 + $0x14] sm:$0xf]
    %v5045 = vld [vmem:[%s5038 + $0x18] sm:$0xf]
    %v5046 = vld [vmem:[%s5038 + $0x1c] sm:$0xf]
    %v5047 = vld [vmem:[%s5038 + $0x20] sm:$0xf]
    %v5048 = vld [vmem:[%s5038 + $0x24] sm:$0xf]
    %v5049 = vld [vmem:[%s5038 + $0x28] sm:$0xf]
    %v5050 = vld [vmem:[%s5038 + $0x2c] sm:$0xf]
    %v5051 = vld [vmem:[%s5038 + $0x30] sm:$0xf]
    %v5052 = vld [vmem:[%s5038 + $0x34] sm:$0xf]
    %v5053 = vld [vmem:[%s5038 + $0x38] sm:$0xf]
    %v5054 = vld [vmem:[%s5038 + $0x3c] sm:$0xf]
    %v5055 = vld [vmem:[%s5038 + $0x40] sm:$0xf]
    %v5056 = vld [vmem:[%s5038 + $0x44] sm:$0xf]
    %v5057 = vld [vmem:[%s5038 + $0x48] sm:$0xf]
    %v5058 = vld [vmem:[%s5038 + $0x4c] sm:$0xf]
    %v5059 = vld [vmem:[%s5038 + $0x50] sm:$0xf]
    %v5060 = vld [vmem:[%s5038 + $0x54] sm:$0xf]
    %v5061 = vld [vmem:[%s5038 + $0x58] sm:$0xf]
    %v5062 = vld [vmem:[%s5038 + $0x5c] sm:$0xf]
    %v5063 = vld [vmem:[%s5038 + $0x60] sm:$0xf]
    %v5064 = vld [vmem:[%s5038 + $0x64] sm:$0xf]
    %v5065 = vld [vmem:[%s5038 + $0x68] sm:$0xf]
    %v5066 = vld [vmem:[%s5038 + $0x6c] sm:$0xf]
    %v5067 = vld [vmem:[%s5038 + $0x70] sm:$0xf]
    %v5068 = vld [vmem:[%s5038 + $0x74] sm:$0xf]
    %v5069 = vld [vmem:[%s5038 + $0x78] sm:$0xf]
    %v5070 = vld [vmem:[%s5038 + $0x7c] sm:$0xf]
    %v5103 = vunpack.c.l.b16 %v5039
    %v5104 = vunpack.c.l.b16 %v5040
    %v5105 = vunpack.c.l.b16 %v5041
    %v5106 = vunpack.c.l.b16 %v5042
    %v5107 = vunpack.c.l.b16 %v5043
    %v5108 = vunpack.c.l.b16 %v5044
    %v5109 = vunpack.c.l.b16 %v5045
    %v5110 = vunpack.c.l.b16 %v5046
    %v5111 = vunpack.c.l.b16 %v5047
    %v5112 = vunpack.c.l.b16 %v5048
    %v5113 = vunpack.c.l.b16 %v5049
    %v5114 = vunpack.c.l.b16 %v5050
    %v5115 = vunpack.c.l.b16 %v5051
    %v5116 = vunpack.c.l.b16 %v5052
    %v5117 = vunpack.c.l.b16 %v5053
    %v5118 = vunpack.c.l.b16 %v5054
    %v5119 = vunpack.c.l.b16 %v5055
    %v5120 = vunpack.c.l.b16 %v5056
    %v5121 = vunpack.c.l.b16 %v5057
    %v5122 = vunpack.c.l.b16 %v5058
    %v5123 = vunpack.c.l.b16 %v5059
    %v5124 = vunpack.c.l.b16 %v5060
    %v5125 = vunpack.c.l.b16 %v5061
    %v5126 = vunpack.c.l.b16 %v5062
    %v5127 = vunpack.c.l.b16 %v5063
    %v5128 = vunpack.c.l.b16 %v5064
    %v5129 = vunpack.c.l.b16 %v5065
    %v5130 = vunpack.c.l.b16 %v5066
    %v5131 = vunpack.c.l.b16 %v5067
    %v5132 = vunpack.c.l.b16 %v5068
    %v5133 = vunpack.c.l.b16 %v5069
    %v5134 = vunpack.c.l.b16 %v5070
    %v5135 = vpack.c.b16 %v5104, %v5103
    %v5136 = vpack.c.b16 %v5106, %v5105
    %v5137 = vpack.c.b16 %v5108, %v5107
    %v5138 = vpack.c.b16 %v5110, %v5109
    %v5139 = vpack.c.b16 %v5112, %v5111
    %v5140 = vpack.c.b16 %v5114, %v5113
    %v5141 = vpack.c.b16 %v5116, %v5115
    %v5142 = vpack.c.b16 %v5118, %v5117
    %v5143 = vpack.c.b16 %v5120, %v5119
    %v5144 = vpack.c.b16 %v5122, %v5121
    %v5145 = vpack.c.b16 %v5124, %v5123
    %v5146 = vpack.c.b16 %v5126, %v5125
    %v5147 = vpack.c.b16 %v5128, %v5127
    %v5148 = vpack.c.b16 %v5130, %v5129
    %v5149 = vpack.c.b16 %v5132, %v5131
    %v5150 = vpack.c.b16 %v5134, %v5133
    %5167 = vmatpush.bf16.msra.mxu0 %v5142
    %5168 = vmatpush.bf16.msra.mxu0 %v5141
    %5169 = vmatpush.bf16.msra.mxu0 %v5140
    %5170 = vmatpush.bf16.msra.mxu0 %v5139
    %5171 = vmatpush.bf16.msra.mxu0 %v5138
    %5172 = vmatpush.bf16.msra.mxu0 %v5137
    %5173 = vmatpush.bf16.msra.mxu0 %v5136
    %5174 = vmatpush.bf16.msra.mxu0 %v5135
    %5175 = vmatmul.bf16.gmra.mxu0 %v5036
    %v5176 = vpop.f32.mrf.mxu0
    %v5177 = vadd.f32 0.0, %v5176
    %v5178 = vpop.f32.mrf.mxu0
    %5179 = vdwg.mxu0
    %5180 = vmatpush.bf16.msra.mxu0 %v5150
    %5181 = vmatpush.bf16.msra.mxu0 %v5149
    %5182 = vmatpush.bf16.msra.mxu0 %v5148
    %5183 = vmatpush.bf16.msra.mxu0 %v5147
    %5184 = vmatpush.bf16.msra.mxu0 %v5146
    %5185 = vmatpush.bf16.msra.mxu0 %v5145
    %5186 = vmatpush.bf16.msra.mxu0 %v5144
    %5187 = vmatpush.bf16.msra.mxu0 %v5143
    %5188 = vmatmul.bf16.gmra.mxu0 %v5037
    %v5189 = vpop.f32.mrf.mxu0
    %v5190 = vadd.f32 %v5177, %v5189
    %v5191 = vpop.f32.mrf.mxu0
    %5192 = vdwg.mxu0
    %v5193 = vadd.f32 %v5029, %v5190
    %v5194 = vrot.slane %v287, 4
    %v5195 = vrot.slane %v288, 4
    %v5198 = vmul.f32 %v571, %v5194
    %v5199 = vmul.f32 %v611, %v5195
    %v5200 = vpack.c.bf16 %v5198, %v5198
    %v5201 = vpack.c.bf16 %v5199, %v5199
    %s5202 = scalar_lea.vmem %s6, 3584
    %v5203 = vld [vmem:[%s5202] sm:$0xf]
    %v5204 = vld [vmem:[%s5202 + $0x4] sm:$0xf]
    %v5205 = vld [vmem:[%s5202 + $0x8] sm:$0xf]
    %v5206 = vld [vmem:[%s5202 + $0xc] sm:$0xf]
    %v5207 = vld [vmem:[%s5202 + $0x10] sm:$0xf]
    %v5208 = vld [vmem:[%s5202 + $0x14] sm:$0xf]
    %v5209 = vld [vmem:[%s5202 + $0x18] sm:$0xf]
    %v5210 = vld [vmem:[%s5202 + $0x1c] sm:$0xf]
    %v5211 = vld [vmem:[%s5202 + $0x20] sm:$0xf]
    %v5212 = vld [vmem:[%s5202 + $0x24] sm:$0xf]
    %v5213 = vld [vmem:[%s5202 + $0x28] sm:$0xf]
    %v5214 = vld [vmem:[%s5202 + $0x2c] sm:$0xf]
    %v5215 = vld [vmem:[%s5202 + $0x30] sm:$0xf]
    %v5216 = vld [vmem:[%s5202 + $0x34] sm:$0xf]
    %v5217 = vld [vmem:[%s5202 + $0x38] sm:$0xf]
    %v5218 = vld [vmem:[%s5202 + $0x3c] sm:$0xf]
    %v5219 = vld [vmem:[%s5202 + $0x40] sm:$0xf]
    %v5220 = vld [vmem:[%s5202 + $0x44] sm:$0xf]
    %v5221 = vld [vmem:[%s5202 + $0x48] sm:$0xf]
    %v5222 = vld [vmem:[%s5202 + $0x4c] sm:$0xf]
    %v5223 = vld [vmem:[%s5202 + $0x50] sm:$0xf]
    %v5224 = vld [vmem:[%s5202 + $0x54] sm:$0xf]
    %v5225 = vld [vmem:[%s5202 + $0x58] sm:$0xf]
    %v5226 = vld [vmem:[%s5202 + $0x5c] sm:$0xf]
    %v5227 = vld [vmem:[%s5202 + $0x60] sm:$0xf]
    %v5228 = vld [vmem:[%s5202 + $0x64] sm:$0xf]
    %v5229 = vld [vmem:[%s5202 + $0x68] sm:$0xf]
    %v5230 = vld [vmem:[%s5202 + $0x6c] sm:$0xf]
    %v5231 = vld [vmem:[%s5202 + $0x70] sm:$0xf]
    %v5232 = vld [vmem:[%s5202 + $0x74] sm:$0xf]
    %v5233 = vld [vmem:[%s5202 + $0x78] sm:$0xf]
    %v5234 = vld [vmem:[%s5202 + $0x7c] sm:$0xf]
    %v5267 = vunpack.c.l.b16 %v5203
    %v5268 = vunpack.c.l.b16 %v5204
    %v5269 = vunpack.c.l.b16 %v5205
    %v5270 = vunpack.c.l.b16 %v5206
    %v5271 = vunpack.c.l.b16 %v5207
    %v5272 = vunpack.c.l.b16 %v5208
    %v5273 = vunpack.c.l.b16 %v5209
    %v5274 = vunpack.c.l.b16 %v5210
    %v5275 = vunpack.c.l.b16 %v5211
    %v5276 = vunpack.c.l.b16 %v5212
    %v5277 = vunpack.c.l.b16 %v5213
    %v5278 = vunpack.c.l.b16 %v5214
    %v5279 = vunpack.c.l.b16 %v5215
    %v5280 = vunpack.c.l.b16 %v5216
    %v5281 = vunpack.c.l.b16 %v5217
    %v5282 = vunpack.c.l.b16 %v5218
    %v5283 = vunpack.c.l.b16 %v5219
    %v5284 = vunpack.c.l.b16 %v5220
    %v5285 = vunpack.c.l.b16 %v5221
    %v5286 = vunpack.c.l.b16 %v5222
    %v5287 = vunpack.c.l.b16 %v5223
    %v5288 = vunpack.c.l.b16 %v5224
    %v5289 = vunpack.c.l.b16 %v5225
    %v5290 = vunpack.c.l.b16 %v5226
    %v5291 = vunpack.c.l.b16 %v5227
    %v5292 = vunpack.c.l.b16 %v5228
    %v5293 = vunpack.c.l.b16 %v5229
    %v5294 = vunpack.c.l.b16 %v5230
    %v5295 = vunpack.c.l.b16 %v5231
    %v5296 = vunpack.c.l.b16 %v5232
    %v5297 = vunpack.c.l.b16 %v5233
    %v5298 = vunpack.c.l.b16 %v5234
    %v5299 = vpack.c.b16 %v5268, %v5267
    %v5300 = vpack.c.b16 %v5270, %v5269
    %v5301 = vpack.c.b16 %v5272, %v5271
    %v5302 = vpack.c.b16 %v5274, %v5273
    %v5303 = vpack.c.b16 %v5276, %v5275
    %v5304 = vpack.c.b16 %v5278, %v5277
    %v5305 = vpack.c.b16 %v5280, %v5279
    %v5306 = vpack.c.b16 %v5282, %v5281
    %v5307 = vpack.c.b16 %v5284, %v5283
    %v5308 = vpack.c.b16 %v5286, %v5285
    %v5309 = vpack.c.b16 %v5288, %v5287
    %v5310 = vpack.c.b16 %v5290, %v5289
    %v5311 = vpack.c.b16 %v5292, %v5291
    %v5312 = vpack.c.b16 %v5294, %v5293
    %v5313 = vpack.c.b16 %v5296, %v5295
    %v5314 = vpack.c.b16 %v5298, %v5297
    %5331 = vmatpush.bf16.msra.mxu0 %v5306
    %5332 = vmatpush.bf16.msra.mxu0 %v5305
    %5333 = vmatpush.bf16.msra.mxu0 %v5304
    %5334 = vmatpush.bf16.msra.mxu0 %v5303
    %5335 = vmatpush.bf16.msra.mxu0 %v5302
    %5336 = vmatpush.bf16.msra.mxu0 %v5301
    %5337 = vmatpush.bf16.msra.mxu0 %v5300
    %5338 = vmatpush.bf16.msra.mxu0 %v5299
    %5339 = vmatmul.bf16.gmra.mxu0 %v5200
    %v5340 = vpop.f32.mrf.mxu0
    %v5341 = vadd.f32 0.0, %v5340
    %v5342 = vpop.f32.mrf.mxu0
    %5343 = vdwg.mxu0
    %5344 = vmatpush.bf16.msra.mxu0 %v5314
    %5345 = vmatpush.bf16.msra.mxu0 %v5313
    %5346 = vmatpush.bf16.msra.mxu0 %v5312
    %5347 = vmatpush.bf16.msra.mxu0 %v5311
    %5348 = vmatpush.bf16.msra.mxu0 %v5310
    %5349 = vmatpush.bf16.msra.mxu0 %v5309
    %5350 = vmatpush.bf16.msra.mxu0 %v5308
    %5351 = vmatpush.bf16.msra.mxu0 %v5307
    %5352 = vmatmul.bf16.gmra.mxu0 %v5201
    %v5353 = vpop.f32.mrf.mxu0
    %v5354 = vadd.f32 %v5341, %v5353
    %v5355 = vpop.f32.mrf.mxu0
    %5356 = vdwg.mxu0
    %v5357 = vadd.f32 %v5193, %v5354
    %v5358 = vrot.slane %v287, 5
    %v5359 = vrot.slane %v288, 5
    %v5362 = vmul.f32 %v571, %v5358
    %v5363 = vmul.f32 %v611, %v5359
    %v5364 = vpack.c.bf16 %v5362, %v5362
    %v5365 = vpack.c.bf16 %v5363, %v5363
    %s5366 = scalar_lea.vmem %s6, 3712
    %v5367 = vld [vmem:[%s5366] sm:$0xf]
    %v5368 = vld [vmem:[%s5366 + $0x4] sm:$0xf]
    %v5369 = vld [vmem:[%s5366 + $0x8] sm:$0xf]
    %v5370 = vld [vmem:[%s5366 + $0xc] sm:$0xf]
    %v5371 = vld [vmem:[%s5366 + $0x10] sm:$0xf]
    %v5372 = vld [vmem:[%s5366 + $0x14] sm:$0xf]
    %v5373 = vld [vmem:[%s5366 + $0x18] sm:$0xf]
    %v5374 = vld [vmem:[%s5366 + $0x1c] sm:$0xf]
    %v5375 = vld [vmem:[%s5366 + $0x20] sm:$0xf]
    %v5376 = vld [vmem:[%s5366 + $0x24] sm:$0xf]
    %v5377 = vld [vmem:[%s5366 + $0x28] sm:$0xf]
    %v5378 = vld [vmem:[%s5366 + $0x2c] sm:$0xf]
    %v5379 = vld [vmem:[%s5366 + $0x30] sm:$0xf]
    %v5380 = vld [vmem:[%s5366 + $0x34] sm:$0xf]
    %v5381 = vld [vmem:[%s5366 + $0x38] sm:$0xf]
    %v5382 = vld [vmem:[%s5366 + $0x3c] sm:$0xf]
    %v5383 = vld [vmem:[%s5366 + $0x40] sm:$0xf]
    %v5384 = vld [vmem:[%s5366 + $0x44] sm:$0xf]
    %v5385 = vld [vmem:[%s5366 + $0x48] sm:$0xf]
    %v5386 = vld [vmem:[%s5366 + $0x4c] sm:$0xf]
    %v5387 = vld [vmem:[%s5366 + $0x50] sm:$0xf]
    %v5388 = vld [vmem:[%s5366 + $0x54] sm:$0xf]
    %v5389 = vld [vmem:[%s5366 + $0x58] sm:$0xf]
    %v5390 = vld [vmem:[%s5366 + $0x5c] sm:$0xf]
    %v5391 = vld [vmem:[%s5366 + $0x60] sm:$0xf]
    %v5392 = vld [vmem:[%s5366 + $0x64] sm:$0xf]
    %v5393 = vld [vmem:[%s5366 + $0x68] sm:$0xf]
    %v5394 = vld [vmem:[%s5366 + $0x6c] sm:$0xf]
    %v5395 = vld [vmem:[%s5366 + $0x70] sm:$0xf]
    %v5396 = vld [vmem:[%s5366 + $0x74] sm:$0xf]
    %v5397 = vld [vmem:[%s5366 + $0x78] sm:$0xf]
    %v5398 = vld [vmem:[%s5366 + $0x7c] sm:$0xf]
    %v5431 = vunpack.c.l.b16 %v5367
    %v5432 = vunpack.c.l.b16 %v5368
    %v5433 = vunpack.c.l.b16 %v5369
    %v5434 = vunpack.c.l.b16 %v5370
    %v5435 = vunpack.c.l.b16 %v5371
    %v5436 = vunpack.c.l.b16 %v5372
    %v5437 = vunpack.c.l.b16 %v5373
    %v5438 = vunpack.c.l.b16 %v5374
    %v5439 = vunpack.c.l.b16 %v5375
    %v5440 = vunpack.c.l.b16 %v5376
    %v5441 = vunpack.c.l.b16 %v5377
    %v5442 = vunpack.c.l.b16 %v5378
    %v5443 = vunpack.c.l.b16 %v5379
    %v5444 = vunpack.c.l.b16 %v5380
    %v5445 = vunpack.c.l.b16 %v5381
    %v5446 = vunpack.c.l.b16 %v5382
    %v5447 = vunpack.c.l.b16 %v5383
    %v5448 = vunpack.c.l.b16 %v5384
    %v5449 = vunpack.c.l.b16 %v5385
    %v5450 = vunpack.c.l.b16 %v5386
    %v5451 = vunpack.c.l.b16 %v5387
    %v5452 = vunpack.c.l.b16 %v5388
    %v5453 = vunpack.c.l.b16 %v5389
    %v5454 = vunpack.c.l.b16 %v5390
    %v5455 = vunpack.c.l.b16 %v5391
    %v5456 = vunpack.c.l.b16 %v5392
    %v5457 = vunpack.c.l.b16 %v5393
    %v5458 = vunpack.c.l.b16 %v5394
    %v5459 = vunpack.c.l.b16 %v5395
    %v5460 = vunpack.c.l.b16 %v5396
    %v5461 = vunpack.c.l.b16 %v5397
    %v5462 = vunpack.c.l.b16 %v5398
    %v5463 = vpack.c.b16 %v5432, %v5431
    %v5464 = vpack.c.b16 %v5434, %v5433
    %v5465 = vpack.c.b16 %v5436, %v5435
    %v5466 = vpack.c.b16 %v5438, %v5437
    %v5467 = vpack.c.b16 %v5440, %v5439
    %v5468 = vpack.c.b16 %v5442, %v5441
    %v5469 = vpack.c.b16 %v5444, %v5443
    %v5470 = vpack.c.b16 %v5446, %v5445
    %v5471 = vpack.c.b16 %v5448, %v5447
    %v5472 = vpack.c.b16 %v5450, %v5449
    %v5473 = vpack.c.b16 %v5452, %v5451
    %v5474 = vpack.c.b16 %v5454, %v5453
    %v5475 = vpack.c.b16 %v5456, %v5455
    %v5476 = vpack.c.b16 %v5458, %v5457
    %v5477 = vpack.c.b16 %v5460, %v5459
    %v5478 = vpack.c.b16 %v5462, %v5461
    %5495 = vmatpush.bf16.msra.mxu0 %v5470
    %5496 = vmatpush.bf16.msra.mxu0 %v5469
    %5497 = vmatpush.bf16.msra.mxu0 %v5468
    %5498 = vmatpush.bf16.msra.mxu0 %v5467
    %5499 = vmatpush.bf16.msra.mxu0 %v5466
    %5500 = vmatpush.bf16.msra.mxu0 %v5465
    %5501 = vmatpush.bf16.msra.mxu0 %v5464
    %5502 = vmatpush.bf16.msra.mxu0 %v5463
    %5503 = vmatmul.bf16.gmra.mxu0 %v5364
    %v5504 = vpop.f32.mrf.mxu0
    %v5505 = vadd.f32 0.0, %v5504
    %v5506 = vpop.f32.mrf.mxu0
    %5507 = vdwg.mxu0
    %5508 = vmatpush.bf16.msra.mxu0 %v5478
    %5509 = vmatpush.bf16.msra.mxu0 %v5477
    %5510 = vmatpush.bf16.msra.mxu0 %v5476
    %5511 = vmatpush.bf16.msra.mxu0 %v5475
    %5512 = vmatpush.bf16.msra.mxu0 %v5474
    %5513 = vmatpush.bf16.msra.mxu0 %v5473
    %5514 = vmatpush.bf16.msra.mxu0 %v5472
    %5515 = vmatpush.bf16.msra.mxu0 %v5471
    %5516 = vmatmul.bf16.gmra.mxu0 %v5365
    %v5517 = vpop.f32.mrf.mxu0
    %v5518 = vadd.f32 %v5505, %v5517
    %v5519 = vpop.f32.mrf.mxu0
    %5520 = vdwg.mxu0
    %v5521 = vadd.f32 %v5357, %v5518
    %v5522 = vrot.slane %v287, 6
    %v5523 = vrot.slane %v288, 6
    %v5526 = vmul.f32 %v571, %v5522
    %v5527 = vmul.f32 %v611, %v5523
    %v5528 = vpack.c.bf16 %v5526, %v5526
    %v5529 = vpack.c.bf16 %v5527, %v5527
    %s5530 = scalar_lea.vmem %s6, 3840
    %v5531 = vld [vmem:[%s5530] sm:$0xf]
    %v5532 = vld [vmem:[%s5530 + $0x4] sm:$0xf]
    %v5533 = vld [vmem:[%s5530 + $0x8] sm:$0xf]
    %v5534 = vld [vmem:[%s5530 + $0xc] sm:$0xf]
    %v5535 = vld [vmem:[%s5530 + $0x10] sm:$0xf]
    %v5536 = vld [vmem:[%s5530 + $0x14] sm:$0xf]
    %v5537 = vld [vmem:[%s5530 + $0x18] sm:$0xf]
    %v5538 = vld [vmem:[%s5530 + $0x1c] sm:$0xf]
    %v5539 = vld [vmem:[%s5530 + $0x20] sm:$0xf]
    %v5540 = vld [vmem:[%s5530 + $0x24] sm:$0xf]
    %v5541 = vld [vmem:[%s5530 + $0x28] sm:$0xf]
    %v5542 = vld [vmem:[%s5530 + $0x2c] sm:$0xf]
    %v5543 = vld [vmem:[%s5530 + $0x30] sm:$0xf]
    %v5544 = vld [vmem:[%s5530 + $0x34] sm:$0xf]
    %v5545 = vld [vmem:[%s5530 + $0x38] sm:$0xf]
    %v5546 = vld [vmem:[%s5530 + $0x3c] sm:$0xf]
    %v5547 = vld [vmem:[%s5530 + $0x40] sm:$0xf]
    %v5548 = vld [vmem:[%s5530 + $0x44] sm:$0xf]
    %v5549 = vld [vmem:[%s5530 + $0x48] sm:$0xf]
    %v5550 = vld [vmem:[%s5530 + $0x4c] sm:$0xf]
    %v5551 = vld [vmem:[%s5530 + $0x50] sm:$0xf]
    %v5552 = vld [vmem:[%s5530 + $0x54] sm:$0xf]
    %v5553 = vld [vmem:[%s5530 + $0x58] sm:$0xf]
    %v5554 = vld [vmem:[%s5530 + $0x5c] sm:$0xf]
    %v5555 = vld [vmem:[%s5530 + $0x60] sm:$0xf]
    %v5556 = vld [vmem:[%s5530 + $0x64] sm:$0xf]
    %v5557 = vld [vmem:[%s5530 + $0x68] sm:$0xf]
    %v5558 = vld [vmem:[%s5530 + $0x6c] sm:$0xf]
    %v5559 = vld [vmem:[%s5530 + $0x70] sm:$0xf]
    %v5560 = vld [vmem:[%s5530 + $0x74] sm:$0xf]
    %v5561 = vld [vmem:[%s5530 + $0x78] sm:$0xf]
    %v5562 = vld [vmem:[%s5530 + $0x7c] sm:$0xf]
    %v5595 = vunpack.c.l.b16 %v5531
    %v5596 = vunpack.c.l.b16 %v5532
    %v5597 = vunpack.c.l.b16 %v5533
    %v5598 = vunpack.c.l.b16 %v5534
    %v5599 = vunpack.c.l.b16 %v5535
    %v5600 = vunpack.c.l.b16 %v5536
    %v5601 = vunpack.c.l.b16 %v5537
    %v5602 = vunpack.c.l.b16 %v5538
    %v5603 = vunpack.c.l.b16 %v5539
    %v5604 = vunpack.c.l.b16 %v5540
    %v5605 = vunpack.c.l.b16 %v5541
    %v5606 = vunpack.c.l.b16 %v5542
    %v5607 = vunpack.c.l.b16 %v5543
    %v5608 = vunpack.c.l.b16 %v5544
    %v5609 = vunpack.c.l.b16 %v5545
    %v5610 = vunpack.c.l.b16 %v5546
    %v5611 = vunpack.c.l.b16 %v5547
    %v5612 = vunpack.c.l.b16 %v5548
    %v5613 = vunpack.c.l.b16 %v5549
    %v5614 = vunpack.c.l.b16 %v5550
    %v5615 = vunpack.c.l.b16 %v5551
    %v5616 = vunpack.c.l.b16 %v5552
    %v5617 = vunpack.c.l.b16 %v5553
    %v5618 = vunpack.c.l.b16 %v5554
    %v5619 = vunpack.c.l.b16 %v5555
    %v5620 = vunpack.c.l.b16 %v5556
    %v5621 = vunpack.c.l.b16 %v5557
    %v5622 = vunpack.c.l.b16 %v5558
    %v5623 = vunpack.c.l.b16 %v5559
    %v5624 = vunpack.c.l.b16 %v5560
    %v5625 = vunpack.c.l.b16 %v5561
    %v5626 = vunpack.c.l.b16 %v5562
    %v5627 = vpack.c.b16 %v5596, %v5595
    %v5628 = vpack.c.b16 %v5598, %v5597
    %v5629 = vpack.c.b16 %v5600, %v5599
    %v5630 = vpack.c.b16 %v5602, %v5601
    %v5631 = vpack.c.b16 %v5604, %v5603
    %v5632 = vpack.c.b16 %v5606, %v5605
    %v5633 = vpack.c.b16 %v5608, %v5607
    %v5634 = vpack.c.b16 %v5610, %v5609
    %v5635 = vpack.c.b16 %v5612, %v5611
    %v5636 = vpack.c.b16 %v5614, %v5613
    %v5637 = vpack.c.b16 %v5616, %v5615
    %v5638 = vpack.c.b16 %v5618, %v5617
    %v5639 = vpack.c.b16 %v5620, %v5619
    %v5640 = vpack.c.b16 %v5622, %v5621
    %v5641 = vpack.c.b16 %v5624, %v5623
    %v5642 = vpack.c.b16 %v5626, %v5625
    %5659 = vmatpush.bf16.msra.mxu0 %v5634
    %5660 = vmatpush.bf16.msra.mxu0 %v5633
    %5661 = vmatpush.bf16.msra.mxu0 %v5632
    %5662 = vmatpush.bf16.msra.mxu0 %v5631
    %5663 = vmatpush.bf16.msra.mxu0 %v5630
    %5664 = vmatpush.bf16.msra.mxu0 %v5629
    %5665 = vmatpush.bf16.msra.mxu0 %v5628
    %5666 = vmatpush.bf16.msra.mxu0 %v5627
    %5667 = vmatmul.bf16.gmra.mxu0 %v5528
    %v5668 = vpop.f32.mrf.mxu0
    %v5669 = vadd.f32 0.0, %v5668
    %v5670 = vpop.f32.mrf.mxu0
    %5671 = vdwg.mxu0
    %5672 = vmatpush.bf16.msra.mxu0 %v5642
    %5673 = vmatpush.bf16.msra.mxu0 %v5641
    %5674 = vmatpush.bf16.msra.mxu0 %v5640
    %5675 = vmatpush.bf16.msra.mxu0 %v5639
    %5676 = vmatpush.bf16.msra.mxu0 %v5638
    %5677 = vmatpush.bf16.msra.mxu0 %v5637
    %5678 = vmatpush.bf16.msra.mxu0 %v5636
    %5679 = vmatpush.bf16.msra.mxu0 %v5635
    %5680 = vmatmul.bf16.gmra.mxu0 %v5529
    %v5681 = vpop.f32.mrf.mxu0
    %v5682 = vadd.f32 %v5669, %v5681
    %v5683 = vpop.f32.mrf.mxu0
    %5684 = vdwg.mxu0
    %v5685 = vadd.f32 %v5521, %v5682
    %v5686 = vrot.slane %v287, 7
    %v5687 = vrot.slane %v288, 7
    %v5690 = vmul.f32 %v571, %v5686
    %v5691 = vmul.f32 %v611, %v5687
    %v5692 = vpack.c.bf16 %v5690, %v5690
    %v5693 = vpack.c.bf16 %v5691, %v5691
    %s5694 = scalar_lea.vmem %s6, 3968
    %v5695 = vld [vmem:[%s5694] sm:$0xf]
    %v5696 = vld [vmem:[%s5694 + $0x4] sm:$0xf]
    %v5697 = vld [vmem:[%s5694 + $0x8] sm:$0xf]
    %v5698 = vld [vmem:[%s5694 + $0xc] sm:$0xf]
    %v5699 = vld [vmem:[%s5694 + $0x10] sm:$0xf]
    %v5700 = vld [vmem:[%s5694 + $0x14] sm:$0xf]
    %v5701 = vld [vmem:[%s5694 + $0x18] sm:$0xf]
    %v5702 = vld [vmem:[%s5694 + $0x1c] sm:$0xf]
    %v5703 = vld [vmem:[%s5694 + $0x20] sm:$0xf]
    %v5704 = vld [vmem:[%s5694 + $0x24] sm:$0xf]
    %v5705 = vld [vmem:[%s5694 + $0x28] sm:$0xf]
    %v5706 = vld [vmem:[%s5694 + $0x2c] sm:$0xf]
    %v5707 = vld [vmem:[%s5694 + $0x30] sm:$0xf]
    %v5708 = vld [vmem:[%s5694 + $0x34] sm:$0xf]
    %v5709 = vld [vmem:[%s5694 + $0x38] sm:$0xf]
    %v5710 = vld [vmem:[%s5694 + $0x3c] sm:$0xf]
    %v5711 = vld [vmem:[%s5694 + $0x40] sm:$0xf]
    %v5712 = vld [vmem:[%s5694 + $0x44] sm:$0xf]
    %v5713 = vld [vmem:[%s5694 + $0x48] sm:$0xf]
    %v5714 = vld [vmem:[%s5694 + $0x4c] sm:$0xf]
    %v5715 = vld [vmem:[%s5694 + $0x50] sm:$0xf]
    %v5716 = vld [vmem:[%s5694 + $0x54] sm:$0xf]
    %v5717 = vld [vmem:[%s5694 + $0x58] sm:$0xf]
    %v5718 = vld [vmem:[%s5694 + $0x5c] sm:$0xf]
    %v5719 = vld [vmem:[%s5694 + $0x60] sm:$0xf]
    %v5720 = vld [vmem:[%s5694 + $0x64] sm:$0xf]
    %v5721 = vld [vmem:[%s5694 + $0x68] sm:$0xf]
    %v5722 = vld [vmem:[%s5694 + $0x6c] sm:$0xf]
    %v5723 = vld [vmem:[%s5694 + $0x70] sm:$0xf]
    %v5724 = vld [vmem:[%s5694 + $0x74] sm:$0xf]
    %v5725 = vld [vmem:[%s5694 + $0x78] sm:$0xf]
    %v5726 = vld [vmem:[%s5694 + $0x7c] sm:$0xf]
    %v5759 = vunpack.c.l.b16 %v5695
    %v5760 = vunpack.c.l.b16 %v5696
    %v5761 = vunpack.c.l.b16 %v5697
    %v5762 = vunpack.c.l.b16 %v5698
    %v5763 = vunpack.c.l.b16 %v5699
    %v5764 = vunpack.c.l.b16 %v5700
    %v5765 = vunpack.c.l.b16 %v5701
    %v5766 = vunpack.c.l.b16 %v5702
    %v5767 = vunpack.c.l.b16 %v5703
    %v5768 = vunpack.c.l.b16 %v5704
    %v5769 = vunpack.c.l.b16 %v5705
    %v5770 = vunpack.c.l.b16 %v5706
    %v5771 = vunpack.c.l.b16 %v5707
    %v5772 = vunpack.c.l.b16 %v5708
    %v5773 = vunpack.c.l.b16 %v5709
    %v5774 = vunpack.c.l.b16 %v5710
    %v5775 = vunpack.c.l.b16 %v5711
    %v5776 = vunpack.c.l.b16 %v5712
    %v5777 = vunpack.c.l.b16 %v5713
    %v5778 = vunpack.c.l.b16 %v5714
    %v5779 = vunpack.c.l.b16 %v5715
    %v5780 = vunpack.c.l.b16 %v5716
    %v5781 = vunpack.c.l.b16 %v5717
    %v5782 = vunpack.c.l.b16 %v5718
    %v5783 = vunpack.c.l.b16 %v5719
    %v5784 = vunpack.c.l.b16 %v5720
    %v5785 = vunpack.c.l.b16 %v5721
    %v5786 = vunpack.c.l.b16 %v5722
    %v5787 = vunpack.c.l.b16 %v5723
    %v5788 = vunpack.c.l.b16 %v5724
    %v5789 = vunpack.c.l.b16 %v5725
    %v5790 = vunpack.c.l.b16 %v5726
    %v5791 = vpack.c.b16 %v5760, %v5759
    %v5792 = vpack.c.b16 %v5762, %v5761
    %v5793 = vpack.c.b16 %v5764, %v5763
    %v5794 = vpack.c.b16 %v5766, %v5765
    %v5795 = vpack.c.b16 %v5768, %v5767
    %v5796 = vpack.c.b16 %v5770, %v5769
    %v5797 = vpack.c.b16 %v5772, %v5771
    %v5798 = vpack.c.b16 %v5774, %v5773
    %v5799 = vpack.c.b16 %v5776, %v5775
    %v5800 = vpack.c.b16 %v5778, %v5777
    %v5801 = vpack.c.b16 %v5780, %v5779
    %v5802 = vpack.c.b16 %v5782, %v5781
    %v5803 = vpack.c.b16 %v5784, %v5783
    %v5804 = vpack.c.b16 %v5786, %v5785
    %v5805 = vpack.c.b16 %v5788, %v5787
    %v5806 = vpack.c.b16 %v5790, %v5789
    %5823 = vmatpush.bf16.msra.mxu0 %v5798
    %5824 = vmatpush.bf16.msra.mxu0 %v5797
    %5825 = vmatpush.bf16.msra.mxu0 %v5796
    %5826 = vmatpush.bf16.msra.mxu0 %v5795
    %5827 = vmatpush.bf16.msra.mxu0 %v5794
    %5828 = vmatpush.bf16.msra.mxu0 %v5793
    %5829 = vmatpush.bf16.msra.mxu0 %v5792
    %5830 = vmatpush.bf16.msra.mxu0 %v5791
    %5831 = vmatmul.bf16.gmra.mxu0 %v5692
    %v5832 = vpop.f32.mrf.mxu0
    %v5833 = vadd.f32 0.0, %v5832
    %v5834 = vpop.f32.mrf.mxu0
    %5835 = vdwg.mxu0
    %5836 = vmatpush.bf16.msra.mxu0 %v5806
    %5837 = vmatpush.bf16.msra.mxu0 %v5805
    %5838 = vmatpush.bf16.msra.mxu0 %v5804
    %5839 = vmatpush.bf16.msra.mxu0 %v5803
    %5840 = vmatpush.bf16.msra.mxu0 %v5802
    %5841 = vmatpush.bf16.msra.mxu0 %v5801
    %5842 = vmatpush.bf16.msra.mxu0 %v5800
    %5843 = vmatpush.bf16.msra.mxu0 %v5799
    %5844 = vmatmul.bf16.gmra.mxu0 %v5693
    %v5845 = vpop.f32.mrf.mxu0
    %v5846 = vadd.f32 %v5833, %v5845
    %v5847 = vpop.f32.mrf.mxu0
    %5848 = vdwg.mxu0
    %v5849 = vadd.f32 %v5685, %v5846
    %s5850 = scalar_lea.vmem [#allocation2], %s72
    %vm5851 = vcmask 516096
    %5852 = vst.msk [vmem:[%s5850] sm:$0x1] %vm5851, %v5849
  $region74: #{critic_forward.1} parent=0 // loop_footer
    %s76 = sadd.s32 1, %s72
  $region75: #{critic_forward.1} parent=0 // loop_footer_branch
    %71 = sbr.rel target = $region71
  $region76: #{critic_forward.1} parent=0 // loop_exit
    _
  %v5853 = vld [vmem:[%s15] sm:$0x1]
  %v5854 = vld [vmem:[%s15 + $0x1] sm:$0x1]
  %v5855 = vld [vmem:[#allocation2] sm:$0x3]
  %v5856 = vld [vmem:[%s7] sm:$0xff]
  %5859 = vst [vmem:[#allocation1] ss:$9 sm:$0xff] %v5853
  %s5860 = scalar_lea.vmem [#allocation1], 1
  %5861 = vst [vmem:[%s5860] ss:$9 sm:$0xff] %v5854
  %v5862 = vld [vmem:[#allocation1] sm:$0xff]
  %vm5863 = vcmask 64512
  %v5864 = vsel %vm5863, %v5862, 0
  %5866 = vmatpush.msra.mxu0 0.0
  %5867 = vmatpush.msra.mxu0 0.0
  %5868 = vmatpush.msra.mxu0 0.0
  %5869 = vmatpush.msra.mxu0 0.0
  %5870 = vmatpush.msra.mxu0 0.0
  %5871 = vmatpush.msra.mxu0 0.0
  %5872 = vmatpush.msra.mxu0 0.0
  %5873 = vmatpush.msra.mxu0 0.0
  %5874 = vmatpush.msra.mxu0 0.0
  %5875 = vmatpush.msra.mxu0 0.0
  %5876 = vmatpush.msra.mxu0 0.0
  %5877 = vmatpush.msra.mxu0 0.0
  %5878 = vmatpush.msra.mxu0 0.0
  %5879 = vmatpush.msra.mxu0 0.0
  %5880 = vmatpush.msra.mxu0 0.0
  %5881 = vmatpush.msra.mxu0 %v5856
  %5882 = vmatmul.f32.gmra.mxu0 %v5864
  %v5883 = vpop.f32.mrf.mxu0
  %v5884 = vadd.f32 0.0, %v5883
  %5885 = vdwg.mxu0
  %v5886 = vadd.f32 %v5855, %v5884
  %v5887 = vld [vmem:[%s8] sm:$0x1]
  %v5889 = vperm.slane %v5887, 0
  %v5891 = vadd.f32 %v5886, %v5889
  %v5892 = vmax.f32 %v5891, 0.0
  %v5893 = vld [vmem:[%s9] sm:$0xff]
  %v5894 = vld [vmem:[%s9 + $0x8] sm:$0xff]
  %v5895 = vld [vmem:[%s9 + $0x10] sm:$0xff]
  %v5896 = vld [vmem:[%s9 + $0x18] sm:$0xff]
  %v5897 = vld [vmem:[%s9 + $0x20] sm:$0xff]
  %v5898 = vld [vmem:[%s9 + $0x28] sm:$0xff]
  %v5899 = vld [vmem:[%s9 + $0x30] sm:$0xff]
  %v5900 = vld [vmem:[%s9 + $0x38] sm:$0xff]
  %v5901 = vld [vmem:[%s16] sm:$0x1]
  %v5902 = vld [vmem:[%s16 + $0x1] sm:$0x1]
  %v5903 = vld [vmem:[%s10] sm:$0x1]
  %5905 = vset.pattern.permute.xlu0 0
  %5906 = vperm.xlu0 %5905, %v5901
  %v5907 = vpop.permute.xlu0 %5906
  %v5909 = vperm.slane %v5907, 0
  %5911 = vset.pattern.permute.xlu0 0
  %5912 = vperm.xlu0 %5911, %v5902
  %v5913 = vpop.permute.xlu0 %5912
  %v5915 = vperm.slane %v5913, 0
  %v5917 = vperm.slane %v5903, 0
  %v5919 = vrot.slane %v5917, 1
  %v5921 = vmul.f32 %v5909, %v5917
  %v5922 = vmul.f32 %v5915, %v5919
  %5925 = vst [vmem:[#allocation1] ss:$9 sm:$0xff] %v5921
  %s5926 = scalar_lea.vmem [#allocation1], 1
  %5927 = vst [vmem:[%s5926] ss:$9 sm:$0xff] %v5922
  %v5928 = vld [vmem:[#allocation1] sm:$0xff]
  %vm5930 = vcmask 523264
  %v5932 = vsel %vm5930, %v5892, 0
  %5934 = vmatpush.msra.mxu0 0.0
  %5935 = vmatpush.msra.mxu0 0.0
  %5936 = vmatpush.msra.mxu0 0.0
  %5937 = vmatpush.msra.mxu0 0.0
  %5938 = vmatpush.msra.mxu0 0.0
  %5939 = vmatpush.msra.mxu0 0.0
  %5940 = vmatpush.msra.mxu0 0.0
  %5941 = vmatpush.msra.mxu0 0.0
  %5942 = vmatpush.msra.mxu0 %v5900
  %5943 = vmatpush.msra.mxu0 %v5899
  %5944 = vmatpush.msra.mxu0 %v5898
  %5945 = vmatpush.msra.mxu0 %v5897
  %5946 = vmatpush.msra.mxu0 %v5896
  %5947 = vmatpush.msra.mxu0 %v5895
  %5948 = vmatpush.msra.mxu0 %v5894
  %5949 = vmatpush.msra.mxu0 %v5893
  %5950 = vmatmul.f32.gmra.mxu0 %v5932
  %v5951 = vpop.f32.mrf.mxu0
  %v5952 = vadd.f32 %v5928, %v5951
  %5953 = vdwg.mxu0
  %v5954 = vld [vmem:[%s11] sm:$0x1]
  %v5956 = vperm.slane %v5954, 0
  %v5958 = vadd.f32 %v5952, %v5956
  %v5959 = vmax.f32 %v5958, 0.0
  %v5960 = vld [vmem:[%s12] sm:$0xff]
  %v5961 = vld [vmem:[%s12 + $0x8] sm:$0xff]
  %v5962 = vld [vmem:[%s12 + $0x10] sm:$0xff]
  %v5963 = vld [vmem:[%s12 + $0x18] sm:$0xff]
  %v5964 = vld [vmem:[%s12 + $0x20] sm:$0xff]
  %v5965 = vld [vmem:[%s12 + $0x28] sm:$0xff]
  %v5966 = vld [vmem:[%s12 + $0x30] sm:$0xff]
  %v5967 = vld [vmem:[%s12 + $0x38] sm:$0xff]
  %v5968 = vld [vmem:[%s13] sm:$0x1]
  %v5970 = vperm.slane %v5968, 0
  %v5973 = vsel %vm5930, %v5959, 0
  %5975 = vmatpush.msra.mxu0 0.0
  %5976 = vmatpush.msra.mxu0 0.0
  %5977 = vmatpush.msra.mxu0 0.0
  %5978 = vmatpush.msra.mxu0 0.0
  %5979 = vmatpush.msra.mxu0 0.0
  %5980 = vmatpush.msra.mxu0 0.0
  %5981 = vmatpush.msra.mxu0 0.0
  %5982 = vmatpush.msra.mxu0 0.0
  %5983 = vmatpush.msra.mxu0 %v5967
  %5984 = vmatpush.msra.mxu0 %v5966
  %5985 = vmatpush.msra.mxu0 %v5965
  %5986 = vmatpush.msra.mxu0 %v5964
  %5987 = vmatpush.msra.mxu0 %v5963
  %5988 = vmatpush.msra.mxu0 %v5962
  %5989 = vmatpush.msra.mxu0 %v5961
  %5990 = vmatpush.msra.mxu0 %v5960
  %5991 = vmatmul.f32.gmra.mxu0 %v5973
  %v5992 = vpop.f32.mrf.mxu0
  %v5993 = vadd.f32 %v5970, %v5992
  %5994 = vdwg.mxu0
  %v5996 = vrot.slane %v5993, 1
  %vm5998 = vcmask 8192
  %5999 = vst.msk [vmem:[%s17] sm:$0x1] %vm5998, %v5993
  %6000 = vst.msk [vmem:[%s17 + $0x1] sm:$0x1] %vm5998, %v5996
  // Predicated region
  $region77: #{critic_forward.1} parent=0 // pred_check
    _
  $region78: #{critic_forward.1} parent=0 // pred_check_branch
    %6002 = sbr.rel (0) target = $region80
  $region79: #{critic_forward.1} parent=0 // pred_region
    _
  $region80: #{critic_forward.1} parent=0 // pred_fallthru
    _
  // Predicated region
  $region81: #{critic_forward.1} parent=0 // pred_check
    _
  $region82: #{critic_forward.1} parent=0 // pred_check_branch
    %6004 = sbr.rel (0) target = $region84
  $region83: #{critic_forward.1} parent=0 // pred_region
    _
  $region84: #{critic_forward.1} parent=0 // pred_fallthru
    _

</llo_original>
